<compile_context>
chip_gen: v6e
topology: v6e:2x2x1
jax: 0.10.0
libtpu: 0.0.40
codegen_flags: <defaults>
</compile_context>

<pallas_src>
import functools
import math

import jax
import jax.numpy as jnp
from jax import lax
from jax.experimental import pallas as pl
from jax.experimental.pallas import tpu as pltpu


def _largest_divisor(n, candidates, fallback):
    for c in candidates:
        if n % c == 0:
            return c
    return fallback


# ----------------------------------------------------------------------------
# Stage 1: fused row-wise L2 normalize of A and B (1/temp folded into A) -> bf16
# ----------------------------------------------------------------------------
def _normalize_pair_kernel(scale_ref, a_ref, b_ref, oa_ref, ob_ref):
    a = a_ref[...].astype(jnp.float32)
    b = b_ref[...].astype(jnp.float32)
    # F.normalize(x, dim=1): x / max(||x||, 1e-12) == x * rsqrt(max(||x||^2, 1e-24))
    inv_a = lax.rsqrt(jnp.maximum(jnp.sum(a * a, axis=1, keepdims=True), 1e-24))
    inv_b = lax.rsqrt(jnp.maximum(jnp.sum(b * b, axis=1, keepdims=True), 1e-24))
    oa_ref[...] = (a * (inv_a * scale_ref[0])).astype(oa_ref.dtype)   # * 1/temp
    ob_ref[...] = (b * inv_b).astype(ob_ref.dtype)


def _l2_normalize_pair(a, b, inv_temp, *, out_dtype=jnp.bfloat16):
    n, d = a.shape
    # This stage is HBM-bandwidth bound: large row blocks (512-1024) per step.
    tile = _largest_divisor(n, (1024, 512, 256, 128, 64, 32, 16, 8), n)
    return pl.pallas_call(
        _normalize_pair_kernel,
        out_shape=(jax.ShapeDtypeStruct((n, d), out_dtype),
                   jax.ShapeDtypeStruct((n, d), out_dtype)),
        grid_spec=pltpu.PrefetchScalarGridSpec(
            num_scalar_prefetch=0,
            grid=(n // tile,),
            in_specs=[
                pl.BlockSpec(memory_space=pltpu.MemorySpace.SMEM),   # 1/temp (runtime)
                pl.BlockSpec((tile, d), lambda i: (i, 0)),
                pl.BlockSpec((tile, d), lambda i: (i, 0)),
            ],
            out_specs=[pl.BlockSpec((tile, d), lambda i: (i, 0)),
                       pl.BlockSpec((tile, d), lambda i: (i, 0))],
        ),
        compiler_params=pltpu.CompilerParams(dimension_semantics=("parallel",)),
    )(inv_temp, a, b)


# ----------------------------------------------------------------------------
# Stage 2: per-q-tile streaming row-LSE with resident B; column-LSE partials
#          are written once per (q tile, k block) and merged in a JAX epilogue.
# ----------------------------------------------------------------------------
def _contrastive_q_kernel(a_ref, b_ref, row_ref, mcol_ref, lcol_ref, *, tk):
    i = pl.program_id(0)
    tq, _ = a_ref.shape
    nk = b_ref.shape[0] // tk

    a = a_ref[...]                                     # (tq, d) bf16: L2-norm * (1/temp)

    # Diagonal logits for this tile (targets = arange): same row indices of B.
    row0 = pl.multiple_of(i * tq, tq)
    b_diag = b_ref[pl.ds(row0, tq), :]                 # (tq, d) bf16
    diag = jnp.sum(a.astype(jnp.float32) * b_diag.astype(jnp.float32),
                   axis=1, keepdims=True)              # (tq, 1): g[r, r]

    def body(j, carry):
        m_row, l_row = carry
        c0 = pl.multiple_of(j * tk, tk)
        b_blk = b_ref[pl.ds(c0, tk), :]                # (tk, d) — B is VMEM resident
        # a @ b_blk^T without an explicit transpose (contract dim 1 of both).
        s = lax.dot_general(a, b_blk, (((1,), (1,)), ((), ())),
                            preferred_element_type=jnp.float32)       # (tq, tk)
        # Shared per-tile shift -> a single exp per logit.  Safe: per-tile logit
        # spread <= 2/temp (~29 at temp=0.07), far from f32 underflow (~87).
        t_max = jnp.max(s, axis=(0, 1), keepdims=True)                # (1, 1)
        p = jnp.exp(s - t_max)                                        # (tq, tk)

        # Column partial stats: each k block visited exactly once per q tile,
        # so these are plain writes (not hot accumulators) — layout not critical.
        mcol_ref[j] = jnp.broadcast_to(t_max, (1, tk))
        lcol_ref[j] = jnp.sum(p, axis=0, keepdims=True)               # (1, tk)

        # Streaming row-LSE across the k loop.
        row_sum = jnp.sum(p, axis=1, keepdims=True)                   # (tq, 1)
        m_new = jnp.maximum(m_row, t_max)
        l_new = l_row * jnp.exp(m_row - m_new) + row_sum * jnp.exp(t_max - m_new)
        return m_new, l_new

    m0 = jnp.full((tq, 1), -jnp.inf, jnp.float32)
    l0 = jnp.zeros((tq, 1), jnp.float32)
    m_row, l_row = lax.fori_loop(0, nk, body, (m0, l0))

    # Per-row contribution: lse_row - 2 * diag (diag appears once in loss_A and
    # once in loss_B).
    row_ref[...] = m_row + jnp.log(l_row) - 2.0 * diag


def contrastive_loss(embd_a, embd_b, temp=0.07, *, tq=None, tk=None):
    """Symmetric InfoNCE loss; the n x n logits matrix is never materialized."""
    n, d = embd_a.shape
    assert embd_b.shape == (n, d)
    if tk is None:
        tk = _largest_divisor(n, (256, 128, 64, 32, 16, 8), n)   # MXU column width
    if tq is None:
        tq = _largest_divisor(n, (512, 256, 128, 64, 32, 16, 8), n)
    assert n % tq == 0 and n % tk == 0
    nq, nk = n // tq, n // tk

    # Temperature enters at runtime (SMEM scalar) -> no recompile per temp value.
    inv_temp = (1.0 / jnp.asarray(temp, jnp.float32)).reshape(1)
    a_n, b_n = _l2_normalize_pair(embd_a, embd_b, inv_temp)      # bf16; A carries 1/temp

    # Explicit VMEM budget (resident B x2 buffering headroom + A tile double
    # buffer + f32 logits/exp temporaries + stat blocks).  Default tiles keep
    # this tiny; the floor matches the 32 MiB scoped default (v7x-safe).
    need = (2 * n * d * 2 + 2 * tq * d * 2 + 4 * tq * tk * 4
            + 4 * nk * 8 * tk * 4 + 4 * tq * 4 + (4 << 20))
    vmem_limit = int(max(need, 32 * 1024 * 1024))

    kernel = functools.partial(_contrastive_q_kernel, tk=tk)
    row_stats, m_parts, l_parts = pl.pallas_call(
        kernel,
        out_shape=(jax.ShapeDtypeStruct((n, 1), jnp.float32),
                   jax.ShapeDtypeStruct((nq, nk, 1, tk), jnp.float32),
                   jax.ShapeDtypeStruct((nq, nk, 1, tk), jnp.float32)),
        grid_spec=pltpu.PrefetchScalarGridSpec(
            num_scalar_prefetch=0,
            grid=(nq,),
            in_specs=[
                pl.BlockSpec((tq, d), lambda i: (i, 0)),          # A row tile
                pl.BlockSpec((n, d), lambda i: (0, 0)),           # B: whole, resident
            ],
            out_specs=[
                pl.BlockSpec((tq, 1), lambda i: (i, 0)),                  # lse_row - 2*diag
                pl.BlockSpec((None, nk, 1, tk), lambda i: (i, 0, 0, 0)),  # col max partial
                pl.BlockSpec((None, nk, 1, tk), lambda i: (i, 0, 0, 0)),  # col expsum partial
            ],
        ),
        # No cross-step carry -> q axis is "parallel" (megacore split on v7x).
        compiler_params=pltpu.CompilerParams(
            dimension_semantics=("parallel",),
            vmem_limit_bytes=vmem_limit),
    )(a_n, b_n)

    # Tiny epilogue: merge per-q-tile column-LSE partials, reduce to the scalar.
    m_parts = jnp.reshape(m_parts, (nq, n))
    l_parts = jnp.reshape(l_parts, (nq, n))
    m = jnp.max(m_parts, axis=0)                                   # (n,)
    l = jnp.sum(l_parts * jnp.exp(m_parts - m[None, :]), axis=0)   # (n,)
    lse_col = m + jnp.log(l)
    return (jnp.sum(row_stats) + jnp.sum(lse_col)) * (0.5 / n)


# ----------------------------------------------------------------------------
# MultiModalModel fusion head (projections + early fusion + MLP) in one kernel
# ----------------------------------------------------------------------------
def _fusion_head_kernel(vf_ref, au_ref, tx_ref,
                        wv_ref, bv_ref, wa_ref, ba_ref, wt_ref, bt_ref,
                        w1_ref, b1_ref, w2_ref, b2_ref, w3_ref, b3_ref,
                        o_ref):
    f32, bf16 = jnp.float32, jnp.bfloat16
    # mean over the sampled frames (f32), then bf16 operand for the MXU
    vid = jnp.mean(vf_ref[...].astype(f32), axis=1).astype(bf16)          # (tb, Dv)
    v = jnp.dot(vid, wv_ref[...], preferred_element_type=f32) + bv_ref[...]
    a = jnp.dot(au_ref[...].astype(bf16), wa_ref[...],
                preferred_element_type=f32) + ba_ref[...]
    t = jnp.dot(tx_ref[...].astype(bf16), wt_ref[...],
                preferred_element_type=f32) + bt_ref[...]
    agg = v.shape[1]
    v16, a16, t16 = v.astype(bf16), a.astype(bf16), t.astype(bf16)
    # concat([v, a, t]) @ W1 == v @ W1[:agg] + a @ W1[agg:2agg] + t @ W1[2agg:]
    h = (jnp.dot(v16, w1_ref[0:agg, :], preferred_element_type=f32)
         + jnp.dot(a16, w1_ref[agg:2 * agg, :], preferred_element_type=f32)
         + jnp.dot(t16, w1_ref[2 * agg:3 * agg, :], preferred_element_type=f32)
         + b1_ref[...])
    h = jnp.maximum(h, 0.0).astype(bf16)
    h2 = jnp.maximum(jnp.dot(h, w2_ref[...], preferred_element_type=f32)
                     + b2_ref[...], 0.0)
    out = jnp.dot(h2.astype(bf16), w3_ref[...], preferred_element_type=f32) + b3_ref[...]
    o_ref[...] = out.astype(o_ref.dtype)


_HEAD_WEIGHT_NAMES = ("wv", "bv", "wa", "ba", "wt", "bt",
                      "w1", "b1", "w2", "b2", "w3", "b3")


def multimodal_fusion_head(frame_emb, audio_emb, text_emb, params, *, block_b=None):
    """Projections + early fusion + MLP of MultiModalModel.forward, batch-tiled."""
    B, nf, dv = frame_emb.shape
    da = audio_emb.shape[1]
    dt = text_emb.shape[1]
    agg = params["wv"].shape[1]
    if block_b is None:
        block_b = _largest_divisor(B, (256, 128, 64, 32, 16, 8), B)
    assert B % block_b == 0

    def pinned(x):   # weights: constant index_map -> DMA'd once, stay resident
        nd = x.ndim
        return pl.BlockSpec(x.shape, lambda i, _nd=nd: (0,) * _nd)

    weights = [params[k] for k in _HEAD_WEIGHT_NAMES]
    return pl.pallas_call(
        _fusion_head_kernel,
        out_shape=jax.ShapeDtypeStruct((B, agg), jnp.float32),
        grid_spec=pltpu.PrefetchScalarGridSpec(
            num_scalar_prefetch=0,
            grid=(B // block_b,),
            in_specs=[
                pl.BlockSpec((block_b, nf, dv), lambda i: (i, 0, 0)),
                pl.BlockSpec((block_b, da), lambda i: (i, 0)),
                pl.BlockSpec((block_b, dt), lambda i: (i, 0)),
            ] + [pinned(w) for w in weights],
            out_specs=pl.BlockSpec((block_b, agg), lambda i: (i, 0)),
        ),
        compiler_params=pltpu.CompilerParams(dimension_semantics=("parallel",)),
    )(frame_emb, audio_emb, text_emb, *weights)


# ----------------------------------------------------------------------------
# Parameter init (nn.Linear semantics) + kernel-side preparation (bf16, padding)
# ----------------------------------------------------------------------------
def _linear_init(key, fan_in, fan_out):
    k1, k2 = jax.random.split(key)
    bound = 1.0 / math.sqrt(fan_in)
    w = jax.random.uniform(k1, (fan_in, fan_out), jnp.float32, -bound, bound)
    b = jax.random.uniform(k2, (1, fan_out), jnp.float32, -bound, bound)
    return w, b


def init_head_params(key, dv, da, dt, agg):
    """f32, unpadded parameters (PyTorch-equivalent layout) used by the reference."""
    ks = jax.random.split(key, 6)
    wv, bv = _linear_init(ks[0], dv, agg)
    wa, ba = _linear_init(ks[1], da, agg)
    wt, bt = _linear_init(ks[2], dt, agg)
    w1, b1 = _linear_init(ks[3], 3 * agg, 700)
    w2, b2 = _linear_init(ks[4], 700, 500)
    w3, b3 = _linear_init(ks[5], 500, agg)
    return dict(wv=wv, bv=bv, wa=wa, ba=ba, wt=wt, bt=bt,
                w1=w1, b1=b1, w2=w2, b2=b2, w3=w3, b3=b3)


def _round_up(x, m):
    return (x + m - 1) // m * m


def prepare_head_params(params):
    """Kernel-side params: bf16 weights + MLP widths zero-padded 700->768, 500->512.
    Padding is numerically neutral through matmul+ReLU; gives lane-dense stores
    and full-width MXU columns."""
    def pad_to(x, rows, cols):
        out = jnp.zeros((rows, cols), x.dtype)
        return out.at[:x.shape[0], :x.shape[1]].set(x)

    h1 = params["w1"].shape[1]
    h2 = params["w2"].shape[1]
    h1p, h2p = _round_up(h1, 128), _round_up(h2, 128)
    p = dict(params)
    p["w1"] = pad_to(params["w1"], params["w1"].shape[0], h1p)
    p["b1"] = pad_to(params["b1"], 1, h1p)
    p["w2"] = pad_to(params["w2"], h1p, h2p)
    p["b2"] = pad_to(params["b2"], 1, h2p)
    p["w3"] = pad_to(params["w3"], h2p, params["w3"].shape[1])
    for k in ("wv", "wa", "wt", "w1", "w2", "w3"):     # weights bf16, biases stay f32
        p[k] = p[k].astype(jnp.bfloat16)
    return p


# ----------------------------------------------------------------------------
# Pure-JAX references
# ----------------------------------------------------------------------------
def _fusion_head_reference(frame_emb, audio_emb, text_emb, p):
    hi = lax.Precision.HIGHEST
    vid = jnp.mean(frame_emb, axis=1)
    v = jnp.dot(vid, p["wv"], precision=hi) + p["bv"]
    a = jnp.dot(audio_emb, p["wa"], precision=hi) + p["ba"]
    t = jnp.dot(text_emb, p["wt"], precision=hi) + p["bt"]
    fused = jnp.concatenate([v, a, t], axis=1)
    h = jax.nn.relu(jnp.dot(fused, p["w1"], precision=hi) + p["b1"])
    h = jax.nn.relu(jnp.dot(h, p["w2"], precision=hi) + p["b2"])
    return jnp.dot(h, p["w3"], precision=hi) + p["b3"]


def _contrastive_reference(embd_a, embd_b, temp=0.07):
    a = embd_a / jnp.maximum(jnp.linalg.norm(embd_a, axis=1, keepdims=True), 1e-12)
    b = embd_b / jnp.maximum(jnp.linalg.norm(embd_b, axis=1, keepdims=True), 1e-12)
    g = jnp.dot(a, b.T, precision=lax.Precision.HIGHEST) / temp
    n = g.shape[0]
    idx = jnp.arange(n)
    lse_a = jax.nn.logsumexp(g, axis=1)
    lse_b = jax.nn.logsumexp(g, axis=0)
    diag = g[idx, idx]
    return 0.5 * (jnp.mean(lse_a - diag) + jnp.mean(lse_b - diag))


if __name__ == "__main__":
    key = jax.random.PRNGKey(0)
    k_frames, k_audio, k_text, k_params, k_ea, k_eb = jax.random.split(key, 6)

    # ---- MultiModalModel fusion head (forward pass) ----
    B, N_FRAMES = 8, 4
    DV, DA, DT = 512, 768, 768       # ResNet18 / HuBERT-base / ALBERT-base widths
    AGG = 128
    frame_emb = jax.random.normal(k_frames, (B, N_FRAMES, DV), jnp.float32)
    audio_emb = jax.random.normal(k_audio, (B, DA), jnp.float32)
    text_emb = jax.random.normal(k_text, (B, DT), jnp.float32)
    params = init_head_params(k_params, DV, DA, DT, AGG)
    kernel_params = prepare_head_params(params)

    fused = jax.block_until_ready(
        multimodal_fusion_head(frame_emb, audio_emb, text_emb, kernel_params))
    fused_ref = jax.block_until_ready(
        _fusion_head_reference(frame_emb, audio_emb, text_emb, params))
    assert fused.shape == (B, AGG)
    assert bool(jnp.all(jnp.isfinite(fused)))
    head_err = float(jnp.max(jnp.abs(fused - fused_ref)))
    head_scale = float(jnp.max(jnp.abs(fused_ref)))
    assert head_err < 5e-2 * (1.0 + head_scale), f"fusion head mismatch: {head_err}"

    # ---- contrastive (symmetric InfoNCE) training objective ----
    n, d = 512, 128
    embd_a = jax.random.normal(k_ea, (n, d), jnp.float32)
    embd_b = jax.random.normal(k_eb, (n, d), jnp.float32)
    # tq=128 / tk=256 exercises multiple q tiles (column-partial merge) and
    # multiple in-kernel k blocks (streaming row-LSE) at a small size.
    loss = jax.block_until_ready(
        contrastive_loss(embd_a, embd_b, temp=0.07, tq=128, tk=256))
    loss_ref = jax.block_until_ready(_contrastive_reference(embd_a, embd_b, temp=0.07))
    assert bool(jnp.isfinite(loss)), "kernel produced non-finite loss"
    rel = float(jnp.abs(loss - loss_ref)) / (1.0 + float(jnp.abs(loss_ref)))
    assert rel < 2e-2, f"contrastive mismatch: kernel={float(loss)} ref={float(loss_ref)}"

    print("KERNEL_OK")
</pallas_src>

<mosaic_0001>
module attributes {stable_mosaic.version = 11 : i64} {
  func.func @_fusion_head_kernel(%arg0: i32, %arg1: memref<8x4x512xf32, #tpu.memory_space<vmem>>, %arg2: memref<8x768xf32, #tpu.memory_space<vmem>>, %arg3: memref<8x768xf32, #tpu.memory_space<vmem>>, %arg4: memref<512x128xbf16, #tpu.memory_space<vmem>>, %arg5: memref<1x128xf32, #tpu.memory_space<vmem>>, %arg6: memref<768x128xbf16, #tpu.memory_space<vmem>>, %arg7: memref<1x128xf32, #tpu.memory_space<vmem>>, %arg8: memref<768x128xbf16, #tpu.memory_space<vmem>>, %arg9: memref<1x128xf32, #tpu.memory_space<vmem>>, %arg10: memref<384x768xbf16, #tpu.memory_space<vmem>>, %arg11: memref<1x768xf32, #tpu.memory_space<vmem>>, %arg12: memref<768x512xbf16, #tpu.memory_space<vmem>>, %arg13: memref<1x512xf32, #tpu.memory_space<vmem>>, %arg14: memref<512x128xbf16, #tpu.memory_space<vmem>>, %arg15: memref<1x128xf32, #tpu.memory_space<vmem>>, %arg16: memref<8x128xf32, #tpu.memory_space<vmem>>) attributes {dimension_semantics = [#tpu.dimension_semantics<parallel>], iteration_bounds = array<i64: 1>, scalar_prefetch = 0 : i64, scratch_operands = 0 : i64, tpu.core_type = #tpu.core_type<tc>, window_params = [{transform_indices = @transform_0, window_bounds = array<i64: 8, 4, 512>}, {transform_indices = @transform_1, window_bounds = array<i64: 8, 768>}, {transform_indices = @transform_2, window_bounds = array<i64: 8, 768>}, {pipeline_mode = #tpu.pipeline_mode<synchronous>, transform_indices = @transform_3, window_bounds = array<i64: 512, 128>}, {pipeline_mode = #tpu.pipeline_mode<synchronous>, transform_indices = @transform_4, window_bounds = array<i64: 1, 128>}, {pipeline_mode = #tpu.pipeline_mode<synchronous>, transform_indices = @transform_5, window_bounds = array<i64: 768, 128>}, {pipeline_mode = #tpu.pipeline_mode<synchronous>, transform_indices = @transform_6, window_bounds = array<i64: 1, 128>}, {pipeline_mode = #tpu.pipeline_mode<synchronous>, transform_indices = @transform_7, window_bounds = array<i64: 768, 128>}, {pipeline_mode = #tpu.pipeline_mode<synchronous>, transform_indices = @transform_8, window_bounds = array<i64: 1, 128>}, {pipeline_mode = #tpu.pipeline_mode<synchronous>, transform_indices = @transform_9, window_bounds = array<i64: 384, 768>}, {pipeline_mode = #tpu.pipeline_mode<synchronous>, transform_indices = @transform_10, window_bounds = array<i64: 1, 768>}, {pipeline_mode = #tpu.pipeline_mode<synchronous>, transform_indices = @transform_11, window_bounds = array<i64: 768, 512>}, {pipeline_mode = #tpu.pipeline_mode<synchronous>, transform_indices = @transform_12, window_bounds = array<i64: 1, 512>}, {pipeline_mode = #tpu.pipeline_mode<synchronous>, transform_indices = @transform_13, window_bounds = array<i64: 512, 128>}, {pipeline_mode = #tpu.pipeline_mode<synchronous>, transform_indices = @transform_14, window_bounds = array<i64: 1, 128>}, {transform_indices = @transform_15, window_bounds = array<i64: 8, 128>}]} {
    %c0 = arith.constant 0 : index
    %c0_0 = arith.constant 0 : index
    %c0_1 = arith.constant 0 : index
    %0 = vector.load %arg1[%c0, %c0_0, %c0_1] : memref<8x4x512xf32, #tpu.memory_space<vmem>>, vector<8x4x512xf32>
    %cst = arith.constant dense<0.000000e+00> : vector<8x512xf32>
    %1 = vector.multi_reduction <add>, %0, %cst [1] : vector<8x4x512xf32> to vector<8x512xf32>
    %cst_2 = arith.constant 4.000000e+00 : f32
    %2 = vector.broadcast %cst_2 : f32 to vector<8x512xf32>
    %3 = arith.divf %1, %2 : vector<8x512xf32>
    %4 = arith.truncf %3 : vector<8x512xf32> to vector<8x512xbf16>
    %c0_3 = arith.constant 0 : index
    %c0_4 = arith.constant 0 : index
    %5 = vector.load %arg4[%c0_3, %c0_4] : memref<512x128xbf16, #tpu.memory_space<vmem>>, vector<512x128xbf16>
    %cst_5 = arith.constant dense<0.000000e+00> : vector<8x128xf32>
    %6 = tpu.matmul %4, %5, %cst_5 {dimension_numbers = #tpu.dot_dimension_numbers<[1], [0], [0], [1], [0, 0, 1, 1], [], []>} : vector<8x512xbf16>, vector<512x128xbf16>, vector<8x128xf32> -> vector<8x128xf32>
    %c0_6 = arith.constant 0 : index
    %c0_7 = arith.constant 0 : index
    %7 = vector.load %arg5[%c0_6, %c0_7] : memref<1x128xf32, #tpu.memory_space<vmem>>, vector<1x128xf32>
    %8 = vector.broadcast %7 : vector<1x128xf32> to vector<8x128xf32>
    %9 = arith.addf %6, %8 : vector<8x128xf32>
    %c0_8 = arith.constant 0 : index
    %c0_9 = arith.constant 0 : index
    %10 = vector.load %arg2[%c0_8, %c0_9] : memref<8x768xf32, #tpu.memory_space<vmem>>, vector<8x768xf32>
    %11 = arith.truncf %10 : vector<8x768xf32> to vector<8x768xbf16>
    %c0_10 = arith.constant 0 : index
    %c0_11 = arith.constant 0 : index
    %12 = vector.load %arg6[%c0_10, %c0_11] : memref<768x128xbf16, #tpu.memory_space<vmem>>, vector<768x128xbf16>
    %cst_12 = arith.constant dense<0.000000e+00> : vector<8x128xf32>
    %13 = tpu.matmul %11, %12, %cst_12 {dimension_numbers = #tpu.dot_dimension_numbers<[1], [0], [0], [1], [0, 0, 1, 1], [], []>} : vector<8x768xbf16>, vector<768x128xbf16>, vector<8x128xf32> -> vector<8x128xf32>
    %c0_13 = arith.constant 0 : index
    %c0_14 = arith.constant 0 : index
    %14 = vector.load %arg7[%c0_13, %c0_14] : memref<1x128xf32, #tpu.memory_space<vmem>>, vector<1x128xf32>
    %15 = vector.broadcast %14 : vector<1x128xf32> to vector<8x128xf32>
    %16 = arith.addf %13, %15 : vector<8x128xf32>
    %c0_15 = arith.constant 0 : index
    %c0_16 = arith.constant 0 : index
    %17 = vector.load %arg3[%c0_15, %c0_16] : memref<8x768xf32, #tpu.memory_space<vmem>>, vector<8x768xf32>
    %18 = arith.truncf %17 : vector<8x768xf32> to vector<8x768xbf16>
    %c0_17 = arith.constant 0 : index
    %c0_18 = arith.constant 0 : index
    %19 = vector.load %arg8[%c0_17, %c0_18] : memref<768x128xbf16, #tpu.memory_space<vmem>>, vector<768x128xbf16>
    %cst_19 = arith.constant dense<0.000000e+00> : vector<8x128xf32>
    %20 = tpu.matmul %18, %19, %cst_19 {dimension_numbers = #tpu.dot_dimension_numbers<[1], [0], [0], [1], [0, 0, 1, 1], [], []>} : vector<8x768xbf16>, vector<768x128xbf16>, vector<8x128xf32> -> vector<8x128xf32>
    %c0_20 = arith.constant 0 : index
    %c0_21 = arith.constant 0 : index
    %21 = vector.load %arg9[%c0_20, %c0_21] : memref<1x128xf32, #tpu.memory_space<vmem>>, vector<1x128xf32>
    %22 = vector.broadcast %21 : vector<1x128xf32> to vector<8x128xf32>
    %23 = arith.addf %20, %22 : vector<8x128xf32>
    %24 = arith.truncf %9 : vector<8x128xf32> to vector<8x128xbf16>
    %25 = arith.truncf %16 : vector<8x128xf32> to vector<8x128xbf16>
    %26 = arith.truncf %23 : vector<8x128xf32> to vector<8x128xbf16>
    %c0_22 = arith.constant 0 : index
    %c0_23 = arith.constant 0 : index
    %27 = vector.load %arg10[%c0_22, %c0_23] : memref<384x768xbf16, #tpu.memory_space<vmem>>, vector<128x768xbf16>
    %cst_24 = arith.constant dense<0.000000e+00> : vector<8x768xf32>
    %28 = tpu.matmul %24, %27, %cst_24 {dimension_numbers = #tpu.dot_dimension_numbers<[1], [0], [0], [1], [0, 0, 1, 1], [], []>} : vector<8x128xbf16>, vector<128x768xbf16>, vector<8x768xf32> -> vector<8x768xf32>
    %c128 = arith.constant 128 : index
    %c0_25 = arith.constant 0 : index
    %29 = vector.load %arg10[%c128, %c0_25] : memref<384x768xbf16, #tpu.memory_space<vmem>>, vector<128x768xbf16>
    %cst_26 = arith.constant dense<0.000000e+00> : vector<8x768xf32>
    %30 = tpu.matmul %25, %29, %cst_26 {dimension_numbers = #tpu.dot_dimension_numbers<[1], [0], [0], [1], [0, 0, 1, 1], [], []>} : vector<8x128xbf16>, vector<128x768xbf16>, vector<8x768xf32> -> vector<8x768xf32>
    %31 = arith.addf %28, %30 : vector<8x768xf32>
    %c256 = arith.constant 256 : index
    %c0_27 = arith.constant 0 : index
    %32 = vector.load %arg10[%c256, %c0_27] : memref<384x768xbf16, #tpu.memory_space<vmem>>, vector<128x768xbf16>
    %cst_28 = arith.constant dense<0.000000e+00> : vector<8x768xf32>
    %33 = tpu.matmul %26, %32, %cst_28 {dimension_numbers = #tpu.dot_dimension_numbers<[1], [0], [0], [1], [0, 0, 1, 1], [], []>} : vector<8x128xbf16>, vector<128x768xbf16>, vector<8x768xf32> -> vector<8x768xf32>
    %34 = arith.addf %31, %33 : vector<8x768xf32>
    %c0_29 = arith.constant 0 : index
    %c0_30 = arith.constant 0 : index
    %35 = vector.load %arg11[%c0_29, %c0_30] : memref<1x768xf32, #tpu.memory_space<vmem>>, vector<1x768xf32>
    %36 = vector.broadcast %35 : vector<1x768xf32> to vector<8x768xf32>
    %37 = arith.addf %34, %36 : vector<8x768xf32>
    %cst_31 = arith.constant 0.000000e+00 : f32
    %38 = vector.broadcast %cst_31 : f32 to vector<8x768xf32>
    %39 = arith.maximumf %37, %38 : vector<8x768xf32>
    %40 = arith.truncf %39 : vector<8x768xf32> to vector<8x768xbf16>
    %c0_32 = arith.constant 0 : index
    %c0_33 = arith.constant 0 : index
    %41 = vector.load %arg12[%c0_32, %c0_33] : memref<768x512xbf16, #tpu.memory_space<vmem>>, vector<768x512xbf16>
    %cst_34 = arith.constant dense<0.000000e+00> : vector<8x512xf32>
    %42 = tpu.matmul %40, %41, %cst_34 {dimension_numbers = #tpu.dot_dimension_numbers<[1], [0], [0], [1], [0, 0, 1, 1], [], []>} : vector<8x768xbf16>, vector<768x512xbf16>, vector<8x512xf32> -> vector<8x512xf32>
    %c0_35 = arith.constant 0 : index
    %c0_36 = arith.constant 0 : index
    %43 = vector.load %arg13[%c0_35, %c0_36] : memref<1x512xf32, #tpu.memory_space<vmem>>, vector<1x512xf32>
    %44 = vector.broadcast %43 : vector<1x512xf32> to vector<8x512xf32>
    %45 = arith.addf %42, %44 : vector<8x512xf32>
    %cst_37 = arith.constant 0.000000e+00 : f32
    %46 = vector.broadcast %cst_37 : f32 to vector<8x512xf32>
    %47 = arith.maximumf %45, %46 : vector<8x512xf32>
    %48 = arith.truncf %47 : vector<8x512xf32> to vector<8x512xbf16>
    %c0_38 = arith.constant 0 : index
    %c0_39 = arith.constant 0 : index
    %49 = vector.load %arg14[%c0_38, %c0_39] : memref<512x128xbf16, #tpu.memory_space<vmem>>, vector<512x128xbf16>
    %cst_40 = arith.constant dense<0.000000e+00> : vector<8x128xf32>
    %50 = tpu.matmul %48, %49, %cst_40 {dimension_numbers = #tpu.dot_dimension_numbers<[1], [0], [0], [1], [0, 0, 1, 1], [], []>} : vector<8x512xbf16>, vector<512x128xbf16>, vector<8x128xf32> -> vector<8x128xf32>
    %c0_41 = arith.constant 0 : index
    %c0_42 = arith.constant 0 : index
    %51 = vector.load %arg15[%c0_41, %c0_42] : memref<1x128xf32, #tpu.memory_space<vmem>>, vector<1x128xf32>
    %52 = vector.broadcast %51 : vector<1x128xf32> to vector<8x128xf32>
    %53 = arith.addf %50, %52 : vector<8x128xf32>
    %c0_43 = arith.constant 0 : index
    %c0_44 = arith.constant 0 : index
    %54 = vector.load %arg16[%c0_43, %c0_44] : memref<8x128xf32, #tpu.memory_space<vmem>>, vector<8x128xf32>
    tpu.vector_store %arg16[%c0_43, %c0_44], %53 {strides = array<i32>} : memref<8x128xf32, #tpu.memory_space<vmem>>, vector<8x128xf32>,
    return
  }
  func.func @transform_0(%arg0: i32) -> (i32, i32, i32) {
    %c0_i32 = arith.constant 0 : i32
    %c0_i32_0 = arith.constant 0 : i32
    %c0_i32_1 = arith.constant 0 : i32
    return %arg0, %c0_i32, %c0_i32_0 : i32, i32, i32
  }
  func.func @transform_1(%arg0: i32) -> (i32, i32) {
    %c0_i32 = arith.constant 0 : i32
    %c0_i32_0 = arith.constant 0 : i32
    return %arg0, %c0_i32 : i32, i32
  }
  func.func @transform_2(%arg0: i32) -> (i32, i32) {
    %c0_i32 = arith.constant 0 : i32
    %c0_i32_0 = arith.constant 0 : i32
    return %arg0, %c0_i32 : i32, i32
  }
  func.func @transform_3(%arg0: i32) -> (i32, i32) {
    %c0_i32 = arith.constant 0 : i32
    %c0_i32_0 = arith.constant 0 : i32
    %c0_i32_1 = arith.constant 0 : i32
    return %c0_i32, %c0_i32_0 : i32, i32
  }
  func.func @transform_4(%arg0: i32) -> (i32, i32) {
    %c0_i32 = arith.constant 0 : i32
    %c0_i32_0 = arith.constant 0 : i32
    %c0_i32_1 = arith.constant 0 : i32
    return %c0_i32, %c0_i32_0 : i32, i32
  }
  func.func @transform_5(%arg0: i32) -> (i32, i32) {
    %c0_i32 = arith.constant 0 : i32
    %c0_i32_0 = arith.constant 0 : i32
    %c0_i32_1 = arith.constant 0 : i32
    return %c0_i32, %c0_i32_0 : i32, i32
  }
  func.func @transform_6(%arg0: i32) -> (i32, i32) {
    %c0_i32 = arith.constant 0 : i32
    %c0_i32_0 = arith.constant 0 : i32
    %c0_i32_1 = arith.constant 0 : i32
    return %c0_i32, %c0_i32_0 : i32, i32
  }
  func.func @transform_7(%arg0: i32) -> (i32, i32) {
    %c0_i32 = arith.constant 0 : i32
    %c0_i32_0 = arith.constant 0 : i32
    %c0_i32_1 = arith.constant 0 : i32
    return %c0_i32, %c0_i32_0 : i32, i32
  }
  func.func @transform_8(%arg0: i32) -> (i32, i32) {
    %c0_i32 = arith.constant 0 : i32
    %c0_i32_0 = arith.constant 0 : i32
    %c0_i32_1 = arith.constant 0 : i32
    return %c0_i32, %c0_i32_0 : i32, i32
  }
  func.func @transform_9(%arg0: i32) -> (i32, i32) {
    %c0_i32 = arith.constant 0 : i32
    %c0_i32_0 = arith.constant 0 : i32
    %c0_i32_1 = arith.constant 0 : i32
    return %c0_i32, %c0_i32_0 : i32, i32
  }
  func.func @transform_10(%arg0: i32) -> (i32, i32) {
    %c0_i32 = arith.constant 0 : i32
    %c0_i32_0 = arith.constant 0 : i32
    %c0_i32_1 = arith.constant 0 : i32
    return %c0_i32, %c0_i32_0 : i32, i32
  }
  func.func @transform_11(%arg0: i32) -> (i32, i32) {
    %c0_i32 = arith.constant 0 : i32
    %c0_i32_0 = arith.constant 0 : i32
    %c0_i32_1 = arith.constant 0 : i32
    return %c0_i32, %c0_i32_0 : i32, i32
  }
  func.func @transform_12(%arg0: i32) -> (i32, i32) {
    %c0_i32 = arith.constant 0 : i32
    %c0_i32_0 = arith.constant 0 : i32
    %c0_i32_1 = arith.constant 0 : i32
    return %c0_i32, %c0_i32_0 : i32, i32
  }
  func.func @transform_13(%arg0: i32) -> (i32, i32) {
    %c0_i32 = arith.constant 0 : i32
    %c0_i32_0 = arith.constant 0 : i32
    %c0_i32_1 = arith.constant 0 : i32
    return %c0_i32, %c0_i32_0 : i32, i32
  }
  func.func @transform_14(%arg0: i32) -> (i32, i32) {
    %c0_i32 = arith.constant 0 : i32
    %c0_i32_0 = arith.constant 0 : i32
    %c0_i32_1 = arith.constant 0 : i32
    return %c0_i32, %c0_i32_0 : i32, i32
  }
  func.func @transform_15(%arg0: i32) -> (i32, i32) {
    %c0_i32 = arith.constant 0 : i32
    %c0_i32_0 = arith.constant 0 : i32
    return %arg0, %c0_i32 : i32, i32
  }
}

</mosaic_0001>

<llo_original>
// kernel: tpu_custom_call.1
$region0: #{tpu_custom_call.1}
  #allocation0 [shape = 'u32[]', space=smem, size = 0x4, offset = 0x4, fixed_abs, tag = 'smem constant byte address 0x4 - core index']
  #allocation1 [shape = 'u32[144,128]{1,0:T(1,128)}', space=vmem, size = 0x12000, scoped, tag = 'internal scratch']
  %s0 = inlined_call_operand.hbm [shape: f32[8,4,512], index: 0, kind: input, shape index: {}]
  %s1 = inlined_call_operand.hbm [shape: f32[8,768], index: 1, kind: input, shape index: {}]
  %s2 = inlined_call_operand.hbm [shape: f32[8,768], index: 2, kind: input, shape index: {}]
  %s3 = inlined_call_operand.hbm [shape: bf16[512,128], index: 3, kind: input, shape index: {}]
  %s4 = inlined_call_operand.vmem [shape: f32[1,128], index: 4, kind: input, shape index: {}]
  %s5 = inlined_call_operand.hbm [shape: bf16[768,128], index: 5, kind: input, shape index: {}]
  %s6 = inlined_call_operand.vmem [shape: f32[1,128], index: 6, kind: input, shape index: {}]
  %s7 = inlined_call_operand.hbm [shape: bf16[768,128], index: 7, kind: input, shape index: {}]
  %s8 = inlined_call_operand.vmem [shape: f32[1,128], index: 8, kind: input, shape index: {}]
  %s9 = inlined_call_operand.hbm [shape: bf16[384,768], index: 9, kind: input, shape index: {}]
  %s10 = inlined_call_operand.vmem [shape: f32[1,768], index: 10, kind: input, shape index: {}]
  %s11 = inlined_call_operand.hbm [shape: bf16[768,512], index: 11, kind: input, shape index: {}]
  %s12 = inlined_call_operand.vmem [shape: f32[1,512], index: 12, kind: input, shape index: {}]
  %s13 = inlined_call_operand.hbm [shape: bf16[512,128], index: 13, kind: input, shape index: {}]
  %s14 = inlined_call_operand.vmem [shape: f32[1,128], index: 14, kind: input, shape index: {}]
  %s15 = inlined_call_operand.hbm [shape: f32[8,128], index: 15, kind: output, shape index: {}]
  %s16 = sld [smem:[#allocation0]]
  $region106: #{tpu_custom_call.1} parent=0
    _
  %s18 = ssub.s32 1, %s16
  %s19 = scalar_select 0, %s18, %s16
  $region1: #{tpu_custom_call.1} parent=0
    #allocation2 [shape = 'u8[65536]{0}', space=vmem, size = 0x10000, scoped, tag = 'input window, operand 0, single buffered']
    #allocation3 [shape = 's32[1]{0}', space=sflag, size = 0x4, scoped, tag = 'scoped memory for tpu_custom_call.1']
    #allocation4 [shape = 's32[1]{0}', space=sflag, size = 0x4, scoped, tag = 'scoped memory for tpu_custom_call.1']
    #allocation5 [shape = 'u8[24576]{0}', space=vmem, size = 0x6000, scoped, tag = 'input window, operand 1, single buffered']
    #allocation6 [shape = 's32[1]{0}', space=sflag, size = 0x4, scoped, tag = 'scoped memory for tpu_custom_call.1']
    #allocation7 [shape = 'u8[24576]{0}', space=vmem, size = 0x6000, scoped, tag = 'input window, operand 2, single buffered']
    #allocation8 [shape = 'u8[131072]{0}', space=vmem, size = 0x20000, scoped, tag = 'input window, operand 3, single buffered']
    #allocation9 [shape = 's32[1]{0}', space=sflag, size = 0x4, scoped, tag = 'scoped memory for tpu_custom_call.1']
    #allocation10 [shape = 'u8[196608]{0}', space=vmem, size = 0x30000, scoped, tag = 'input window, operand 5, single buffered']
    #allocation11 [shape = 'u8[196608]{0}', space=vmem, size = 0x30000, scoped, tag = 'input window, operand 7, single buffered']
    #allocation12 [shape = 's32[1]{0}', space=sflag, size = 0x4, scoped, tag = 'scoped memory for tpu_custom_call.1']
    #allocation13 [shape = 'u8[589824]{0}', space=vmem, size = 0x90000, scoped, tag = 'input window, operand 9, single buffered']
    #allocation14 [shape = 'u8[786432]{0}', space=vmem, size = 0xc0000, scoped, tag = 'input window, operand 11, single buffered']
    #allocation15 [shape = 's32[1]{0}', space=sflag, size = 0x4, scoped, tag = 'scoped memory for tpu_custom_call.1']
    #allocation16 [shape = 'u8[131072]{0}', space=vmem, size = 0x20000, scoped, tag = 'input window, operand 13, single buffered']
    #allocation17 [shape = 'u8[4096]{0}', space=vmem, size = 0x1000, scoped, tag = 'output window, operand 0, single buffered']
    %20 = vsyncpa [#allocation3], 0
    %21 = vsyncpa [#allocation6], 0
    %22 = vsyncpa [#allocation9], 0
    %23 = vsyncpa [#allocation12], 0
    %24 = vsyncpa [#allocation15], 0
    %25 = vsyncpa [#allocation4], 0
    // Predicated region
    $region2: #{tpu_custom_call.1} parent=1 // pred_check
      _
    $region3: #{tpu_custom_call.1} parent=1 // pred_check_branch
      %27 = sbr.rel (0) target = $region5
    $region4: #{tpu_custom_call.1} parent=1 // pred_region
      %s29 = ssub.s32 2048, 2048
      %30 = vsyncadd [#allocation3], %s29
      %s31 = sshll.u32 [#allocation2], 4
      %s32 = int_to_ptr.vmem [resolvable:$true] %s31
      %37 = dma.hbm_to_vmem [thread:$0]  %s0, 2048, %s32, [#allocation3], 256, 256, 16
    $region5: #{tpu_custom_call.1} parent=1 // pred_fallthru
      _
    // Predicated region
    $region6: #{tpu_custom_call.1} parent=1 // pred_check
      _
    $region7: #{tpu_custom_call.1} parent=1 // pred_check_branch
      %39 = sbr.rel (0) target = $region9
    $region8: #{tpu_custom_call.1} parent=1 // pred_region
      %s41 = ssub.s32 768, 768
      %42 = vsyncadd [#allocation6], %s41
      %s44 = sshll.u32 [#allocation5], 4
      %s45 = int_to_ptr.vmem [resolvable:$true] %s44
      %47 = dma.hbm_to_vmem [thread:$0]  %s1, 768, %s45, [#allocation6]
    $region9: #{tpu_custom_call.1} parent=1 // pred_fallthru
      _
    // Predicated region
    $region10: #{tpu_custom_call.1} parent=1 // pred_check
      _
    $region11: #{tpu_custom_call.1} parent=1 // pred_check_branch
      %49 = sbr.rel (0) target = $region13
    $region12: #{tpu_custom_call.1} parent=1 // pred_region
      %s51 = ssub.s32 768, 768
      %52 = vsyncadd [#allocation6], %s51
      %s54 = sshll.u32 [#allocation7], 4
      %s55 = int_to_ptr.vmem [resolvable:$true] %s54
      %57 = dma.hbm_to_vmem [thread:$0]  %s2, 768, %s55, [#allocation6]
    $region13: #{tpu_custom_call.1} parent=1 // pred_fallthru
      _
    // Predicated region
    $region14: #{tpu_custom_call.1} parent=1 // pred_check
      _
    $region15: #{tpu_custom_call.1} parent=1 // pred_check_branch
      %59 = sbr.rel (0) target = $region17
    $region16: #{tpu_custom_call.1} parent=1 // pred_region
      %s61 = ssub.s32 4096, 4096
      %62 = vsyncadd [#allocation9], %s61
      %s63 = sshll.u32 [#allocation8], 4
      %s64 = int_to_ptr.vmem [resolvable:$true] %s63
      %69 = dma.hbm_to_vmem [thread:$0]  %s3, 4096, %s64, [#allocation9], 64, 64, 4
    $region17: #{tpu_custom_call.1} parent=1 // pred_fallthru
      _
    // Predicated region
    $region18: #{tpu_custom_call.1} parent=1 // pred_check
      _
    $region19: #{tpu_custom_call.1} parent=1 // pred_check_branch
      %71 = sbr.rel (0) target = $region21
    $region20: #{tpu_custom_call.1} parent=1 // pred_region
      _
    $region21: #{tpu_custom_call.1} parent=1 // pred_fallthru
      _
    // Predicated region
    $region22: #{tpu_custom_call.1} parent=1 // pred_check
      _
    $region23: #{tpu_custom_call.1} parent=1 // pred_check_branch
      %73 = sbr.rel (0) target = $region25
    $region24: #{tpu_custom_call.1} parent=1 // pred_region
      %s75 = ssub.s32 6144, 6144
      %76 = vsyncadd [#allocation9], %s75
      %s77 = sshll.u32 [#allocation10], 4
      %s78 = int_to_ptr.vmem [resolvable:$true] %s77
      %83 = dma.hbm_to_vmem [thread:$0]  %s5, 6144, %s78, [#allocation9], 64, 64, 4
    $region25: #{tpu_custom_call.1} parent=1 // pred_fallthru
      _
    // Predicated region
    $region26: #{tpu_custom_call.1} parent=1 // pred_check
      _
    $region27: #{tpu_custom_call.1} parent=1 // pred_check_branch
      %85 = sbr.rel (0) target = $region29
    $region28: #{tpu_custom_call.1} parent=1 // pred_region
      _
    $region29: #{tpu_custom_call.1} parent=1 // pred_fallthru
      _
    // Predicated region
    $region30: #{tpu_custom_call.1} parent=1 // pred_check
      _
    $region31: #{tpu_custom_call.1} parent=1 // pred_check_branch
      %87 = sbr.rel (0) target = $region33
    $region32: #{tpu_custom_call.1} parent=1 // pred_region
      %s89 = ssub.s32 6144, 6144
      %90 = vsyncadd [#allocation12], %s89
      %s91 = sshll.u32 [#allocation11], 4
      %s92 = int_to_ptr.vmem [resolvable:$true] %s91
      %97 = dma.hbm_to_vmem [thread:$0]  %s7, 6144, %s92, [#allocation12], 64, 64, 4
    $region33: #{tpu_custom_call.1} parent=1 // pred_fallthru
      _
    // Predicated region
    $region34: #{tpu_custom_call.1} parent=1 // pred_check
      _
    $region35: #{tpu_custom_call.1} parent=1 // pred_check_branch
      %99 = sbr.rel (0) target = $region37
    $region36: #{tpu_custom_call.1} parent=1 // pred_region
      _
    $region37: #{tpu_custom_call.1} parent=1 // pred_fallthru
      _
    // Predicated region
    $region38: #{tpu_custom_call.1} parent=1 // pred_check
      _
    $region39: #{tpu_custom_call.1} parent=1 // pred_check_branch
      %101 = sbr.rel (0) target = $region41
    $region40: #{tpu_custom_call.1} parent=1 // pred_region
      %s103 = ssub.s32 18432, 18432
      %104 = vsyncadd [#allocation12], %s103
      %s105 = sshll.u32 [#allocation13], 4
      %s106 = int_to_ptr.vmem [resolvable:$true] %s105
      %111 = dma.hbm_to_vmem [thread:$0]  %s9, 18432, %s106, [#allocation12], 384, 384, 24
    $region41: #{tpu_custom_call.1} parent=1 // pred_fallthru
      _
    // Predicated region
    $region42: #{tpu_custom_call.1} parent=1 // pred_check
      _
    $region43: #{tpu_custom_call.1} parent=1 // pred_check_branch
      %113 = sbr.rel (0) target = $region45
    $region44: #{tpu_custom_call.1} parent=1 // pred_region
      _
    $region45: #{tpu_custom_call.1} parent=1 // pred_fallthru
      _
    // Predicated region
    $region46: #{tpu_custom_call.1} parent=1 // pred_check
      _
    $region47: #{tpu_custom_call.1} parent=1 // pred_check_branch
      %115 = sbr.rel (0) target = $region49
    $region48: #{tpu_custom_call.1} parent=1 // pred_region
      %s117 = ssub.s32 24576, 24576
      %118 = vsyncadd [#allocation15], %s117
      %s119 = sshll.u32 [#allocation14], 4
      %s120 = int_to_ptr.vmem [resolvable:$true] %s119
      %125 = dma.hbm_to_vmem [thread:$0]  %s11, 24576, %s120, [#allocation15], 256, 256, 16
    $region49: #{tpu_custom_call.1} parent=1 // pred_fallthru
      _
    // Predicated region
    $region50: #{tpu_custom_call.1} parent=1 // pred_check
      _
    $region51: #{tpu_custom_call.1} parent=1 // pred_check_branch
      %127 = sbr.rel (0) target = $region53
    $region52: #{tpu_custom_call.1} parent=1 // pred_region
      _
    $region53: #{tpu_custom_call.1} parent=1 // pred_fallthru
      _
    // Predicated region
    $region54: #{tpu_custom_call.1} parent=1 // pred_check
      _
    $region55: #{tpu_custom_call.1} parent=1 // pred_check_branch
      %129 = sbr.rel (0) target = $region57
    $region56: #{tpu_custom_call.1} parent=1 // pred_region
      %s131 = ssub.s32 4096, 4096
      %132 = vsyncadd [#allocation15], %s131
      %s133 = sshll.u32 [#allocation16], 4
      %s134 = int_to_ptr.vmem [resolvable:$true] %s133
      %139 = dma.hbm_to_vmem [thread:$0]  %s13, 4096, %s134, [#allocation15], 64, 64, 4
    $region57: #{tpu_custom_call.1} parent=1 // pred_fallthru
      _
    // Predicated region
    $region58: #{tpu_custom_call.1} parent=1 // pred_check
      _
    $region59: #{tpu_custom_call.1} parent=1 // pred_check_branch
      %141 = sbr.rel (0) target = $region61
    $region60: #{tpu_custom_call.1} parent=1 // pred_region
      _
    $region61: #{tpu_custom_call.1} parent=1 // pred_fallthru
      _
    // Predicated region
    $region62: #{tpu_custom_call.1} parent=1 // pred_check
      _
    $region63: #{tpu_custom_call.1} parent=1 // pred_check_branch
      %143 = sbr.rel (0) target = $region65
    $region64: #{tpu_custom_call.1} parent=1 // pred_region
      %144 = dma.done [#allocation3], 2048
    $region65: #{tpu_custom_call.1} parent=1 // pred_fallthru
      _
    // Predicated region
    $region66: #{tpu_custom_call.1} parent=1 // pred_check
      _
    $region67: #{tpu_custom_call.1} parent=1 // pred_check_branch
      %146 = sbr.rel (0) target = $region69
    $region68: #{tpu_custom_call.1} parent=1 // pred_region
      %147 = dma.done [#allocation6], 768
    $region69: #{tpu_custom_call.1} parent=1 // pred_fallthru
      _
    // Predicated region
    $region70: #{tpu_custom_call.1} parent=1 // pred_check
      _
    $region71: #{tpu_custom_call.1} parent=1 // pred_check_branch
      %149 = sbr.rel (0) target = $region73
    $region72: #{tpu_custom_call.1} parent=1 // pred_region
      %150 = dma.done [#allocation6], 768
    $region73: #{tpu_custom_call.1} parent=1 // pred_fallthru
      _
    // Predicated region
    $region74: #{tpu_custom_call.1} parent=1 // pred_check
      _
    $region75: #{tpu_custom_call.1} parent=1 // pred_check_branch
      %152 = sbr.rel (0) target = $region77
    $region76: #{tpu_custom_call.1} parent=1 // pred_region
      %153 = dma.done [#allocation9], 4096
    $region77: #{tpu_custom_call.1} parent=1 // pred_fallthru
      _
    // Predicated region
    $region78: #{tpu_custom_call.1} parent=1 // pred_check
      _
    $region79: #{tpu_custom_call.1} parent=1 // pred_check_branch
      %155 = sbr.rel (0) target = $region81
    $region80: #{tpu_custom_call.1} parent=1 // pred_region
      %156 = dma.done [#allocation9], 6144
    $region81: #{tpu_custom_call.1} parent=1 // pred_fallthru
      _
    // Predicated region
    $region82: #{tpu_custom_call.1} parent=1 // pred_check
      _
    $region83: #{tpu_custom_call.1} parent=1 // pred_check_branch
      %158 = sbr.rel (0) target = $region85
    $region84: #{tpu_custom_call.1} parent=1 // pred_region
      %159 = dma.done [#allocation12], 6144
    $region85: #{tpu_custom_call.1} parent=1 // pred_fallthru
      _
    // Predicated region
    $region86: #{tpu_custom_call.1} parent=1 // pred_check
      _
    $region87: #{tpu_custom_call.1} parent=1 // pred_check_branch
      %161 = sbr.rel (0) target = $region89
    $region88: #{tpu_custom_call.1} parent=1 // pred_region
      %162 = dma.done [#allocation12], 18432
    $region89: #{tpu_custom_call.1} parent=1 // pred_fallthru
      _
    // Predicated region
    $region90: #{tpu_custom_call.1} parent=1 // pred_check
      _
    $region91: #{tpu_custom_call.1} parent=1 // pred_check_branch
      %164 = sbr.rel (0) target = $region93
    $region92: #{tpu_custom_call.1} parent=1 // pred_region
      %165 = dma.done [#allocation15], 24576
    $region93: #{tpu_custom_call.1} parent=1 // pred_fallthru
      _
    // Predicated region
    $region94: #{tpu_custom_call.1} parent=1 // pred_check
      _
    $region95: #{tpu_custom_call.1} parent=1 // pred_check_branch
      %167 = sbr.rel (0) target = $region97
    $region96: #{tpu_custom_call.1} parent=1 // pred_region
      %168 = dma.done [#allocation15], 4096
    $region97: #{tpu_custom_call.1} parent=1 // pred_fallthru
      _
    %v170 = vld [vmem:[#allocation2] sm:$0xff]
    %v171 = vld [vmem:[#allocation2 + $0x8] sm:$0xff]
    %v172 = vld [vmem:[#allocation2 + $0x10] sm:$0xff]
    %v173 = vld [vmem:[#allocation2 + $0x18] sm:$0xff]
    %v174 = vld [vmem:[#allocation2 + $0x20] sm:$0xff]
    %v175 = vld [vmem:[#allocation2 + $0x28] sm:$0xff]
    %v176 = vld [vmem:[#allocation2 + $0x30] sm:$0xff]
    %v177 = vld [vmem:[#allocation2 + $0x38] sm:$0xff]
    %v178 = vld [vmem:[#allocation2 + $0x40] sm:$0xff]
    %v179 = vld [vmem:[#allocation2 + $0x48] sm:$0xff]
    %v180 = vld [vmem:[#allocation2 + $0x50] sm:$0xff]
    %v181 = vld [vmem:[#allocation2 + $0x58] sm:$0xff]
    %v182 = vld [vmem:[#allocation2 + $0x60] sm:$0xff]
    %v183 = vld [vmem:[#allocation2 + $0x68] sm:$0xff]
    %v184 = vld [vmem:[#allocation2 + $0x70] sm:$0xff]
    %v185 = vld [vmem:[#allocation2 + $0x78] sm:$0xff]
    %v202 = vcombine.high %v170, %v170
    %v203 = vcombine.high %v171, %v171
    %v204 = vcombine.high %v172, %v172
    %v205 = vcombine.high %v173, %v173
    %v206 = vcombine.high %v174, %v174
    %v207 = vcombine.high %v175, %v175
    %v208 = vcombine.high %v176, %v176
    %v209 = vcombine.high %v177, %v177
    %v210 = vcombine.high %v178, %v178
    %v211 = vcombine.high %v179, %v179
    %v212 = vcombine.high %v180, %v180
    %v213 = vcombine.high %v181, %v181
    %v214 = vcombine.high %v182, %v182
    %v215 = vcombine.high %v183, %v183
    %v216 = vcombine.high %v184, %v184
    %v217 = vcombine.high %v185, %v185
    %vm234 = vcmask 1043456
    %v235 = vsel %vm234, %v170, 0.0
    %v236 = vrot.slane %v235, 4
    %v237 = vadd.f32 %v235, %v236
    %v238 = vrot.slane %v237, 2
    %v239 = vadd.f32 %v237, %v238
    %v240 = vrot.slane %v239, 1
    %v241 = vadd.f32 %v239, %v240
    %v242 = vsel %vm234, %v202, 0.0
    %v243 = vrot.slane %v242, 4
    %v244 = vadd.f32 %v242, %v243
    %v245 = vrot.slane %v244, 2
    %v246 = vadd.f32 %v244, %v245
    %v247 = vrot.slane %v246, 1
    %v248 = vadd.f32 %v246, %v247
    %v249 = vsel %vm234, %v171, 0.0
    %v250 = vrot.slane %v249, 4
    %v251 = vadd.f32 %v249, %v250
    %v252 = vrot.slane %v251, 2
    %v253 = vadd.f32 %v251, %v252
    %v254 = vrot.slane %v253, 1
    %v255 = vadd.f32 %v253, %v254
    %v256 = vsel %vm234, %v203, 0.0
    %v257 = vrot.slane %v256, 4
    %v258 = vadd.f32 %v256, %v257
    %v259 = vrot.slane %v258, 2
    %v260 = vadd.f32 %v258, %v259
    %v261 = vrot.slane %v260, 1
    %v262 = vadd.f32 %v260, %v261
    %v263 = vsel %vm234, %v172, 0.0
    %v264 = vrot.slane %v263, 4
    %v265 = vadd.f32 %v263, %v264
    %v266 = vrot.slane %v265, 2
    %v267 = vadd.f32 %v265, %v266
    %v268 = vrot.slane %v267, 1
    %v269 = vadd.f32 %v267, %v268
    %v270 = vsel %vm234, %v204, 0.0
    %v271 = vrot.slane %v270, 4
    %v272 = vadd.f32 %v270, %v271
    %v273 = vrot.slane %v272, 2
    %v274 = vadd.f32 %v272, %v273
    %v275 = vrot.slane %v274, 1
    %v276 = vadd.f32 %v274, %v275
    %v277 = vsel %vm234, %v173, 0.0
    %v278 = vrot.slane %v277, 4
    %v279 = vadd.f32 %v277, %v278
    %v280 = vrot.slane %v279, 2
    %v281 = vadd.f32 %v279, %v280
    %v282 = vrot.slane %v281, 1
    %v283 = vadd.f32 %v281, %v282
    %v284 = vsel %vm234, %v205, 0.0
    %v285 = vrot.slane %v284, 4
    %v286 = vadd.f32 %v284, %v285
    %v287 = vrot.slane %v286, 2
    %v288 = vadd.f32 %v286, %v287
    %v289 = vrot.slane %v288, 1
    %v290 = vadd.f32 %v288, %v289
    %v291 = vsel %vm234, %v174, 0.0
    %v292 = vrot.slane %v291, 4
    %v293 = vadd.f32 %v291, %v292
    %v294 = vrot.slane %v293, 2
    %v295 = vadd.f32 %v293, %v294
    %v296 = vrot.slane %v295, 1
    %v297 = vadd.f32 %v295, %v296
    %v298 = vsel %vm234, %v206, 0.0
    %v299 = vrot.slane %v298, 4
    %v300 = vadd.f32 %v298, %v299
    %v301 = vrot.slane %v300, 2
    %v302 = vadd.f32 %v300, %v301
    %v303 = vrot.slane %v302, 1
    %v304 = vadd.f32 %v302, %v303
    %v305 = vsel %vm234, %v175, 0.0
    %v306 = vrot.slane %v305, 4
    %v307 = vadd.f32 %v305, %v306
    %v308 = vrot.slane %v307, 2
    %v309 = vadd.f32 %v307, %v308
    %v310 = vrot.slane %v309, 1
    %v311 = vadd.f32 %v309, %v310
    %v312 = vsel %vm234, %v207, 0.0
    %v313 = vrot.slane %v312, 4
    %v314 = vadd.f32 %v312, %v313
    %v315 = vrot.slane %v314, 2
    %v316 = vadd.f32 %v314, %v315
    %v317 = vrot.slane %v316, 1
    %v318 = vadd.f32 %v316, %v317
    %v319 = vsel %vm234, %v176, 0.0
    %v320 = vrot.slane %v319, 4
    %v321 = vadd.f32 %v319, %v320
    %v322 = vrot.slane %v321, 2
    %v323 = vadd.f32 %v321, %v322
    %v324 = vrot.slane %v323, 1
    %v325 = vadd.f32 %v323, %v324
    %v326 = vsel %vm234, %v208, 0.0
    %v327 = vrot.slane %v326, 4
    %v328 = vadd.f32 %v326, %v327
    %v329 = vrot.slane %v328, 2
    %v330 = vadd.f32 %v328, %v329
    %v331 = vrot.slane %v330, 1
    %v332 = vadd.f32 %v330, %v331
    %v333 = vsel %vm234, %v177, 0.0
    %v334 = vrot.slane %v333, 4
    %v335 = vadd.f32 %v333, %v334
    %v336 = vrot.slane %v335, 2
    %v337 = vadd.f32 %v335, %v336
    %v338 = vrot.slane %v337, 1
    %v339 = vadd.f32 %v337, %v338
    %v340 = vsel %vm234, %v209, 0.0
    %v341 = vrot.slane %v340, 4
    %v342 = vadd.f32 %v340, %v341
    %v343 = vrot.slane %v342, 2
    %v344 = vadd.f32 %v342, %v343
    %v345 = vrot.slane %v344, 1
    %v346 = vadd.f32 %v344, %v345
    %v347 = vsel %vm234, %v178, 0.0
    %v348 = vrot.slane %v347, 4
    %v349 = vadd.f32 %v347, %v348
    %v350 = vrot.slane %v349, 2
    %v351 = vadd.f32 %v349, %v350
    %v352 = vrot.slane %v351, 1
    %v353 = vadd.f32 %v351, %v352
    %v354 = vsel %vm234, %v210, 0.0
    %v355 = vrot.slane %v354, 4
    %v356 = vadd.f32 %v354, %v355
    %v357 = vrot.slane %v356, 2
    %v358 = vadd.f32 %v356, %v357
    %v359 = vrot.slane %v358, 1
    %v360 = vadd.f32 %v358, %v359
    %v361 = vsel %vm234, %v179, 0.0
    %v362 = vrot.slane %v361, 4
    %v363 = vadd.f32 %v361, %v362
    %v364 = vrot.slane %v363, 2
    %v365 = vadd.f32 %v363, %v364
    %v366 = vrot.slane %v365, 1
    %v367 = vadd.f32 %v365, %v366
    %v368 = vsel %vm234, %v211, 0.0
    %v369 = vrot.slane %v368, 4
    %v370 = vadd.f32 %v368, %v369
    %v371 = vrot.slane %v370, 2
    %v372 = vadd.f32 %v370, %v371
    %v373 = vrot.slane %v372, 1
    %v374 = vadd.f32 %v372, %v373
    %v375 = vsel %vm234, %v180, 0.0
    %v376 = vrot.slane %v375, 4
    %v377 = vadd.f32 %v375, %v376
    %v378 = vrot.slane %v377, 2
    %v379 = vadd.f32 %v377, %v378
    %v380 = vrot.slane %v379, 1
    %v381 = vadd.f32 %v379, %v380
    %v382 = vsel %vm234, %v212, 0.0
    %v383 = vrot.slane %v382, 4
    %v384 = vadd.f32 %v382, %v383
    %v385 = vrot.slane %v384, 2
    %v386 = vadd.f32 %v384, %v385
    %v387 = vrot.slane %v386, 1
    %v388 = vadd.f32 %v386, %v387
    %v389 = vsel %vm234, %v181, 0.0
    %v390 = vrot.slane %v389, 4
    %v391 = vadd.f32 %v389, %v390
    %v392 = vrot.slane %v391, 2
    %v393 = vadd.f32 %v391, %v392
    %v394 = vrot.slane %v393, 1
    %v395 = vadd.f32 %v393, %v394
    %v396 = vsel %vm234, %v213, 0.0
    %v397 = vrot.slane %v396, 4
    %v398 = vadd.f32 %v396, %v397
    %v399 = vrot.slane %v398, 2
    %v400 = vadd.f32 %v398, %v399
    %v401 = vrot.slane %v400, 1
    %v402 = vadd.f32 %v400, %v401
    %v403 = vsel %vm234, %v182, 0.0
    %v404 = vrot.slane %v403, 4
    %v405 = vadd.f32 %v403, %v404
    %v406 = vrot.slane %v405, 2
    %v407 = vadd.f32 %v405, %v406
    %v408 = vrot.slane %v407, 1
    %v409 = vadd.f32 %v407, %v408
    %v410 = vsel %vm234, %v214, 0.0
    %v411 = vrot.slane %v410, 4
    %v412 = vadd.f32 %v410, %v411
    %v413 = vrot.slane %v412, 2
    %v414 = vadd.f32 %v412, %v413
    %v415 = vrot.slane %v414, 1
    %v416 = vadd.f32 %v414, %v415
    %v417 = vsel %vm234, %v183, 0.0
    %v418 = vrot.slane %v417, 4
    %v419 = vadd.f32 %v417, %v418
    %v420 = vrot.slane %v419, 2
    %v421 = vadd.f32 %v419, %v420
    %v422 = vrot.slane %v421, 1
    %v423 = vadd.f32 %v421, %v422
    %v424 = vsel %vm234, %v215, 0.0
    %v425 = vrot.slane %v424, 4
    %v426 = vadd.f32 %v424, %v425
    %v427 = vrot.slane %v426, 2
    %v428 = vadd.f32 %v426, %v427
    %v429 = vrot.slane %v428, 1
    %v430 = vadd.f32 %v428, %v429
    %v431 = vsel %vm234, %v184, 0.0
    %v432 = vrot.slane %v431, 4
    %v433 = vadd.f32 %v431, %v432
    %v434 = vrot.slane %v433, 2
    %v435 = vadd.f32 %v433, %v434
    %v436 = vrot.slane %v435, 1
    %v437 = vadd.f32 %v435, %v436
    %v438 = vsel %vm234, %v216, 0.0
    %v439 = vrot.slane %v438, 4
    %v440 = vadd.f32 %v438, %v439
    %v441 = vrot.slane %v440, 2
    %v442 = vadd.f32 %v440, %v441
    %v443 = vrot.slane %v442, 1
    %v444 = vadd.f32 %v442, %v443
    %v445 = vsel %vm234, %v185, 0.0
    %v446 = vrot.slane %v445, 4
    %v447 = vadd.f32 %v445, %v446
    %v448 = vrot.slane %v447, 2
    %v449 = vadd.f32 %v447, %v448
    %v450 = vrot.slane %v449, 1
    %v451 = vadd.f32 %v449, %v450
    %v452 = vsel %vm234, %v217, 0.0
    %v453 = vrot.slane %v452, 4
    %v454 = vadd.f32 %v452, %v453
    %v455 = vrot.slane %v454, 2
    %v456 = vadd.f32 %v454, %v455
    %v457 = vrot.slane %v456, 1
    %v458 = vadd.f32 %v456, %v457
    %v459 = vrcp.pop 4.0
    %v460 = vmul.f32 %v241, %v459
    %v461 = vmul.f32 %v248, %v459
    %v462 = vmul.f32 %v255, %v459
    %v463 = vmul.f32 %v262, %v459
    %v464 = vmul.f32 %v269, %v459
    %v465 = vmul.f32 %v276, %v459
    %v466 = vmul.f32 %v283, %v459
    %v467 = vmul.f32 %v290, %v459
    %v468 = vmul.f32 %v297, %v459
    %v469 = vmul.f32 %v304, %v459
    %v470 = vmul.f32 %v311, %v459
    %v471 = vmul.f32 %v318, %v459
    %v472 = vmul.f32 %v325, %v459
    %v473 = vmul.f32 %v332, %v459
    %v474 = vmul.f32 %v339, %v459
    %v475 = vmul.f32 %v346, %v459
    %v476 = vmul.f32 %v353, %v459
    %v477 = vmul.f32 %v360, %v459
    %v478 = vmul.f32 %v367, %v459
    %v479 = vmul.f32 %v374, %v459
    %v480 = vmul.f32 %v381, %v459
    %v481 = vmul.f32 %v388, %v459
    %v482 = vmul.f32 %v395, %v459
    %v483 = vmul.f32 %v402, %v459
    %v484 = vmul.f32 %v409, %v459
    %v485 = vmul.f32 %v416, %v459
    %v486 = vmul.f32 %v423, %v459
    %v487 = vmul.f32 %v430, %v459
    %v488 = vmul.f32 %v437, %v459
    %v489 = vmul.f32 %v444, %v459
    %v490 = vmul.f32 %v451, %v459
    %v491 = vmul.f32 %v458, %v459
    %v492 = vpack.c.bf16 %v460, %v460
    %v493 = vpack.c.bf16 %v461, %v461
    %v494 = vpack.c.bf16 %v462, %v462
    %v495 = vpack.c.bf16 %v463, %v463
    %v496 = vpack.c.bf16 %v464, %v464
    %v497 = vpack.c.bf16 %v465, %v465
    %v498 = vpack.c.bf16 %v466, %v466
    %v499 = vpack.c.bf16 %v467, %v467
    %v500 = vpack.c.bf16 %v468, %v468
    %v501 = vpack.c.bf16 %v469, %v469
    %v502 = vpack.c.bf16 %v470, %v470
    %v503 = vpack.c.bf16 %v471, %v471
    %v504 = vpack.c.bf16 %v472, %v472
    %v505 = vpack.c.bf16 %v473, %v473
    %v506 = vpack.c.bf16 %v474, %v474
    %v507 = vpack.c.bf16 %v475, %v475
    %v508 = vpack.c.bf16 %v476, %v476
    %v509 = vpack.c.bf16 %v477, %v477
    %v510 = vpack.c.bf16 %v478, %v478
    %v511 = vpack.c.bf16 %v479, %v479
    %v512 = vpack.c.bf16 %v480, %v480
    %v513 = vpack.c.bf16 %v481, %v481
    %v514 = vpack.c.bf16 %v482, %v482
    %v515 = vpack.c.bf16 %v483, %v483
    %v516 = vpack.c.bf16 %v484, %v484
    %v517 = vpack.c.bf16 %v485, %v485
    %v518 = vpack.c.bf16 %v486, %v486
    %v519 = vpack.c.bf16 %v487, %v487
    %v520 = vpack.c.bf16 %v488, %v488
    %v521 = vpack.c.bf16 %v489, %v489
    %v522 = vpack.c.bf16 %v490, %v490
    %v523 = vpack.c.bf16 %v491, %v491
    %v524 = vld [vmem:[#allocation8] sm:$0xf]
    %v525 = vld [vmem:[#allocation8 + $0x4] sm:$0xf]
    %v526 = vld [vmem:[#allocation8 + $0x8] sm:$0xf]
    %v527 = vld [vmem:[#allocation8 + $0xc] sm:$0xf]
    %v528 = vld [vmem:[#allocation8 + $0x10] sm:$0xf]
    %v529 = vld [vmem:[#allocation8 + $0x14] sm:$0xf]
    %v530 = vld [vmem:[#allocation8 + $0x18] sm:$0xf]
    %v531 = vld [vmem:[#allocation8 + $0x1c] sm:$0xf]
    %v532 = vld [vmem:[#allocation8 + $0x20] sm:$0xf]
    %v533 = vld [vmem:[#allocation8 + $0x24] sm:$0xf]
    %v534 = vld [vmem:[#allocation8 + $0x28] sm:$0xf]
    %v535 = vld [vmem:[#allocation8 + $0x2c] sm:$0xf]
    %v536 = vld [vmem:[#allocation8 + $0x30] sm:$0xf]
    %v537 = vld [vmem:[#allocation8 + $0x34] sm:$0xf]
    %v538 = vld [vmem:[#allocation8 + $0x38] sm:$0xf]
    %v539 = vld [vmem:[#allocation8 + $0x3c] sm:$0xf]
    %v540 = vld [vmem:[#allocation8 + $0x40] sm:$0xf]
    %v541 = vld [vmem:[#allocation8 + $0x44] sm:$0xf]
    %v542 = vld [vmem:[#allocation8 + $0x48] sm:$0xf]
    %v543 = vld [vmem:[#allocation8 + $0x4c] sm:$0xf]
    %v544 = vld [vmem:[#allocation8 + $0x50] sm:$0xf]
    %v545 = vld [vmem:[#allocation8 + $0x54] sm:$0xf]
    %v546 = vld [vmem:[#allocation8 + $0x58] sm:$0xf]
    %v547 = vld [vmem:[#allocation8 + $0x5c] sm:$0xf]
    %v548 = vld [vmem:[#allocation8 + $0x60] sm:$0xf]
    %v549 = vld [vmem:[#allocation8 + $0x64] sm:$0xf]
    %v550 = vld [vmem:[#allocation8 + $0x68] sm:$0xf]
    %v551 = vld [vmem:[#allocation8 + $0x6c] sm:$0xf]
    %v552 = vld [vmem:[#allocation8 + $0x70] sm:$0xf]
    %v553 = vld [vmem:[#allocation8 + $0x74] sm:$0xf]
    %v554 = vld [vmem:[#allocation8 + $0x78] sm:$0xf]
    %v555 = vld [vmem:[#allocation8 + $0x7c] sm:$0xf]
    %v556 = vld [vmem:[#allocation8 + $0x80] sm:$0xf]
    %v557 = vld [vmem:[#allocation8 + $0x84] sm:$0xf]
    %v558 = vld [vmem:[#allocation8 + $0x88] sm:$0xf]
    %v559 = vld [vmem:[#allocation8 + $0x8c] sm:$0xf]
    %v560 = vld [vmem:[#allocation8 + $0x90] sm:$0xf]
    %v561 = vld [vmem:[#allocation8 + $0x94] sm:$0xf]
    %v562 = vld [vmem:[#allocation8 + $0x98] sm:$0xf]
    %v563 = vld [vmem:[#allocation8 + $0x9c] sm:$0xf]
    %v564 = vld [vmem:[#allocation8 + $0xa0] sm:$0xf]
    %v565 = vld [vmem:[#allocation8 + $0xa4] sm:$0xf]
    %v566 = vld [vmem:[#allocation8 + $0xa8] sm:$0xf]
    %v567 = vld [vmem:[#allocation8 + $0xac] sm:$0xf]
    %v568 = vld [vmem:[#allocation8 + $0xb0] sm:$0xf]
    %v569 = vld [vmem:[#allocation8 + $0xb4] sm:$0xf]
    %v570 = vld [vmem:[#allocation8 + $0xb8] sm:$0xf]
    %v571 = vld [vmem:[#allocation8 + $0xbc] sm:$0xf]
    %v572 = vld [vmem:[#allocation8 + $0xc0] sm:$0xf]
    %v573 = vld [vmem:[#allocation8 + $0xc4] sm:$0xf]
    %v574 = vld [vmem:[#allocation8 + $0xc8] sm:$0xf]
    %v575 = vld [vmem:[#allocation8 + $0xcc] sm:$0xf]
    %v576 = vld [vmem:[#allocation8 + $0xd0] sm:$0xf]
    %v577 = vld [vmem:[#allocation8 + $0xd4] sm:$0xf]
    %v578 = vld [vmem:[#allocation8 + $0xd8] sm:$0xf]
    %v579 = vld [vmem:[#allocation8 + $0xdc] sm:$0xf]
    %v580 = vld [vmem:[#allocation8 + $0xe0] sm:$0xf]
    %v581 = vld [vmem:[#allocation8 + $0xe4] sm:$0xf]
    %v582 = vld [vmem:[#allocation8 + $0xe8] sm:$0xf]
    %v583 = vld [vmem:[#allocation8 + $0xec] sm:$0xf]
    %v584 = vld [vmem:[#allocation8 + $0xf0] sm:$0xf]
    %v585 = vld [vmem:[#allocation8 + $0xf4] sm:$0xf]
    %v586 = vld [vmem:[#allocation8 + $0xf8] sm:$0xf]
    %v587 = vld [vmem:[#allocation8 + $0xfc] sm:$0xf]
    %v588 = vld [vmem:[%s4] sm:$0x1]
    %v590 = vlaneseq
    %v591 = vshrl.u32 %v590, 7
    %v592 = vsub.s32 0, %v591
    %v593 = vrot.slane %v588, %v592
    %v627 = vunpack.c.l.b16 %v492
    %v628 = vunpack.c.l.b16 %v493
    %v629 = vunpack.c.l.b16 %v494
    %v630 = vunpack.c.l.b16 %v495
    %v631 = vunpack.c.l.b16 %v496
    %v632 = vunpack.c.l.b16 %v497
    %v633 = vunpack.c.l.b16 %v498
    %v634 = vunpack.c.l.b16 %v499
    %v635 = vunpack.c.l.b16 %v500
    %v636 = vunpack.c.l.b16 %v501
    %v637 = vunpack.c.l.b16 %v502
    %v638 = vunpack.c.l.b16 %v503
    %v639 = vunpack.c.l.b16 %v504
    %v640 = vunpack.c.l.b16 %v505
    %v641 = vunpack.c.l.b16 %v506
    %v642 = vunpack.c.l.b16 %v507
    %v643 = vunpack.c.l.b16 %v508
    %v644 = vunpack.c.l.b16 %v509
    %v645 = vunpack.c.l.b16 %v510
    %v646 = vunpack.c.l.b16 %v511
    %v647 = vunpack.c.l.b16 %v512
    %v648 = vunpack.c.l.b16 %v513
    %v649 = vunpack.c.l.b16 %v514
    %v650 = vunpack.c.l.b16 %v515
    %v651 = vunpack.c.l.b16 %v516
    %v652 = vunpack.c.l.b16 %v517
    %v653 = vunpack.c.l.b16 %v518
    %v654 = vunpack.c.l.b16 %v519
    %v655 = vunpack.c.l.b16 %v520
    %v656 = vunpack.c.l.b16 %v521
    %v657 = vunpack.c.l.b16 %v522
    %v658 = vunpack.c.l.b16 %v523
    %vm659 = vcmask 1041409
    %v660 = vsel %vm659, %v631, %v627
    %vm661 = vcmask 1042434
    %v662 = vsel %vm661, %v635, %v660
    %vm663 = vcmask 1043459
    %v664 = vsel %vm663, %v639, %v662
    %vm665 = vcmask 1044484
    %v666 = vsel %vm665, %v643, %v664
    %vm667 = vcmask 1045509
    %v668 = vsel %vm667, %v647, %v666
    %vm669 = vcmask 1046534
    %v670 = vsel %vm669, %v651, %v668
    %vm671 = vcmask 1047559
    %v672 = vsel %vm671, %v655, %v670
    %v673 = vsel %vm659, %v632, %v628
    %v674 = vsel %vm661, %v636, %v673
    %v675 = vsel %vm663, %v640, %v674
    %v676 = vsel %vm665, %v644, %v675
    %v677 = vsel %vm667, %v648, %v676
    %v678 = vsel %vm669, %v652, %v677
    %v679 = vsel %vm671, %v656, %v678
    %v680 = vsel %vm659, %v633, %v629
    %v681 = vsel %vm661, %v637, %v680
    %v682 = vsel %vm663, %v641, %v681
    %v683 = vsel %vm665, %v645, %v682
    %v684 = vsel %vm667, %v649, %v683
    %v685 = vsel %vm669, %v653, %v684
    %v686 = vsel %vm671, %v657, %v685
    %v687 = vsel %vm659, %v634, %v630
    %v688 = vsel %vm661, %v638, %v687
    %v689 = vsel %vm663, %v642, %v688
    %v690 = vsel %vm665, %v646, %v689
    %v691 = vsel %vm667, %v650, %v690
    %v692 = vsel %vm669, %v654, %v691
    %v693 = vsel %vm671, %v658, %v692
    %v694 = vpack.c.b16 %v672, %v672
    %v695 = vpack.c.b16 %v679, %v679
    %v696 = vpack.c.b16 %v686, %v686
    %v697 = vpack.c.b16 %v693, %v693
    %v766 = vunpack.c.l.b16 %v524
    %v767 = vunpack.c.l.b16 %v525
    %v768 = vunpack.c.l.b16 %v526
    %v769 = vunpack.c.l.b16 %v527
    %v770 = vunpack.c.l.b16 %v528
    %v771 = vunpack.c.l.b16 %v529
    %v772 = vunpack.c.l.b16 %v530
    %v773 = vunpack.c.l.b16 %v531
    %v774 = vunpack.c.l.b16 %v532
    %v775 = vunpack.c.l.b16 %v533
    %v776 = vunpack.c.l.b16 %v534
    %v777 = vunpack.c.l.b16 %v535
    %v778 = vunpack.c.l.b16 %v536
    %v779 = vunpack.c.l.b16 %v537
    %v780 = vunpack.c.l.b16 %v538
    %v781 = vunpack.c.l.b16 %v539
    %v782 = vunpack.c.l.b16 %v540
    %v783 = vunpack.c.l.b16 %v541
    %v784 = vunpack.c.l.b16 %v542
    %v785 = vunpack.c.l.b16 %v543
    %v786 = vunpack.c.l.b16 %v544
    %v787 = vunpack.c.l.b16 %v545
    %v788 = vunpack.c.l.b16 %v546
    %v789 = vunpack.c.l.b16 %v547
    %v790 = vunpack.c.l.b16 %v548
    %v791 = vunpack.c.l.b16 %v549
    %v792 = vunpack.c.l.b16 %v550
    %v793 = vunpack.c.l.b16 %v551
    %v794 = vunpack.c.l.b16 %v552
    %v795 = vunpack.c.l.b16 %v553
    %v796 = vunpack.c.l.b16 %v554
    %v797 = vunpack.c.l.b16 %v555
    %v798 = vunpack.c.l.b16 %v556
    %v799 = vunpack.c.l.b16 %v557
    %v800 = vunpack.c.l.b16 %v558
    %v801 = vunpack.c.l.b16 %v559
    %v802 = vunpack.c.l.b16 %v560
    %v803 = vunpack.c.l.b16 %v561
    %v804 = vunpack.c.l.b16 %v562
    %v805 = vunpack.c.l.b16 %v563
    %v806 = vunpack.c.l.b16 %v564
    %v807 = vunpack.c.l.b16 %v565
    %v808 = vunpack.c.l.b16 %v566
    %v809 = vunpack.c.l.b16 %v567
    %v810 = vunpack.c.l.b16 %v568
    %v811 = vunpack.c.l.b16 %v569
    %v812 = vunpack.c.l.b16 %v570
    %v813 = vunpack.c.l.b16 %v571
    %v814 = vunpack.c.l.b16 %v572
    %v815 = vunpack.c.l.b16 %v573
    %v816 = vunpack.c.l.b16 %v574
    %v817 = vunpack.c.l.b16 %v575
    %v818 = vunpack.c.l.b16 %v576
    %v819 = vunpack.c.l.b16 %v577
    %v820 = vunpack.c.l.b16 %v578
    %v821 = vunpack.c.l.b16 %v579
    %v822 = vunpack.c.l.b16 %v580
    %v823 = vunpack.c.l.b16 %v581
    %v824 = vunpack.c.l.b16 %v582
    %v825 = vunpack.c.l.b16 %v583
    %v826 = vunpack.c.l.b16 %v584
    %v827 = vunpack.c.l.b16 %v585
    %v828 = vunpack.c.l.b16 %v586
    %v829 = vunpack.c.l.b16 %v587
    %v830 = vpack.c.b16 %v767, %v766
    %v831 = vpack.c.b16 %v769, %v768
    %v832 = vpack.c.b16 %v771, %v770
    %v833 = vpack.c.b16 %v773, %v772
    %v834 = vpack.c.b16 %v775, %v774
    %v835 = vpack.c.b16 %v777, %v776
    %v836 = vpack.c.b16 %v779, %v778
    %v837 = vpack.c.b16 %v781, %v780
    %v838 = vpack.c.b16 %v783, %v782
    %v839 = vpack.c.b16 %v785, %v784
    %v840 = vpack.c.b16 %v787, %v786
    %v841 = vpack.c.b16 %v789, %v788
    %v842 = vpack.c.b16 %v791, %v790
    %v843 = vpack.c.b16 %v793, %v792
    %v844 = vpack.c.b16 %v795, %v794
    %v845 = vpack.c.b16 %v797, %v796
    %v846 = vpack.c.b16 %v799, %v798
    %v847 = vpack.c.b16 %v801, %v800
    %v848 = vpack.c.b16 %v803, %v802
    %v849 = vpack.c.b16 %v805, %v804
    %v850 = vpack.c.b16 %v807, %v806
    %v851 = vpack.c.b16 %v809, %v808
    %v852 = vpack.c.b16 %v811, %v810
    %v853 = vpack.c.b16 %v813, %v812
    %v854 = vpack.c.b16 %v815, %v814
    %v855 = vpack.c.b16 %v817, %v816
    %v856 = vpack.c.b16 %v819, %v818
    %v857 = vpack.c.b16 %v821, %v820
    %v858 = vpack.c.b16 %v823, %v822
    %v859 = vpack.c.b16 %v825, %v824
    %v860 = vpack.c.b16 %v827, %v826
    %v861 = vpack.c.b16 %v829, %v828
    %894 = vmatprep.subr.bf16.mxu0 0
    %895 = vmatpush1.bf16.msra.mxu0 %v837
    %896 = vmatprep.subr.bf16.mxu0 0
    %897 = vmatpush1.bf16.msra.mxu0 %v836
    %898 = vmatprep.subr.bf16.mxu0 0
    %899 = vmatpush1.bf16.msra.mxu0 %v835
    %900 = vmatprep.subr.bf16.mxu0 0
    %901 = vmatpush1.bf16.msra.mxu0 %v834
    %902 = vmatprep.subr.bf16.mxu0 0
    %903 = vmatpush1.bf16.msra.mxu0 %v833
    %904 = vmatprep.subr.bf16.mxu0 0
    %905 = vmatpush1.bf16.msra.mxu0 %v832
    %906 = vmatprep.subr.bf16.mxu0 0
    %907 = vmatpush1.bf16.msra.mxu0 %v831
    %908 = vmatprep.subr.bf16.mxu0 0
    %909 = vmatpush1.bf16.msra.mxu0 %v830
    %910 = vmatprep.subr.bf16.mxu0 0
    %911 = vmatpush2.bf16.msra.mxu0 %v845
    %912 = vmatprep.subr.bf16.mxu0 0
    %913 = vmatpush2.bf16.msra.mxu0 %v844
    %914 = vmatprep.subr.bf16.mxu0 0
    %915 = vmatpush2.bf16.msra.mxu0 %v843
    %916 = vmatprep.subr.bf16.mxu0 0
    %917 = vmatpush2.bf16.msra.mxu0 %v842
    %918 = vmatprep.subr.bf16.mxu0 0
    %919 = vmatpush2.bf16.msra.mxu0 %v841
    %920 = vmatprep.subr.bf16.mxu0 0
    %921 = vmatpush2.bf16.msra.mxu0 %v840
    %922 = vmatprep.subr.bf16.mxu0 0
    %923 = vmatpush2.bf16.msra.mxu0 %v839
    %924 = vmatprep.subr.bf16.mxu0 0
    %925 = vmatpush2.bf16.msra.mxu0 %v838
    %926 = vmatprep.mubr.bf16.mxu0 %v695
    %927 = vmatmul.mubr.bf16.gmra.mxu0 %v694
    %v928 = vpop.f32.mrf.mxu0
    %v929 = vadd.f32 %v593, %v928
    %v930 = vpop.f32.mrf.mxu0
    %v931 = vpop.f32.mrf.mxu0
    %v932 = vpop.f32.mrf.mxu0
    %933 = vdwg.mxu0
    %934 = vmatprep.subr.bf16.mxu0 0
    %935 = vmatpush1.bf16.msra.mxu0 %v853
    %936 = vmatprep.subr.bf16.mxu0 0
    %937 = vmatpush1.bf16.msra.mxu0 %v852
    %938 = vmatprep.subr.bf16.mxu0 0
    %939 = vmatpush1.bf16.msra.mxu0 %v851
    %940 = vmatprep.subr.bf16.mxu0 0
    %941 = vmatpush1.bf16.msra.mxu0 %v850
    %942 = vmatprep.subr.bf16.mxu0 0
    %943 = vmatpush1.bf16.msra.mxu0 %v849
    %944 = vmatprep.subr.bf16.mxu0 0
    %945 = vmatpush1.bf16.msra.mxu0 %v848
    %946 = vmatprep.subr.bf16.mxu0 0
    %947 = vmatpush1.bf16.msra.mxu0 %v847
    %948 = vmatprep.subr.bf16.mxu0 0
    %949 = vmatpush1.bf16.msra.mxu0 %v846
    %950 = vmatprep.subr.bf16.mxu0 0
    %951 = vmatpush2.bf16.msra.mxu0 %v861
    %952 = vmatprep.subr.bf16.mxu0 0
    %953 = vmatpush2.bf16.msra.mxu0 %v860
    %954 = vmatprep.subr.bf16.mxu0 0
    %955 = vmatpush2.bf16.msra.mxu0 %v859
    %956 = vmatprep.subr.bf16.mxu0 0
    %957 = vmatpush2.bf16.msra.mxu0 %v858
    %958 = vmatprep.subr.bf16.mxu0 0
    %959 = vmatpush2.bf16.msra.mxu0 %v857
    %960 = vmatprep.subr.bf16.mxu0 0
    %961 = vmatpush2.bf16.msra.mxu0 %v856
    %962 = vmatprep.subr.bf16.mxu0 0
    %963 = vmatpush2.bf16.msra.mxu0 %v855
    %964 = vmatprep.subr.bf16.mxu0 0
    %965 = vmatpush2.bf16.msra.mxu0 %v854
    %966 = vmatprep.mubr.bf16.mxu0 %v697
    %967 = vmatmul.mubr.bf16.gmra.mxu0 %v696
    %v968 = vpop.f32.mrf.mxu0
    %v969 = vadd.f32 %v929, %v968
    %v970 = vpop.f32.mrf.mxu0
    %v971 = vpop.f32.mrf.mxu0
    %v972 = vpop.f32.mrf.mxu0
    %973 = vdwg.mxu0
    %v974 = vld [vmem:[#allocation5] sm:$0xff]
    %v975 = vld [vmem:[#allocation5 + $0x8] sm:$0xff]
    %v976 = vld [vmem:[#allocation5 + $0x10] sm:$0xff]
    %v977 = vld [vmem:[#allocation5 + $0x18] sm:$0xff]
    %v978 = vld [vmem:[#allocation5 + $0x20] sm:$0xff]
    %v979 = vld [vmem:[#allocation5 + $0x28] sm:$0xff]
    %v980 = vpack.c.bf16 %v974, %v974
    %v981 = vpack.c.bf16 %v975, %v975
    %v982 = vpack.c.bf16 %v976, %v976
    %v983 = vpack.c.bf16 %v977, %v977
    %v984 = vpack.c.bf16 %v978, %v978
    %v985 = vpack.c.bf16 %v979, %v979
    %v986 = vld [vmem:[#allocation10] sm:$0xf]
    %v987 = vld [vmem:[#allocation10 + $0x4] sm:$0xf]
    %v988 = vld [vmem:[#allocation10 + $0x8] sm:$0xf]
    %v989 = vld [vmem:[#allocation10 + $0xc] sm:$0xf]
    %v990 = vld [vmem:[#allocation10 + $0x10] sm:$0xf]
    %v991 = vld [vmem:[#allocation10 + $0x14] sm:$0xf]
    %v992 = vld [vmem:[#allocation10 + $0x18] sm:$0xf]
    %v993 = vld [vmem:[#allocation10 + $0x1c] sm:$0xf]
    %v994 = vld [vmem:[#allocation10 + $0x20] sm:$0xf]
    %v995 = vld [vmem:[#allocation10 + $0x24] sm:$0xf]
    %v996 = vld [vmem:[#allocation10 + $0x28] sm:$0xf]
    %v997 = vld [vmem:[#allocation10 + $0x2c] sm:$0xf]
    %v998 = vld [vmem:[#allocation10 + $0x30] sm:$0xf]
    %v999 = vld [vmem:[#allocation10 + $0x34] sm:$0xf]
    %v1000 = vld [vmem:[#allocation10 + $0x38] sm:$0xf]
    %v1001 = vld [vmem:[#allocation10 + $0x3c] sm:$0xf]
    %v1002 = vld [vmem:[#allocation10 + $0x40] sm:$0xf]
    %v1003 = vld [vmem:[#allocation10 + $0x44] sm:$0xf]
    %v1004 = vld [vmem:[#allocation10 + $0x48] sm:$0xf]
    %v1005 = vld [vmem:[#allocation10 + $0x4c] sm:$0xf]
    %v1006 = vld [vmem:[#allocation10 + $0x50] sm:$0xf]
    %v1007 = vld [vmem:[#allocation10 + $0x54] sm:$0xf]
    %v1008 = vld [vmem:[#allocation10 + $0x58] sm:$0xf]
    %v1009 = vld [vmem:[#allocation10 + $0x5c] sm:$0xf]
    %v1010 = vld [vmem:[#allocation10 + $0x60] sm:$0xf]
    %v1011 = vld [vmem:[#allocation10 + $0x64] sm:$0xf]
    %v1012 = vld [vmem:[#allocation10 + $0x68] sm:$0xf]
    %v1013 = vld [vmem:[#allocation10 + $0x6c] sm:$0xf]
    %v1014 = vld [vmem:[#allocation10 + $0x70] sm:$0xf]
    %v1015 = vld [vmem:[#allocation10 + $0x74] sm:$0xf]
    %v1016 = vld [vmem:[#allocation10 + $0x78] sm:$0xf]
    %v1017 = vld [vmem:[#allocation10 + $0x7c] sm:$0xf]
    %v1018 = vld [vmem:[#allocation10 + $0x80] sm:$0xf]
    %v1019 = vld [vmem:[#allocation10 + $0x84] sm:$0xf]
    %v1020 = vld [vmem:[#allocation10 + $0x88] sm:$0xf]
    %v1021 = vld [vmem:[#allocation10 + $0x8c] sm:$0xf]
    %v1022 = vld [vmem:[#allocation10 + $0x90] sm:$0xf]
    %v1023 = vld [vmem:[#allocation10 + $0x94] sm:$0xf]
    %v1024 = vld [vmem:[#allocation10 + $0x98] sm:$0xf]
    %v1025 = vld [vmem:[#allocation10 + $0x9c] sm:$0xf]
    %v1026 = vld [vmem:[#allocation10 + $0xa0] sm:$0xf]
    %v1027 = vld [vmem:[#allocation10 + $0xa4] sm:$0xf]
    %v1028 = vld [vmem:[#allocation10 + $0xa8] sm:$0xf]
    %v1029 = vld [vmem:[#allocation10 + $0xac] sm:$0xf]
    %v1030 = vld [vmem:[#allocation10 + $0xb0] sm:$0xf]
    %v1031 = vld [vmem:[#allocation10 + $0xb4] sm:$0xf]
    %v1032 = vld [vmem:[#allocation10 + $0xb8] sm:$0xf]
    %v1033 = vld [vmem:[#allocation10 + $0xbc] sm:$0xf]
    %v1034 = vld [vmem:[#allocation10 + $0xc0] sm:$0xf]
    %v1035 = vld [vmem:[#allocation10 + $0xc4] sm:$0xf]
    %v1036 = vld [vmem:[#allocation10 + $0xc8] sm:$0xf]
    %v1037 = vld [vmem:[#allocation10 + $0xcc] sm:$0xf]
    %v1038 = vld [vmem:[#allocation10 + $0xd0] sm:$0xf]
    %v1039 = vld [vmem:[#allocation10 + $0xd4] sm:$0xf]
    %v1040 = vld [vmem:[#allocation10 + $0xd8] sm:$0xf]
    %v1041 = vld [vmem:[#allocation10 + $0xdc] sm:$0xf]
    %v1042 = vld [vmem:[#allocation10 + $0xe0] sm:$0xf]
    %v1043 = vld [vmem:[#allocation10 + $0xe4] sm:$0xf]
    %v1044 = vld [vmem:[#allocation10 + $0xe8] sm:$0xf]
    %v1045 = vld [vmem:[#allocation10 + $0xec] sm:$0xf]
    %v1046 = vld [vmem:[#allocation10 + $0xf0] sm:$0xf]
    %v1047 = vld [vmem:[#allocation10 + $0xf4] sm:$0xf]
    %v1048 = vld [vmem:[#allocation10 + $0xf8] sm:$0xf]
    %v1049 = vld [vmem:[#allocation10 + $0xfc] sm:$0xf]
    %v1050 = vld [vmem:[#allocation10 + $0x100] sm:$0xf]
    %v1051 = vld [vmem:[#allocation10 + $0x104] sm:$0xf]
    %v1052 = vld [vmem:[#allocation10 + $0x108] sm:$0xf]
    %v1053 = vld [vmem:[#allocation10 + $0x10c] sm:$0xf]
    %v1054 = vld [vmem:[#allocation10 + $0x110] sm:$0xf]
    %v1055 = vld [vmem:[#allocation10 + $0x114] sm:$0xf]
    %v1056 = vld [vmem:[#allocation10 + $0x118] sm:$0xf]
    %v1057 = vld [vmem:[#allocation10 + $0x11c] sm:$0xf]
    %v1058 = vld [vmem:[#allocation10 + $0x120] sm:$0xf]
    %v1059 = vld [vmem:[#allocation10 + $0x124] sm:$0xf]
    %v1060 = vld [vmem:[#allocation10 + $0x128] sm:$0xf]
    %v1061 = vld [vmem:[#allocation10 + $0x12c] sm:$0xf]
    %v1062 = vld [vmem:[#allocation10 + $0x130] sm:$0xf]
    %v1063 = vld [vmem:[#allocation10 + $0x134] sm:$0xf]
    %v1064 = vld [vmem:[#allocation10 + $0x138] sm:$0xf]
    %v1065 = vld [vmem:[#allocation10 + $0x13c] sm:$0xf]
    %v1066 = vld [vmem:[#allocation10 + $0x140] sm:$0xf]
    %v1067 = vld [vmem:[#allocation10 + $0x144] sm:$0xf]
    %v1068 = vld [vmem:[#allocation10 + $0x148] sm:$0xf]
    %v1069 = vld [vmem:[#allocation10 + $0x14c] sm:$0xf]
    %v1070 = vld [vmem:[#allocation10 + $0x150] sm:$0xf]
    %v1071 = vld [vmem:[#allocation10 + $0x154] sm:$0xf]
    %v1072 = vld [vmem:[#allocation10 + $0x158] sm:$0xf]
    %v1073 = vld [vmem:[#allocation10 + $0x15c] sm:$0xf]
    %v1074 = vld [vmem:[#allocation10 + $0x160] sm:$0xf]
    %v1075 = vld [vmem:[#allocation10 + $0x164] sm:$0xf]
    %v1076 = vld [vmem:[#allocation10 + $0x168] sm:$0xf]
    %v1077 = vld [vmem:[#allocation10 + $0x16c] sm:$0xf]
    %v1078 = vld [vmem:[#allocation10 + $0x170] sm:$0xf]
    %v1079 = vld [vmem:[#allocation10 + $0x174] sm:$0xf]
    %v1080 = vld [vmem:[#allocation10 + $0x178] sm:$0xf]
    %v1081 = vld [vmem:[#allocation10 + $0x17c] sm:$0xf]
    %v1082 = vld [vmem:[%s6] sm:$0x1]
    %v1084 = vlaneseq
    %v1085 = vshrl.u32 %v1084, 7
    %v1086 = vsub.s32 0, %v1085
    %v1087 = vrot.slane %v1082, %v1086
    %v1185 = vunpack.c.l.b16 %v986
    %v1186 = vunpack.c.l.b16 %v987
    %v1187 = vunpack.c.l.b16 %v988
    %v1188 = vunpack.c.l.b16 %v989
    %v1189 = vunpack.c.l.b16 %v990
    %v1190 = vunpack.c.l.b16 %v991
    %v1191 = vunpack.c.l.b16 %v992
    %v1192 = vunpack.c.l.b16 %v993
    %v1193 = vunpack.c.l.b16 %v994
    %v1194 = vunpack.c.l.b16 %v995
    %v1195 = vunpack.c.l.b16 %v996
    %v1196 = vunpack.c.l.b16 %v997
    %v1197 = vunpack.c.l.b16 %v998
    %v1198 = vunpack.c.l.b16 %v999
    %v1199 = vunpack.c.l.b16 %v1000
    %v1200 = vunpack.c.l.b16 %v1001
    %v1201 = vunpack.c.l.b16 %v1002
    %v1202 = vunpack.c.l.b16 %v1003
    %v1203 = vunpack.c.l.b16 %v1004
    %v1204 = vunpack.c.l.b16 %v1005
    %v1205 = vunpack.c.l.b16 %v1006
    %v1206 = vunpack.c.l.b16 %v1007
    %v1207 = vunpack.c.l.b16 %v1008
    %v1208 = vunpack.c.l.b16 %v1009
    %v1209 = vunpack.c.l.b16 %v1010
    %v1210 = vunpack.c.l.b16 %v1011
    %v1211 = vunpack.c.l.b16 %v1012
    %v1212 = vunpack.c.l.b16 %v1013
    %v1213 = vunpack.c.l.b16 %v1014
    %v1214 = vunpack.c.l.b16 %v1015
    %v1215 = vunpack.c.l.b16 %v1016
    %v1216 = vunpack.c.l.b16 %v1017
    %v1217 = vunpack.c.l.b16 %v1018
    %v1218 = vunpack.c.l.b16 %v1019
    %v1219 = vunpack.c.l.b16 %v1020
    %v1220 = vunpack.c.l.b16 %v1021
    %v1221 = vunpack.c.l.b16 %v1022
    %v1222 = vunpack.c.l.b16 %v1023
    %v1223 = vunpack.c.l.b16 %v1024
    %v1224 = vunpack.c.l.b16 %v1025
    %v1225 = vunpack.c.l.b16 %v1026
    %v1226 = vunpack.c.l.b16 %v1027
    %v1227 = vunpack.c.l.b16 %v1028
    %v1228 = vunpack.c.l.b16 %v1029
    %v1229 = vunpack.c.l.b16 %v1030
    %v1230 = vunpack.c.l.b16 %v1031
    %v1231 = vunpack.c.l.b16 %v1032
    %v1232 = vunpack.c.l.b16 %v1033
    %v1233 = vunpack.c.l.b16 %v1034
    %v1234 = vunpack.c.l.b16 %v1035
    %v1235 = vunpack.c.l.b16 %v1036
    %v1236 = vunpack.c.l.b16 %v1037
    %v1237 = vunpack.c.l.b16 %v1038
    %v1238 = vunpack.c.l.b16 %v1039
    %v1239 = vunpack.c.l.b16 %v1040
    %v1240 = vunpack.c.l.b16 %v1041
    %v1241 = vunpack.c.l.b16 %v1042
    %v1242 = vunpack.c.l.b16 %v1043
    %v1243 = vunpack.c.l.b16 %v1044
    %v1244 = vunpack.c.l.b16 %v1045
    %v1245 = vunpack.c.l.b16 %v1046
    %v1246 = vunpack.c.l.b16 %v1047
    %v1247 = vunpack.c.l.b16 %v1048
    %v1248 = vunpack.c.l.b16 %v1049
    %v1249 = vunpack.c.l.b16 %v1050
    %v1250 = vunpack.c.l.b16 %v1051
    %v1251 = vunpack.c.l.b16 %v1052
    %v1252 = vunpack.c.l.b16 %v1053
    %v1253 = vunpack.c.l.b16 %v1054
    %v1254 = vunpack.c.l.b16 %v1055
    %v1255 = vunpack.c.l.b16 %v1056
    %v1256 = vunpack.c.l.b16 %v1057
    %v1257 = vunpack.c.l.b16 %v1058
    %v1258 = vunpack.c.l.b16 %v1059
    %v1259 = vunpack.c.l.b16 %v1060
    %v1260 = vunpack.c.l.b16 %v1061
    %v1261 = vunpack.c.l.b16 %v1062
    %v1262 = vunpack.c.l.b16 %v1063
    %v1263 = vunpack.c.l.b16 %v1064
    %v1264 = vunpack.c.l.b16 %v1065
    %v1265 = vunpack.c.l.b16 %v1066
    %v1266 = vunpack.c.l.b16 %v1067
    %v1267 = vunpack.c.l.b16 %v1068
    %v1268 = vunpack.c.l.b16 %v1069
    %v1269 = vunpack.c.l.b16 %v1070
    %v1270 = vunpack.c.l.b16 %v1071
    %v1271 = vunpack.c.l.b16 %v1072
    %v1272 = vunpack.c.l.b16 %v1073
    %v1273 = vunpack.c.l.b16 %v1074
    %v1274 = vunpack.c.l.b16 %v1075
    %v1275 = vunpack.c.l.b16 %v1076
    %v1276 = vunpack.c.l.b16 %v1077
    %v1277 = vunpack.c.l.b16 %v1078
    %v1278 = vunpack.c.l.b16 %v1079
    %v1279 = vunpack.c.l.b16 %v1080
    %v1280 = vunpack.c.l.b16 %v1081
    %v1281 = vpack.c.b16 %v1186, %v1185
    %v1282 = vpack.c.b16 %v1188, %v1187
    %v1283 = vpack.c.b16 %v1190, %v1189
    %v1284 = vpack.c.b16 %v1192, %v1191
    %v1285 = vpack.c.b16 %v1194, %v1193
    %v1286 = vpack.c.b16 %v1196, %v1195
    %v1287 = vpack.c.b16 %v1198, %v1197
    %v1288 = vpack.c.b16 %v1200, %v1199
    %v1289 = vpack.c.b16 %v1202, %v1201
    %v1290 = vpack.c.b16 %v1204, %v1203
    %v1291 = vpack.c.b16 %v1206, %v1205
    %v1292 = vpack.c.b16 %v1208, %v1207
    %v1293 = vpack.c.b16 %v1210, %v1209
    %v1294 = vpack.c.b16 %v1212, %v1211
    %v1295 = vpack.c.b16 %v1214, %v1213
    %v1296 = vpack.c.b16 %v1216, %v1215
    %v1297 = vpack.c.b16 %v1218, %v1217
    %v1298 = vpack.c.b16 %v1220, %v1219
    %v1299 = vpack.c.b16 %v1222, %v1221
    %v1300 = vpack.c.b16 %v1224, %v1223
    %v1301 = vpack.c.b16 %v1226, %v1225
    %v1302 = vpack.c.b16 %v1228, %v1227
    %v1303 = vpack.c.b16 %v1230, %v1229
    %v1304 = vpack.c.b16 %v1232, %v1231
    %v1305 = vpack.c.b16 %v1234, %v1233
    %v1306 = vpack.c.b16 %v1236, %v1235
    %v1307 = vpack.c.b16 %v1238, %v1237
    %v1308 = vpack.c.b16 %v1240, %v1239
    %v1309 = vpack.c.b16 %v1242, %v1241
    %v1310 = vpack.c.b16 %v1244, %v1243
    %v1311 = vpack.c.b16 %v1246, %v1245
    %v1312 = vpack.c.b16 %v1248, %v1247
    %v1313 = vpack.c.b16 %v1250, %v1249
    %v1314 = vpack.c.b16 %v1252, %v1251
    %v1315 = vpack.c.b16 %v1254, %v1253
    %v1316 = vpack.c.b16 %v1256, %v1255
    %v1317 = vpack.c.b16 %v1258, %v1257
    %v1318 = vpack.c.b16 %v1260, %v1259
    %v1319 = vpack.c.b16 %v1262, %v1261
    %v1320 = vpack.c.b16 %v1264, %v1263
    %v1321 = vpack.c.b16 %v1266, %v1265
    %v1322 = vpack.c.b16 %v1268, %v1267
    %v1323 = vpack.c.b16 %v1270, %v1269
    %v1324 = vpack.c.b16 %v1272, %v1271
    %v1325 = vpack.c.b16 %v1274, %v1273
    %v1326 = vpack.c.b16 %v1276, %v1275
    %v1327 = vpack.c.b16 %v1278, %v1277
    %v1328 = vpack.c.b16 %v1280, %v1279
    %1377 = vmatprep.subr.bf16.mxu0 0
    %1378 = vmatpush1.bf16.msra.mxu0 %v1288
    %1379 = vmatprep.subr.bf16.mxu0 0
    %1380 = vmatpush1.bf16.msra.mxu0 %v1287
    %1381 = vmatprep.subr.bf16.mxu0 0
    %1382 = vmatpush1.bf16.msra.mxu0 %v1286
    %1383 = vmatprep.subr.bf16.mxu0 0
    %1384 = vmatpush1.bf16.msra.mxu0 %v1285
    %1385 = vmatprep.subr.bf16.mxu0 0
    %1386 = vmatpush1.bf16.msra.mxu0 %v1284
    %1387 = vmatprep.subr.bf16.mxu0 0
    %1388 = vmatpush1.bf16.msra.mxu0 %v1283
    %1389 = vmatprep.subr.bf16.mxu0 0
    %1390 = vmatpush1.bf16.msra.mxu0 %v1282
    %1391 = vmatprep.subr.bf16.mxu0 0
    %1392 = vmatpush1.bf16.msra.mxu0 %v1281
    %1393 = vmatprep.subr.bf16.mxu0 0
    %1394 = vmatpush2.bf16.msra.mxu0 %v1296
    %1395 = vmatprep.subr.bf16.mxu0 0
    %1396 = vmatpush2.bf16.msra.mxu0 %v1295
    %1397 = vmatprep.subr.bf16.mxu0 0
    %1398 = vmatpush2.bf16.msra.mxu0 %v1294
    %1399 = vmatprep.subr.bf16.mxu0 0
    %1400 = vmatpush2.bf16.msra.mxu0 %v1293
    %1401 = vmatprep.subr.bf16.mxu0 0
    %1402 = vmatpush2.bf16.msra.mxu0 %v1292
    %1403 = vmatprep.subr.bf16.mxu0 0
    %1404 = vmatpush2.bf16.msra.mxu0 %v1291
    %1405 = vmatprep.subr.bf16.mxu0 0
    %1406 = vmatpush2.bf16.msra.mxu0 %v1290
    %1407 = vmatprep.subr.bf16.mxu0 0
    %1408 = vmatpush2.bf16.msra.mxu0 %v1289
    %1409 = vmatprep.mubr.bf16.mxu0 %v981
    %1410 = vmatmul.mubr.bf16.gmra.mxu0 %v980
    %v1411 = vpop.f32.mrf.mxu0
    %v1412 = vadd.f32 %v1087, %v1411
    %v1413 = vpop.f32.mrf.mxu0
    %v1414 = vpop.f32.mrf.mxu0
    %v1415 = vpop.f32.mrf.mxu0
    %1416 = vdwg.mxu0
    %1417 = vmatprep.subr.bf16.mxu0 0
    %1418 = vmatpush1.bf16.msra.mxu0 %v1304
    %1419 = vmatprep.subr.bf16.mxu0 0
    %1420 = vmatpush1.bf16.msra.mxu0 %v1303
    %1421 = vmatprep.subr.bf16.mxu0 0
    %1422 = vmatpush1.bf16.msra.mxu0 %v1302
    %1423 = vmatprep.subr.bf16.mxu0 0
    %1424 = vmatpush1.bf16.msra.mxu0 %v1301
    %1425 = vmatprep.subr.bf16.mxu0 0
    %1426 = vmatpush1.bf16.msra.mxu0 %v1300
    %1427 = vmatprep.subr.bf16.mxu0 0
    %1428 = vmatpush1.bf16.msra.mxu0 %v1299
    %1429 = vmatprep.subr.bf16.mxu0 0
    %1430 = vmatpush1.bf16.msra.mxu0 %v1298
    %1431 = vmatprep.subr.bf16.mxu0 0
    %1432 = vmatpush1.bf16.msra.mxu0 %v1297
    %1433 = vmatprep.subr.bf16.mxu0 0
    %1434 = vmatpush2.bf16.msra.mxu0 %v1312
    %1435 = vmatprep.subr.bf16.mxu0 0
    %1436 = vmatpush2.bf16.msra.mxu0 %v1311
    %1437 = vmatprep.subr.bf16.mxu0 0
    %1438 = vmatpush2.bf16.msra.mxu0 %v1310
    %1439 = vmatprep.subr.bf16.mxu0 0
    %1440 = vmatpush2.bf16.msra.mxu0 %v1309
    %1441 = vmatprep.subr.bf16.mxu0 0
    %1442 = vmatpush2.bf16.msra.mxu0 %v1308
    %1443 = vmatprep.subr.bf16.mxu0 0
    %1444 = vmatpush2.bf16.msra.mxu0 %v1307
    %1445 = vmatprep.subr.bf16.mxu0 0
    %1446 = vmatpush2.bf16.msra.mxu0 %v1306
    %1447 = vmatprep.subr.bf16.mxu0 0
    %1448 = vmatpush2.bf16.msra.mxu0 %v1305
    %1449 = vmatprep.mubr.bf16.mxu0 %v983
    %1450 = vmatmul.mubr.bf16.gmra.mxu0 %v982
    %v1451 = vpop.f32.mrf.mxu0
    %v1452 = vadd.f32 %v1412, %v1451
    %v1453 = vpop.f32.mrf.mxu0
    %v1454 = vpop.f32.mrf.mxu0
    %v1455 = vpop.f32.mrf.mxu0
    %1456 = vdwg.mxu0
    %1457 = vmatprep.subr.bf16.mxu0 0
    %1458 = vmatpush1.bf16.msra.mxu0 %v1320
    %1459 = vmatprep.subr.bf16.mxu0 0
    %1460 = vmatpush1.bf16.msra.mxu0 %v1319
    %1461 = vmatprep.subr.bf16.mxu0 0
    %1462 = vmatpush1.bf16.msra.mxu0 %v1318
    %1463 = vmatprep.subr.bf16.mxu0 0
    %1464 = vmatpush1.bf16.msra.mxu0 %v1317
    %1465 = vmatprep.subr.bf16.mxu0 0
    %1466 = vmatpush1.bf16.msra.mxu0 %v1316
    %1467 = vmatprep.subr.bf16.mxu0 0
    %1468 = vmatpush1.bf16.msra.mxu0 %v1315
    %1469 = vmatprep.subr.bf16.mxu0 0
    %1470 = vmatpush1.bf16.msra.mxu0 %v1314
    %1471 = vmatprep.subr.bf16.mxu0 0
    %1472 = vmatpush1.bf16.msra.mxu0 %v1313
    %1473 = vmatprep.subr.bf16.mxu0 0
    %1474 = vmatpush2.bf16.msra.mxu0 %v1328
    %1475 = vmatprep.subr.bf16.mxu0 0
    %1476 = vmatpush2.bf16.msra.mxu0 %v1327
    %1477 = vmatprep.subr.bf16.mxu0 0
    %1478 = vmatpush2.bf16.msra.mxu0 %v1326
    %1479 = vmatprep.subr.bf16.mxu0 0
    %1480 = vmatpush2.bf16.msra.mxu0 %v1325
    %1481 = vmatprep.subr.bf16.mxu0 0
    %1482 = vmatpush2.bf16.msra.mxu0 %v1324
    %1483 = vmatprep.subr.bf16.mxu0 0
    %1484 = vmatpush2.bf16.msra.mxu0 %v1323
    %1485 = vmatprep.subr.bf16.mxu0 0
    %1486 = vmatpush2.bf16.msra.mxu0 %v1322
    %1487 = vmatprep.subr.bf16.mxu0 0
    %1488 = vmatpush2.bf16.msra.mxu0 %v1321
    %1489 = vmatprep.mubr.bf16.mxu0 %v985
    %1490 = vmatmul.mubr.bf16.gmra.mxu0 %v984
    %v1491 = vpop.f32.mrf.mxu0
    %v1492 = vadd.f32 %v1452, %v1491
    %v1493 = vpop.f32.mrf.mxu0
    %v1494 = vpop.f32.mrf.mxu0
    %v1495 = vpop.f32.mrf.mxu0
    %1496 = vdwg.mxu0
    %v1497 = vld [vmem:[#allocation7] sm:$0xff]
    %v1498 = vld [vmem:[#allocation7 + $0x8] sm:$0xff]
    %v1499 = vld [vmem:[#allocation7 + $0x10] sm:$0xff]
    %v1500 = vld [vmem:[#allocation7 + $0x18] sm:$0xff]
    %v1501 = vld [vmem:[#allocation7 + $0x20] sm:$0xff]
    %v1502 = vld [vmem:[#allocation7 + $0x28] sm:$0xff]
    %v1503 = vpack.c.bf16 %v1497, %v1497
    %v1504 = vpack.c.bf16 %v1498, %v1498
    %v1505 = vpack.c.bf16 %v1499, %v1499
    %v1506 = vpack.c.bf16 %v1500, %v1500
    %v1507 = vpack.c.bf16 %v1501, %v1501
    %v1508 = vpack.c.bf16 %v1502, %v1502
    %v1509 = vld [vmem:[#allocation11] sm:$0xf]
    %v1510 = vld [vmem:[#allocation11 + $0x4] sm:$0xf]
    %v1511 = vld [vmem:[#allocation11 + $0x8] sm:$0xf]
    %v1512 = vld [vmem:[#allocation11 + $0xc] sm:$0xf]
    %v1513 = vld [vmem:[#allocation11 + $0x10] sm:$0xf]
    %v1514 = vld [vmem:[#allocation11 + $0x14] sm:$0xf]
    %v1515 = vld [vmem:[#allocation11 + $0x18] sm:$0xf]
    %v1516 = vld [vmem:[#allocation11 + $0x1c] sm:$0xf]
    %v1517 = vld [vmem:[#allocation11 + $0x20] sm:$0xf]
    %v1518 = vld [vmem:[#allocation11 + $0x24] sm:$0xf]
    %v1519 = vld [vmem:[#allocation11 + $0x28] sm:$0xf]
    %v1520 = vld [vmem:[#allocation11 + $0x2c] sm:$0xf]
    %v1521 = vld [vmem:[#allocation11 + $0x30] sm:$0xf]
    %v1522 = vld [vmem:[#allocation11 + $0x34] sm:$0xf]
    %v1523 = vld [vmem:[#allocation11 + $0x38] sm:$0xf]
    %v1524 = vld [vmem:[#allocation11 + $0x3c] sm:$0xf]
    %v1525 = vld [vmem:[#allocation11 + $0x40] sm:$0xf]
    %v1526 = vld [vmem:[#allocation11 + $0x44] sm:$0xf]
    %v1527 = vld [vmem:[#allocation11 + $0x48] sm:$0xf]
    %v1528 = vld [vmem:[#allocation11 + $0x4c] sm:$0xf]
    %v1529 = vld [vmem:[#allocation11 + $0x50] sm:$0xf]
    %v1530 = vld [vmem:[#allocation11 + $0x54] sm:$0xf]
    %v1531 = vld [vmem:[#allocation11 + $0x58] sm:$0xf]
    %v1532 = vld [vmem:[#allocation11 + $0x5c] sm:$0xf]
    %v1533 = vld [vmem:[#allocation11 + $0x60] sm:$0xf]
    %v1534 = vld [vmem:[#allocation11 + $0x64] sm:$0xf]
    %v1535 = vld [vmem:[#allocation11 + $0x68] sm:$0xf]
    %v1536 = vld [vmem:[#allocation11 + $0x6c] sm:$0xf]
    %v1537 = vld [vmem:[#allocation11 + $0x70] sm:$0xf]
    %v1538 = vld [vmem:[#allocation11 + $0x74] sm:$0xf]
    %v1539 = vld [vmem:[#allocation11 + $0x78] sm:$0xf]
    %v1540 = vld [vmem:[#allocation11 + $0x7c] sm:$0xf]
    %v1541 = vld [vmem:[#allocation11 + $0x80] sm:$0xf]
    %v1542 = vld [vmem:[#allocation11 + $0x84] sm:$0xf]
    %v1543 = vld [vmem:[#allocation11 + $0x88] sm:$0xf]
    %v1544 = vld [vmem:[#allocation11 + $0x8c] sm:$0xf]
    %v1545 = vld [vmem:[#allocation11 + $0x90] sm:$0xf]
    %v1546 = vld [vmem:[#allocation11 + $0x94] sm:$0xf]
    %v1547 = vld [vmem:[#allocation11 + $0x98] sm:$0xf]
    %v1548 = vld [vmem:[#allocation11 + $0x9c] sm:$0xf]
    %v1549 = vld [vmem:[#allocation11 + $0xa0] sm:$0xf]
    %v1550 = vld [vmem:[#allocation11 + $0xa4] sm:$0xf]
    %v1551 = vld [vmem:[#allocation11 + $0xa8] sm:$0xf]
    %v1552 = vld [vmem:[#allocation11 + $0xac] sm:$0xf]
    %v1553 = vld [vmem:[#allocation11 + $0xb0] sm:$0xf]
    %v1554 = vld [vmem:[#allocation11 + $0xb4] sm:$0xf]
    %v1555 = vld [vmem:[#allocation11 + $0xb8] sm:$0xf]
    %v1556 = vld [vmem:[#allocation11 + $0xbc] sm:$0xf]
    %v1557 = vld [vmem:[#allocation11 + $0xc0] sm:$0xf]
    %v1558 = vld [vmem:[#allocation11 + $0xc4] sm:$0xf]
    %v1559 = vld [vmem:[#allocation11 + $0xc8] sm:$0xf]
    %v1560 = vld [vmem:[#allocation11 + $0xcc] sm:$0xf]
    %v1561 = vld [vmem:[#allocation11 + $0xd0] sm:$0xf]
    %v1562 = vld [vmem:[#allocation11 + $0xd4] sm:$0xf]
    %v1563 = vld [vmem:[#allocation11 + $0xd8] sm:$0xf]
    %v1564 = vld [vmem:[#allocation11 + $0xdc] sm:$0xf]
    %v1565 = vld [vmem:[#allocation11 + $0xe0] sm:$0xf]
    %v1566 = vld [vmem:[#allocation11 + $0xe4] sm:$0xf]
    %v1567 = vld [vmem:[#allocation11 + $0xe8] sm:$0xf]
    %v1568 = vld [vmem:[#allocation11 + $0xec] sm:$0xf]
    %v1569 = vld [vmem:[#allocation11 + $0xf0] sm:$0xf]
    %v1570 = vld [vmem:[#allocation11 + $0xf4] sm:$0xf]
    %v1571 = vld [vmem:[#allocation11 + $0xf8] sm:$0xf]
    %v1572 = vld [vmem:[#allocation11 + $0xfc] sm:$0xf]
    %v1573 = vld [vmem:[#allocation11 + $0x100] sm:$0xf]
    %v1574 = vld [vmem:[#allocation11 + $0x104] sm:$0xf]
    %v1575 = vld [vmem:[#allocation11 + $0x108] sm:$0xf]
    %v1576 = vld [vmem:[#allocation11 + $0x10c] sm:$0xf]
    %v1577 = vld [vmem:[#allocation11 + $0x110] sm:$0xf]
    %v1578 = vld [vmem:[#allocation11 + $0x114] sm:$0xf]
    %v1579 = vld [vmem:[#allocation11 + $0x118] sm:$0xf]
    %v1580 = vld [vmem:[#allocation11 + $0x11c] sm:$0xf]
    %v1581 = vld [vmem:[#allocation11 + $0x120] sm:$0xf]
    %v1582 = vld [vmem:[#allocation11 + $0x124] sm:$0xf]
    %v1583 = vld [vmem:[#allocation11 + $0x128] sm:$0xf]
    %v1584 = vld [vmem:[#allocation11 + $0x12c] sm:$0xf]
    %v1585 = vld [vmem:[#allocation11 + $0x130] sm:$0xf]
    %v1586 = vld [vmem:[#allocation11 + $0x134] sm:$0xf]
    %v1587 = vld [vmem:[#allocation11 + $0x138] sm:$0xf]
    %v1588 = vld [vmem:[#allocation11 + $0x13c] sm:$0xf]
    %v1589 = vld [vmem:[#allocation11 + $0x140] sm:$0xf]
    %v1590 = vld [vmem:[#allocation11 + $0x144] sm:$0xf]
    %v1591 = vld [vmem:[#allocation11 + $0x148] sm:$0xf]
    %v1592 = vld [vmem:[#allocation11 + $0x14c] sm:$0xf]
    %v1593 = vld [vmem:[#allocation11 + $0x150] sm:$0xf]
    %v1594 = vld [vmem:[#allocation11 + $0x154] sm:$0xf]
    %v1595 = vld [vmem:[#allocation11 + $0x158] sm:$0xf]
    %v1596 = vld [vmem:[#allocation11 + $0x15c] sm:$0xf]
    %v1597 = vld [vmem:[#allocation11 + $0x160] sm:$0xf]
    %v1598 = vld [vmem:[#allocation11 + $0x164] sm:$0xf]
    %v1599 = vld [vmem:[#allocation11 + $0x168] sm:$0xf]
    %v1600 = vld [vmem:[#allocation11 + $0x16c] sm:$0xf]
    %v1601 = vld [vmem:[#allocation11 + $0x170] sm:$0xf]
    %v1602 = vld [vmem:[#allocation11 + $0x174] sm:$0xf]
    %v1603 = vld [vmem:[#allocation11 + $0x178] sm:$0xf]
    %v1604 = vld [vmem:[#allocation11 + $0x17c] sm:$0xf]
    %v1605 = vld [vmem:[%s8] sm:$0x1]
    %v1607 = vlaneseq
    %v1608 = vshrl.u32 %v1607, 7
    %v1609 = vsub.s32 0, %v1608
    %v1610 = vrot.slane %v1605, %v1609
    %v1708 = vunpack.c.l.b16 %v1509
    %v1709 = vunpack.c.l.b16 %v1510
    %v1710 = vunpack.c.l.b16 %v1511
    %v1711 = vunpack.c.l.b16 %v1512
    %v1712 = vunpack.c.l.b16 %v1513
    %v1713 = vunpack.c.l.b16 %v1514
    %v1714 = vunpack.c.l.b16 %v1515
    %v1715 = vunpack.c.l.b16 %v1516
    %v1716 = vunpack.c.l.b16 %v1517
    %v1717 = vunpack.c.l.b16 %v1518
    %v1718 = vunpack.c.l.b16 %v1519
    %v1719 = vunpack.c.l.b16 %v1520
    %v1720 = vunpack.c.l.b16 %v1521
    %v1721 = vunpack.c.l.b16 %v1522
    %v1722 = vunpack.c.l.b16 %v1523
    %v1723 = vunpack.c.l.b16 %v1524
    %v1724 = vunpack.c.l.b16 %v1525
    %v1725 = vunpack.c.l.b16 %v1526
    %v1726 = vunpack.c.l.b16 %v1527
    %v1727 = vunpack.c.l.b16 %v1528
    %v1728 = vunpack.c.l.b16 %v1529
    %v1729 = vunpack.c.l.b16 %v1530
    %v1730 = vunpack.c.l.b16 %v1531
    %v1731 = vunpack.c.l.b16 %v1532
    %v1732 = vunpack.c.l.b16 %v1533
    %v1733 = vunpack.c.l.b16 %v1534
    %v1734 = vunpack.c.l.b16 %v1535
    %v1735 = vunpack.c.l.b16 %v1536
    %v1736 = vunpack.c.l.b16 %v1537
    %v1737 = vunpack.c.l.b16 %v1538
    %v1738 = vunpack.c.l.b16 %v1539
    %v1739 = vunpack.c.l.b16 %v1540
    %v1740 = vunpack.c.l.b16 %v1541
    %v1741 = vunpack.c.l.b16 %v1542
    %v1742 = vunpack.c.l.b16 %v1543
    %v1743 = vunpack.c.l.b16 %v1544
    %v1744 = vunpack.c.l.b16 %v1545
    %v1745 = vunpack.c.l.b16 %v1546
    %v1746 = vunpack.c.l.b16 %v1547
    %v1747 = vunpack.c.l.b16 %v1548
    %v1748 = vunpack.c.l.b16 %v1549
    %v1749 = vunpack.c.l.b16 %v1550
    %v1750 = vunpack.c.l.b16 %v1551
    %v1751 = vunpack.c.l.b16 %v1552
    %v1752 = vunpack.c.l.b16 %v1553
    %v1753 = vunpack.c.l.b16 %v1554
    %v1754 = vunpack.c.l.b16 %v1555
    %v1755 = vunpack.c.l.b16 %v1556
    %v1756 = vunpack.c.l.b16 %v1557
    %v1757 = vunpack.c.l.b16 %v1558
    %v1758 = vunpack.c.l.b16 %v1559
    %v1759 = vunpack.c.l.b16 %v1560
    %v1760 = vunpack.c.l.b16 %v1561
    %v1761 = vunpack.c.l.b16 %v1562
    %v1762 = vunpack.c.l.b16 %v1563
    %v1763 = vunpack.c.l.b16 %v1564
    %v1764 = vunpack.c.l.b16 %v1565
    %v1765 = vunpack.c.l.b16 %v1566
    %v1766 = vunpack.c.l.b16 %v1567
    %v1767 = vunpack.c.l.b16 %v1568
    %v1768 = vunpack.c.l.b16 %v1569
    %v1769 = vunpack.c.l.b16 %v1570
    %v1770 = vunpack.c.l.b16 %v1571
    %v1771 = vunpack.c.l.b16 %v1572
    %v1772 = vunpack.c.l.b16 %v1573
    %v1773 = vunpack.c.l.b16 %v1574
    %v1774 = vunpack.c.l.b16 %v1575
    %v1775 = vunpack.c.l.b16 %v1576
    %v1776 = vunpack.c.l.b16 %v1577
    %v1777 = vunpack.c.l.b16 %v1578
    %v1778 = vunpack.c.l.b16 %v1579
    %v1779 = vunpack.c.l.b16 %v1580
    %v1780 = vunpack.c.l.b16 %v1581
    %v1781 = vunpack.c.l.b16 %v1582
    %v1782 = vunpack.c.l.b16 %v1583
    %v1783 = vunpack.c.l.b16 %v1584
    %v1784 = vunpack.c.l.b16 %v1585
    %v1785 = vunpack.c.l.b16 %v1586
    %v1786 = vunpack.c.l.b16 %v1587
    %v1787 = vunpack.c.l.b16 %v1588
    %v1788 = vunpack.c.l.b16 %v1589
    %v1789 = vunpack.c.l.b16 %v1590
    %v1790 = vunpack.c.l.b16 %v1591
    %v1791 = vunpack.c.l.b16 %v1592
    %v1792 = vunpack.c.l.b16 %v1593
    %v1793 = vunpack.c.l.b16 %v1594
    %v1794 = vunpack.c.l.b16 %v1595
    %v1795 = vunpack.c.l.b16 %v1596
    %v1796 = vunpack.c.l.b16 %v1597
    %v1797 = vunpack.c.l.b16 %v1598
    %v1798 = vunpack.c.l.b16 %v1599
    %v1799 = vunpack.c.l.b16 %v1600
    %v1800 = vunpack.c.l.b16 %v1601
    %v1801 = vunpack.c.l.b16 %v1602
    %v1802 = vunpack.c.l.b16 %v1603
    %v1803 = vunpack.c.l.b16 %v1604
    %v1804 = vpack.c.b16 %v1709, %v1708
    %v1805 = vpack.c.b16 %v1711, %v1710
    %v1806 = vpack.c.b16 %v1713, %v1712
    %v1807 = vpack.c.b16 %v1715, %v1714
    %v1808 = vpack.c.b16 %v1717, %v1716
    %v1809 = vpack.c.b16 %v1719, %v1718
    %v1810 = vpack.c.b16 %v1721, %v1720
    %v1811 = vpack.c.b16 %v1723, %v1722
    %v1812 = vpack.c.b16 %v1725, %v1724
    %v1813 = vpack.c.b16 %v1727, %v1726
    %v1814 = vpack.c.b16 %v1729, %v1728
    %v1815 = vpack.c.b16 %v1731, %v1730
    %v1816 = vpack.c.b16 %v1733, %v1732
    %v1817 = vpack.c.b16 %v1735, %v1734
    %v1818 = vpack.c.b16 %v1737, %v1736
    %v1819 = vpack.c.b16 %v1739, %v1738
    %v1820 = vpack.c.b16 %v1741, %v1740
    %v1821 = vpack.c.b16 %v1743, %v1742
    %v1822 = vpack.c.b16 %v1745, %v1744
    %v1823 = vpack.c.b16 %v1747, %v1746
    %v1824 = vpack.c.b16 %v1749, %v1748
    %v1825 = vpack.c.b16 %v1751, %v1750
    %v1826 = vpack.c.b16 %v1753, %v1752
    %v1827 = vpack.c.b16 %v1755, %v1754
    %v1828 = vpack.c.b16 %v1757, %v1756
    %v1829 = vpack.c.b16 %v1759, %v1758
    %v1830 = vpack.c.b16 %v1761, %v1760
    %v1831 = vpack.c.b16 %v1763, %v1762
    %v1832 = vpack.c.b16 %v1765, %v1764
    %v1833 = vpack.c.b16 %v1767, %v1766
    %v1834 = vpack.c.b16 %v1769, %v1768
    %v1835 = vpack.c.b16 %v1771, %v1770
    %v1836 = vpack.c.b16 %v1773, %v1772
    %v1837 = vpack.c.b16 %v1775, %v1774
    %v1838 = vpack.c.b16 %v1777, %v1776
    %v1839 = vpack.c.b16 %v1779, %v1778
    %v1840 = vpack.c.b16 %v1781, %v1780
    %v1841 = vpack.c.b16 %v1783, %v1782
    %v1842 = vpack.c.b16 %v1785, %v1784
    %v1843 = vpack.c.b16 %v1787, %v1786
    %v1844 = vpack.c.b16 %v1789, %v1788
    %v1845 = vpack.c.b16 %v1791, %v1790
    %v1846 = vpack.c.b16 %v1793, %v1792
    %v1847 = vpack.c.b16 %v1795, %v1794
    %v1848 = vpack.c.b16 %v1797, %v1796
    %v1849 = vpack.c.b16 %v1799, %v1798
    %v1850 = vpack.c.b16 %v1801, %v1800
    %v1851 = vpack.c.b16 %v1803, %v1802
    %1900 = vmatprep.subr.bf16.mxu0 0
    %1901 = vmatpush1.bf16.msra.mxu0 %v1811
    %1902 = vmatprep.subr.bf16.mxu0 0
    %1903 = vmatpush1.bf16.msra.mxu0 %v1810
    %1904 = vmatprep.subr.bf16.mxu0 0
    %1905 = vmatpush1.bf16.msra.mxu0 %v1809
    %1906 = vmatprep.subr.bf16.mxu0 0
    %1907 = vmatpush1.bf16.msra.mxu0 %v1808
    %1908 = vmatprep.subr.bf16.mxu0 0
    %1909 = vmatpush1.bf16.msra.mxu0 %v1807
    %1910 = vmatprep.subr.bf16.mxu0 0
    %1911 = vmatpush1.bf16.msra.mxu0 %v1806
    %1912 = vmatprep.subr.bf16.mxu0 0
    %1913 = vmatpush1.bf16.msra.mxu0 %v1805
    %1914 = vmatprep.subr.bf16.mxu0 0
    %1915 = vmatpush1.bf16.msra.mxu0 %v1804
    %1916 = vmatprep.subr.bf16.mxu0 0
    %1917 = vmatpush2.bf16.msra.mxu0 %v1819
    %1918 = vmatprep.subr.bf16.mxu0 0
    %1919 = vmatpush2.bf16.msra.mxu0 %v1818
    %1920 = vmatprep.subr.bf16.mxu0 0
    %1921 = vmatpush2.bf16.msra.mxu0 %v1817
    %1922 = vmatprep.subr.bf16.mxu0 0
    %1923 = vmatpush2.bf16.msra.mxu0 %v1816
    %1924 = vmatprep.subr.bf16.mxu0 0
    %1925 = vmatpush2.bf16.msra.mxu0 %v1815
    %1926 = vmatprep.subr.bf16.mxu0 0
    %1927 = vmatpush2.bf16.msra.mxu0 %v1814
    %1928 = vmatprep.subr.bf16.mxu0 0
    %1929 = vmatpush2.bf16.msra.mxu0 %v1813
    %1930 = vmatprep.subr.bf16.mxu0 0
    %1931 = vmatpush2.bf16.msra.mxu0 %v1812
    %1932 = vmatprep.mubr.bf16.mxu0 %v1504
    %1933 = vmatmul.mubr.bf16.gmra.mxu0 %v1503
    %v1934 = vpop.f32.mrf.mxu0
    %v1935 = vadd.f32 %v1610, %v1934
    %v1936 = vpop.f32.mrf.mxu0
    %v1937 = vpop.f32.mrf.mxu0
    %v1938 = vpop.f32.mrf.mxu0
    %1939 = vdwg.mxu0
    %1940 = vmatprep.subr.bf16.mxu0 0
    %1941 = vmatpush1.bf16.msra.mxu0 %v1827
    %1942 = vmatprep.subr.bf16.mxu0 0
    %1943 = vmatpush1.bf16.msra.mxu0 %v1826
    %1944 = vmatprep.subr.bf16.mxu0 0
    %1945 = vmatpush1.bf16.msra.mxu0 %v1825
    %1946 = vmatprep.subr.bf16.mxu0 0
    %1947 = vmatpush1.bf16.msra.mxu0 %v1824
    %1948 = vmatprep.subr.bf16.mxu0 0
    %1949 = vmatpush1.bf16.msra.mxu0 %v1823
    %1950 = vmatprep.subr.bf16.mxu0 0
    %1951 = vmatpush1.bf16.msra.mxu0 %v1822
    %1952 = vmatprep.subr.bf16.mxu0 0
    %1953 = vmatpush1.bf16.msra.mxu0 %v1821
    %1954 = vmatprep.subr.bf16.mxu0 0
    %1955 = vmatpush1.bf16.msra.mxu0 %v1820
    %1956 = vmatprep.subr.bf16.mxu0 0
    %1957 = vmatpush2.bf16.msra.mxu0 %v1835
    %1958 = vmatprep.subr.bf16.mxu0 0
    %1959 = vmatpush2.bf16.msra.mxu0 %v1834
    %1960 = vmatprep.subr.bf16.mxu0 0
    %1961 = vmatpush2.bf16.msra.mxu0 %v1833
    %1962 = vmatprep.subr.bf16.mxu0 0
    %1963 = vmatpush2.bf16.msra.mxu0 %v1832
    %1964 = vmatprep.subr.bf16.mxu0 0
    %1965 = vmatpush2.bf16.msra.mxu0 %v1831
    %1966 = vmatprep.subr.bf16.mxu0 0
    %1967 = vmatpush2.bf16.msra.mxu0 %v1830
    %1968 = vmatprep.subr.bf16.mxu0 0
    %1969 = vmatpush2.bf16.msra.mxu0 %v1829
    %1970 = vmatprep.subr.bf16.mxu0 0
    %1971 = vmatpush2.bf16.msra.mxu0 %v1828
    %1972 = vmatprep.mubr.bf16.mxu0 %v1506
    %1973 = vmatmul.mubr.bf16.gmra.mxu0 %v1505
    %v1974 = vpop.f32.mrf.mxu0
    %v1975 = vadd.f32 %v1935, %v1974
    %v1976 = vpop.f32.mrf.mxu0
    %v1977 = vpop.f32.mrf.mxu0
    %v1978 = vpop.f32.mrf.mxu0
    %1979 = vdwg.mxu0
    %1980 = vmatprep.subr.bf16.mxu0 0
    %1981 = vmatpush1.bf16.msra.mxu0 %v1843
    %1982 = vmatprep.subr.bf16.mxu0 0
    %1983 = vmatpush1.bf16.msra.mxu0 %v1842
    %1984 = vmatprep.subr.bf16.mxu0 0
    %1985 = vmatpush1.bf16.msra.mxu0 %v1841
    %1986 = vmatprep.subr.bf16.mxu0 0
    %1987 = vmatpush1.bf16.msra.mxu0 %v1840
    %1988 = vmatprep.subr.bf16.mxu0 0
    %1989 = vmatpush1.bf16.msra.mxu0 %v1839
    %1990 = vmatprep.subr.bf16.mxu0 0
    %1991 = vmatpush1.bf16.msra.mxu0 %v1838
    %1992 = vmatprep.subr.bf16.mxu0 0
    %1993 = vmatpush1.bf16.msra.mxu0 %v1837
    %1994 = vmatprep.subr.bf16.mxu0 0
    %1995 = vmatpush1.bf16.msra.mxu0 %v1836
    %1996 = vmatprep.subr.bf16.mxu0 0
    %1997 = vmatpush2.bf16.msra.mxu0 %v1851
    %1998 = vmatprep.subr.bf16.mxu0 0
    %1999 = vmatpush2.bf16.msra.mxu0 %v1850
    %2000 = vmatprep.subr.bf16.mxu0 0
    %2001 = vmatpush2.bf16.msra.mxu0 %v1849
    %2002 = vmatprep.subr.bf16.mxu0 0
    %2003 = vmatpush2.bf16.msra.mxu0 %v1848
    %2004 = vmatprep.subr.bf16.mxu0 0
    %2005 = vmatpush2.bf16.msra.mxu0 %v1847
    %2006 = vmatprep.subr.bf16.mxu0 0
    %2007 = vmatpush2.bf16.msra.mxu0 %v1846
    %2008 = vmatprep.subr.bf16.mxu0 0
    %2009 = vmatpush2.bf16.msra.mxu0 %v1845
    %2010 = vmatprep.subr.bf16.mxu0 0
    %2011 = vmatpush2.bf16.msra.mxu0 %v1844
    %2012 = vmatprep.mubr.bf16.mxu0 %v1508
    %2013 = vmatmul.mubr.bf16.gmra.mxu0 %v1507
    %v2014 = vpop.f32.mrf.mxu0
    %v2015 = vadd.f32 %v1975, %v2014
    %v2016 = vpop.f32.mrf.mxu0
    %v2017 = vpop.f32.mrf.mxu0
    %v2018 = vpop.f32.mrf.mxu0
    %2019 = vdwg.mxu0
    %v2020 = vpack.c.bf16 %v969, %v969
    %v2021 = vpack.c.bf16 %v1492, %v1492
    %v2022 = vpack.c.bf16 %v2015, %v2015
    %v2023 = vld [vmem:[#allocation13] sm:$0xff]
    %v2024 = vld [vmem:[#allocation13 + $0x8] sm:$0xff]
    %v2025 = vld [vmem:[#allocation13 + $0x10] sm:$0xff]
    %v2026 = vld [vmem:[#allocation13 + $0x18] sm:$0xff]
    %v2027 = vld [vmem:[#allocation13 + $0x20] sm:$0xff]
    %v2028 = vld [vmem:[#allocation13 + $0x28] sm:$0xff]
    %v2029 = vld [vmem:[#allocation13 + $0x30] sm:$0xff]
    %v2030 = vld [vmem:[#allocation13 + $0x38] sm:$0xff]
    %v2031 = vld [vmem:[#allocation13 + $0x40] sm:$0xff]
    %v2032 = vld [vmem:[#allocation13 + $0x48] sm:$0xff]
    %v2033 = vld [vmem:[#allocation13 + $0x50] sm:$0xff]
    %v2034 = vld [vmem:[#allocation13 + $0x58] sm:$0xff]
    %v2035 = vld [vmem:[#allocation13 + $0x60] sm:$0xff]
    %v2036 = vld [vmem:[#allocation13 + $0x68] sm:$0xff]
    %v2037 = vld [vmem:[#allocation13 + $0x70] sm:$0xff]
    %v2038 = vld [vmem:[#allocation13 + $0x78] sm:$0xff]
    %v2039 = vld [vmem:[#allocation13 + $0x80] sm:$0xff]
    %v2040 = vld [vmem:[#allocation13 + $0x88] sm:$0xff]
    %v2041 = vld [vmem:[#allocation13 + $0x90] sm:$0xff]
    %v2042 = vld [vmem:[#allocation13 + $0x98] sm:$0xff]
    %v2043 = vld [vmem:[#allocation13 + $0xa0] sm:$0xff]
    %v2044 = vld [vmem:[#allocation13 + $0xa8] sm:$0xff]
    %v2045 = vld [vmem:[#allocation13 + $0xb0] sm:$0xff]
    %v2046 = vld [vmem:[#allocation13 + $0xb8] sm:$0xff]
    %v2047 = vld [vmem:[#allocation13 + $0xc0] sm:$0xff]
    %v2048 = vld [vmem:[#allocation13 + $0xc8] sm:$0xff]
    %v2049 = vld [vmem:[#allocation13 + $0xd0] sm:$0xff]
    %v2050 = vld [vmem:[#allocation13 + $0xd8] sm:$0xff]
    %v2051 = vld [vmem:[#allocation13 + $0xe0] sm:$0xff]
    %v2052 = vld [vmem:[#allocation13 + $0xe8] sm:$0xff]
    %v2053 = vld [vmem:[#allocation13 + $0xf0] sm:$0xff]
    %v2054 = vld [vmem:[#allocation13 + $0xf8] sm:$0xff]
    %v2055 = vld [vmem:[#allocation13 + $0x100] sm:$0xff]
    %v2056 = vld [vmem:[#allocation13 + $0x108] sm:$0xff]
    %v2057 = vld [vmem:[#allocation13 + $0x110] sm:$0xff]
    %v2058 = vld [vmem:[#allocation13 + $0x118] sm:$0xff]
    %v2059 = vld [vmem:[#allocation13 + $0x120] sm:$0xff]
    %v2060 = vld [vmem:[#allocation13 + $0x128] sm:$0xff]
    %v2061 = vld [vmem:[#allocation13 + $0x130] sm:$0xff]
    %v2062 = vld [vmem:[#allocation13 + $0x138] sm:$0xff]
    %v2063 = vld [vmem:[#allocation13 + $0x140] sm:$0xff]
    %v2064 = vld [vmem:[#allocation13 + $0x148] sm:$0xff]
    %v2065 = vld [vmem:[#allocation13 + $0x150] sm:$0xff]
    %v2066 = vld [vmem:[#allocation13 + $0x158] sm:$0xff]
    %v2067 = vld [vmem:[#allocation13 + $0x160] sm:$0xff]
    %v2068 = vld [vmem:[#allocation13 + $0x168] sm:$0xff]
    %v2069 = vld [vmem:[#allocation13 + $0x170] sm:$0xff]
    %v2070 = vld [vmem:[#allocation13 + $0x178] sm:$0xff]
    %v2071 = vld [vmem:[#allocation13 + $0x180] sm:$0xff]
    %v2072 = vld [vmem:[#allocation13 + $0x188] sm:$0xff]
    %v2073 = vld [vmem:[#allocation13 + $0x190] sm:$0xff]
    %v2074 = vld [vmem:[#allocation13 + $0x198] sm:$0xff]
    %v2075 = vld [vmem:[#allocation13 + $0x1a0] sm:$0xff]
    %v2076 = vld [vmem:[#allocation13 + $0x1a8] sm:$0xff]
    %v2077 = vld [vmem:[#allocation13 + $0x1b0] sm:$0xff]
    %v2078 = vld [vmem:[#allocation13 + $0x1b8] sm:$0xff]
    %v2079 = vld [vmem:[#allocation13 + $0x1c0] sm:$0xff]
    %v2080 = vld [vmem:[#allocation13 + $0x1c8] sm:$0xff]
    %v2081 = vld [vmem:[#allocation13 + $0x1d0] sm:$0xff]
    %v2082 = vld [vmem:[#allocation13 + $0x1d8] sm:$0xff]
    %v2083 = vld [vmem:[#allocation13 + $0x1e0] sm:$0xff]
    %v2084 = vld [vmem:[#allocation13 + $0x1e8] sm:$0xff]
    %v2085 = vld [vmem:[#allocation13 + $0x1f0] sm:$0xff]
    %v2086 = vld [vmem:[#allocation13 + $0x1f8] sm:$0xff]
    %v2087 = vld [vmem:[#allocation13 + $0x200] sm:$0xff]
    %v2088 = vld [vmem:[#allocation13 + $0x208] sm:$0xff]
    %v2089 = vld [vmem:[#allocation13 + $0x210] sm:$0xff]
    %v2090 = vld [vmem:[#allocation13 + $0x218] sm:$0xff]
    %v2091 = vld [vmem:[#allocation13 + $0x220] sm:$0xff]
    %v2092 = vld [vmem:[#allocation13 + $0x228] sm:$0xff]
    %v2093 = vld [vmem:[#allocation13 + $0x230] sm:$0xff]
    %v2094 = vld [vmem:[#allocation13 + $0x238] sm:$0xff]
    %v2095 = vld [vmem:[#allocation13 + $0x240] sm:$0xff]
    %v2096 = vld [vmem:[#allocation13 + $0x248] sm:$0xff]
    %v2097 = vld [vmem:[#allocation13 + $0x250] sm:$0xff]
    %v2098 = vld [vmem:[#allocation13 + $0x258] sm:$0xff]
    %v2099 = vld [vmem:[#allocation13 + $0x260] sm:$0xff]
    %v2100 = vld [vmem:[#allocation13 + $0x268] sm:$0xff]
    %v2101 = vld [vmem:[#allocation13 + $0x270] sm:$0xff]
    %v2102 = vld [vmem:[#allocation13 + $0x278] sm:$0xff]
    %v2103 = vld [vmem:[#allocation13 + $0x280] sm:$0xff]
    %v2104 = vld [vmem:[#allocation13 + $0x288] sm:$0xff]
    %v2105 = vld [vmem:[#allocation13 + $0x290] sm:$0xff]
    %v2106 = vld [vmem:[#allocation13 + $0x298] sm:$0xff]
    %v2107 = vld [vmem:[#allocation13 + $0x2a0] sm:$0xff]
    %v2108 = vld [vmem:[#allocation13 + $0x2a8] sm:$0xff]
    %v2109 = vld [vmem:[#allocation13 + $0x2b0] sm:$0xff]
    %v2110 = vld [vmem:[#allocation13 + $0x2b8] sm:$0xff]
    %v2111 = vld [vmem:[#allocation13 + $0x2c0] sm:$0xff]
    %v2112 = vld [vmem:[#allocation13 + $0x2c8] sm:$0xff]
    %v2113 = vld [vmem:[#allocation13 + $0x2d0] sm:$0xff]
    %v2114 = vld [vmem:[#allocation13 + $0x2d8] sm:$0xff]
    %v2115 = vld [vmem:[#allocation13 + $0x2e0] sm:$0xff]
    %v2116 = vld [vmem:[#allocation13 + $0x2e8] sm:$0xff]
    %v2117 = vld [vmem:[#allocation13 + $0x2f0] sm:$0xff]
    %v2118 = vld [vmem:[#allocation13 + $0x2f8] sm:$0xff]
    %v2167 = vunpack.c.l.b16 %v2071
    %v2168 = vunpack.c.h.b16 %v2071
    %v2169 = vunpack.c.l.b16 %v2072
    %v2170 = vunpack.c.h.b16 %v2072
    %v2171 = vunpack.c.l.b16 %v2073
    %v2172 = vunpack.c.h.b16 %v2073
    %v2173 = vunpack.c.l.b16 %v2074
    %v2174 = vunpack.c.h.b16 %v2074
    %v2175 = vunpack.c.l.b16 %v2075
    %v2176 = vunpack.c.h.b16 %v2075
    %v2177 = vunpack.c.l.b16 %v2076
    %v2178 = vunpack.c.h.b16 %v2076
    %v2179 = vunpack.c.l.b16 %v2077
    %v2180 = vunpack.c.h.b16 %v2077
    %v2181 = vunpack.c.l.b16 %v2078
    %v2182 = vunpack.c.h.b16 %v2078
    %v2183 = vunpack.c.l.b16 %v2079
    %v2184 = vunpack.c.h.b16 %v2079
    %v2185 = vunpack.c.l.b16 %v2080
    %v2186 = vunpack.c.h.b16 %v2080
    %v2187 = vunpack.c.l.b16 %v2081
    %v2188 = vunpack.c.h.b16 %v2081
    %v2189 = vunpack.c.l.b16 %v2082
    %v2190 = vunpack.c.h.b16 %v2082
    %v2191 = vunpack.c.l.b16 %v2083
    %v2192 = vunpack.c.h.b16 %v2083
    %v2193 = vunpack.c.l.b16 %v2084
    %v2194 = vunpack.c.h.b16 %v2084
    %v2195 = vunpack.c.l.b16 %v2085
    %v2196 = vunpack.c.h.b16 %v2085
    %v2197 = vunpack.c.l.b16 %v2086
    %v2198 = vunpack.c.h.b16 %v2086
    %v2199 = vunpack.c.l.b16 %v2087
    %v2200 = vunpack.c.h.b16 %v2087
    %v2201 = vunpack.c.l.b16 %v2088
    %v2202 = vunpack.c.h.b16 %v2088
    %v2203 = vunpack.c.l.b16 %v2089
    %v2204 = vunpack.c.h.b16 %v2089
    %v2205 = vunpack.c.l.b16 %v2090
    %v2206 = vunpack.c.h.b16 %v2090
    %v2207 = vunpack.c.l.b16 %v2091
    %v2208 = vunpack.c.h.b16 %v2091
    %v2209 = vunpack.c.l.b16 %v2092
    %v2210 = vunpack.c.h.b16 %v2092
    %v2211 = vunpack.c.l.b16 %v2093
    %v2212 = vunpack.c.h.b16 %v2093
    %v2213 = vunpack.c.l.b16 %v2094
    %v2214 = vunpack.c.h.b16 %v2094
    %v2215 = vunpack.c.l.b16 %v2095
    %v2216 = vunpack.c.h.b16 %v2095
    %v2217 = vunpack.c.l.b16 %v2096
    %v2218 = vunpack.c.h.b16 %v2096
    %v2219 = vunpack.c.l.b16 %v2097
    %v2220 = vunpack.c.h.b16 %v2097
    %v2221 = vunpack.c.l.b16 %v2098
    %v2222 = vunpack.c.h.b16 %v2098
    %v2223 = vunpack.c.l.b16 %v2099
    %v2224 = vunpack.c.h.b16 %v2099
    %v2225 = vunpack.c.l.b16 %v2100
    %v2226 = vunpack.c.h.b16 %v2100
    %v2227 = vunpack.c.l.b16 %v2101
    %v2228 = vunpack.c.h.b16 %v2101
    %v2229 = vunpack.c.l.b16 %v2102
    %v2230 = vunpack.c.h.b16 %v2102
    %v2231 = vunpack.c.l.b16 %v2103
    %v2232 = vunpack.c.h.b16 %v2103
    %v2233 = vunpack.c.l.b16 %v2104
    %v2234 = vunpack.c.h.b16 %v2104
    %v2235 = vunpack.c.l.b16 %v2105
    %v2236 = vunpack.c.h.b16 %v2105
    %v2237 = vunpack.c.l.b16 %v2106
    %v2238 = vunpack.c.h.b16 %v2106
    %v2239 = vunpack.c.l.b16 %v2107
    %v2240 = vunpack.c.h.b16 %v2107
    %v2241 = vunpack.c.l.b16 %v2108
    %v2242 = vunpack.c.h.b16 %v2108
    %v2243 = vunpack.c.l.b16 %v2109
    %v2244 = vunpack.c.h.b16 %v2109
    %v2245 = vunpack.c.l.b16 %v2110
    %v2246 = vunpack.c.h.b16 %v2110
    %v2247 = vunpack.c.l.b16 %v2111
    %v2248 = vunpack.c.h.b16 %v2111
    %v2249 = vunpack.c.l.b16 %v2112
    %v2250 = vunpack.c.h.b16 %v2112
    %v2251 = vunpack.c.l.b16 %v2113
    %v2252 = vunpack.c.h.b16 %v2113
    %v2253 = vunpack.c.l.b16 %v2114
    %v2254 = vunpack.c.h.b16 %v2114
    %v2255 = vunpack.c.l.b16 %v2115
    %v2256 = vunpack.c.h.b16 %v2115
    %v2257 = vunpack.c.l.b16 %v2116
    %v2258 = vunpack.c.h.b16 %v2116
    %v2259 = vunpack.c.l.b16 %v2117
    %v2260 = vunpack.c.h.b16 %v2117
    %v2261 = vunpack.c.l.b16 %v2118
    %v2262 = vunpack.c.h.b16 %v2118
    %v2263 = vpack.c.b16 %v2173, %v2167
    %v2264 = vpack.c.b16 %v2174, %v2168
    %v2265 = vpack.c.b16 %v2175, %v2169
    %v2266 = vpack.c.b16 %v2176, %v2170
    %v2267 = vpack.c.b16 %v2177, %v2171
    %v2268 = vpack.c.b16 %v2178, %v2172
    %v2269 = vpack.c.b16 %v2185, %v2179
    %v2270 = vpack.c.b16 %v2186, %v2180
    %v2271 = vpack.c.b16 %v2187, %v2181
    %v2272 = vpack.c.b16 %v2188, %v2182
    %v2273 = vpack.c.b16 %v2189, %v2183
    %v2274 = vpack.c.b16 %v2190, %v2184
    %v2275 = vpack.c.b16 %v2197, %v2191
    %v2276 = vpack.c.b16 %v2198, %v2192
    %v2277 = vpack.c.b16 %v2199, %v2193
    %v2278 = vpack.c.b16 %v2200, %v2194
    %v2279 = vpack.c.b16 %v2201, %v2195
    %v2280 = vpack.c.b16 %v2202, %v2196
    %v2281 = vpack.c.b16 %v2209, %v2203
    %v2282 = vpack.c.b16 %v2210, %v2204
    %v2283 = vpack.c.b16 %v2211, %v2205
    %v2284 = vpack.c.b16 %v2212, %v2206
    %v2285 = vpack.c.b16 %v2213, %v2207
    %v2286 = vpack.c.b16 %v2214, %v2208
    %v2287 = vpack.c.b16 %v2221, %v2215
    %v2288 = vpack.c.b16 %v2222, %v2216
    %v2289 = vpack.c.b16 %v2223, %v2217
    %v2290 = vpack.c.b16 %v2224, %v2218
    %v2291 = vpack.c.b16 %v2225, %v2219
    %v2292 = vpack.c.b16 %v2226, %v2220
    %v2293 = vpack.c.b16 %v2233, %v2227
    %v2294 = vpack.c.b16 %v2234, %v2228
    %v2295 = vpack.c.b16 %v2235, %v2229
    %v2296 = vpack.c.b16 %v2236, %v2230
    %v2297 = vpack.c.b16 %v2237, %v2231
    %v2298 = vpack.c.b16 %v2238, %v2232
    %v2299 = vpack.c.b16 %v2245, %v2239
    %v2300 = vpack.c.b16 %v2246, %v2240
    %v2301 = vpack.c.b16 %v2247, %v2241
    %v2302 = vpack.c.b16 %v2248, %v2242
    %v2303 = vpack.c.b16 %v2249, %v2243
    %v2304 = vpack.c.b16 %v2250, %v2244
    %v2305 = vpack.c.b16 %v2257, %v2251
    %v2306 = vpack.c.b16 %v2258, %v2252
    %v2307 = vpack.c.b16 %v2259, %v2253
    %v2308 = vpack.c.b16 %v2260, %v2254
    %v2309 = vpack.c.b16 %v2261, %v2255
    %v2310 = vpack.c.b16 %v2262, %v2256
    %2359 = vmatprep.subr.bf16.mxu0 %v2306
    %2360 = vmatpush1.bf16.msra.mxu0 %v2305
    %2361 = vmatprep.subr.bf16.mxu0 %v2300
    %2362 = vmatpush1.bf16.msra.mxu0 %v2299
    %2363 = vmatprep.subr.bf16.mxu0 %v2294
    %2364 = vmatpush1.bf16.msra.mxu0 %v2293
    %2365 = vmatprep.subr.bf16.mxu0 %v2288
    %2366 = vmatpush1.bf16.msra.mxu0 %v2287
    %2367 = vmatprep.subr.bf16.mxu0 %v2282
    %2368 = vmatpush1.bf16.msra.mxu0 %v2281
    %2369 = vmatprep.subr.bf16.mxu0 %v2276
    %2370 = vmatpush1.bf16.msra.mxu0 %v2275
    %2371 = vmatprep.subr.bf16.mxu0 %v2270
    %2372 = vmatpush1.bf16.msra.mxu0 %v2269
    %2373 = vmatprep.subr.bf16.mxu0 %v2264
    %2374 = vmatpush1.bf16.msra.mxu0 %v2263
    %2375 = vmatprep.subr.bf16.mxu0 0
    %2376 = vmatpush2.bf16.msra.mxu0 0
    %2377 = vmatprep.subr.bf16.mxu0 0
    %2378 = vmatpush2.bf16.msra.mxu0 0
    %2379 = vmatprep.subr.bf16.mxu0 0
    %2380 = vmatpush2.bf16.msra.mxu0 0
    %2381 = vmatprep.subr.bf16.mxu0 0
    %2382 = vmatpush2.bf16.msra.mxu0 0
    %2383 = vmatprep.subr.bf16.mxu0 0
    %2384 = vmatpush2.bf16.msra.mxu0 0
    %2385 = vmatprep.subr.bf16.mxu0 0
    %2386 = vmatpush2.bf16.msra.mxu0 0
    %2387 = vmatprep.subr.bf16.mxu0 0
    %2388 = vmatpush2.bf16.msra.mxu0 0
    %2389 = vmatprep.subr.bf16.mxu0 0
    %2390 = vmatpush2.bf16.msra.mxu0 0
    %2391 = vmatprep.mubr.bf16.mxu0 0
    %2392 = vmatmul.mubr.bf16.gmra.mxu0 %v2021
    %v2393 = vpop.f32.mrf.mxu0
    %v2394 = vadd.f32 0.0, %v2393
    %v2395 = vpop.f32.mrf.mxu0
    %v2396 = vadd.f32 0.0, %v2395
    %v2397 = vpop.f32.mrf.mxu0
    %v2398 = vpop.f32.mrf.mxu0
    %2399 = vdwg.mxu0
    %2400 = vmatprep.subr.bf16.mxu0 %v2308
    %2401 = vmatpush1.bf16.msra.mxu0 %v2307
    %2402 = vmatprep.subr.bf16.mxu0 %v2302
    %2403 = vmatpush1.bf16.msra.mxu0 %v2301
    %2404 = vmatprep.subr.bf16.mxu0 %v2296
    %2405 = vmatpush1.bf16.msra.mxu0 %v2295
    %2406 = vmatprep.subr.bf16.mxu0 %v2290
    %2407 = vmatpush1.bf16.msra.mxu0 %v2289
    %2408 = vmatprep.subr.bf16.mxu0 %v2284
    %2409 = vmatpush1.bf16.msra.mxu0 %v2283
    %2410 = vmatprep.subr.bf16.mxu0 %v2278
    %2411 = vmatpush1.bf16.msra.mxu0 %v2277
    %2412 = vmatprep.subr.bf16.mxu0 %v2272
    %2413 = vmatpush1.bf16.msra.mxu0 %v2271
    %2414 = vmatprep.subr.bf16.mxu0 %v2266
    %2415 = vmatpush1.bf16.msra.mxu0 %v2265
    %2416 = vmatprep.subr.bf16.mxu0 0
    %2417 = vmatpush2.bf16.msra.mxu0 0
    %2418 = vmatprep.subr.bf16.mxu0 0
    %2419 = vmatpush2.bf16.msra.mxu0 0
    %2420 = vmatprep.subr.bf16.mxu0 0
    %2421 = vmatpush2.bf16.msra.mxu0 0
    %2422 = vmatprep.subr.bf16.mxu0 0
    %2423 = vmatpush2.bf16.msra.mxu0 0
    %2424 = vmatprep.subr.bf16.mxu0 0
    %2425 = vmatpush2.bf16.msra.mxu0 0
    %2426 = vmatprep.subr.bf16.mxu0 0
    %2427 = vmatpush2.bf16.msra.mxu0 0
    %2428 = vmatprep.subr.bf16.mxu0 0
    %2429 = vmatpush2.bf16.msra.mxu0 0
    %2430 = vmatprep.subr.bf16.mxu0 0
    %2431 = vmatpush2.bf16.msra.mxu0 0
    %2432 = vmatprep.mubr.bf16.mxu0 0
    %2433 = vmatmul.mubr.bf16.gmra.mxu0 %v2021
    %v2434 = vpop.f32.mrf.mxu0
    %v2435 = vadd.f32 0.0, %v2434
    %v2436 = vpop.f32.mrf.mxu0
    %v2437 = vadd.f32 0.0, %v2436
    %v2438 = vpop.f32.mrf.mxu0
    %v2439 = vpop.f32.mrf.mxu0
    %2440 = vdwg.mxu0
    %2441 = vmatprep.subr.bf16.mxu0 %v2310
    %2442 = vmatpush1.bf16.msra.mxu0 %v2309
    %2443 = vmatprep.subr.bf16.mxu0 %v2304
    %2444 = vmatpush1.bf16.msra.mxu0 %v2303
    %2445 = vmatprep.subr.bf16.mxu0 %v2298
    %2446 = vmatpush1.bf16.msra.mxu0 %v2297
    %2447 = vmatprep.subr.bf16.mxu0 %v2292
    %2448 = vmatpush1.bf16.msra.mxu0 %v2291
    %2449 = vmatprep.subr.bf16.mxu0 %v2286
    %2450 = vmatpush1.bf16.msra.mxu0 %v2285
    %2451 = vmatprep.subr.bf16.mxu0 %v2280
    %2452 = vmatpush1.bf16.msra.mxu0 %v2279
    %2453 = vmatprep.subr.bf16.mxu0 %v2274
    %2454 = vmatpush1.bf16.msra.mxu0 %v2273
    %2455 = vmatprep.subr.bf16.mxu0 %v2268
    %2456 = vmatpush1.bf16.msra.mxu0 %v2267
    %2457 = vmatprep.subr.bf16.mxu0 0
    %2458 = vmatpush2.bf16.msra.mxu0 0
    %2459 = vmatprep.subr.bf16.mxu0 0
    %2460 = vmatpush2.bf16.msra.mxu0 0
    %2461 = vmatprep.subr.bf16.mxu0 0
    %2462 = vmatpush2.bf16.msra.mxu0 0
    %2463 = vmatprep.subr.bf16.mxu0 0
    %2464 = vmatpush2.bf16.msra.mxu0 0
    %2465 = vmatprep.subr.bf16.mxu0 0
    %2466 = vmatpush2.bf16.msra.mxu0 0
    %2467 = vmatprep.subr.bf16.mxu0 0
    %2468 = vmatpush2.bf16.msra.mxu0 0
    %2469 = vmatprep.subr.bf16.mxu0 0
    %2470 = vmatpush2.bf16.msra.mxu0 0
    %2471 = vmatprep.subr.bf16.mxu0 0
    %2472 = vmatpush2.bf16.msra.mxu0 0
    %2473 = vmatprep.mubr.bf16.mxu0 0
    %2474 = vmatmul.mubr.bf16.gmra.mxu0 %v2021
    %v2475 = vpop.f32.mrf.mxu0
    %v2476 = vadd.f32 0.0, %v2475
    %v2477 = vpop.f32.mrf.mxu0
    %v2478 = vadd.f32 0.0, %v2477
    %v2479 = vpop.f32.mrf.mxu0
    %v2480 = vpop.f32.mrf.mxu0
    %2481 = vdwg.mxu0
    %v2530 = vunpack.c.l.b16 %v2023
    %v2531 = vunpack.c.h.b16 %v2023
    %v2532 = vunpack.c.l.b16 %v2024
    %v2533 = vunpack.c.h.b16 %v2024
    %v2534 = vunpack.c.l.b16 %v2025
    %v2535 = vunpack.c.h.b16 %v2025
    %v2536 = vunpack.c.l.b16 %v2026
    %v2537 = vunpack.c.h.b16 %v2026
    %v2538 = vunpack.c.l.b16 %v2027
    %v2539 = vunpack.c.h.b16 %v2027
    %v2540 = vunpack.c.l.b16 %v2028
    %v2541 = vunpack.c.h.b16 %v2028
    %v2542 = vunpack.c.l.b16 %v2029
    %v2543 = vunpack.c.h.b16 %v2029
    %v2544 = vunpack.c.l.b16 %v2030
    %v2545 = vunpack.c.h.b16 %v2030
    %v2546 = vunpack.c.l.b16 %v2031
    %v2547 = vunpack.c.h.b16 %v2031
    %v2548 = vunpack.c.l.b16 %v2032
    %v2549 = vunpack.c.h.b16 %v2032
    %v2550 = vunpack.c.l.b16 %v2033
    %v2551 = vunpack.c.h.b16 %v2033
    %v2552 = vunpack.c.l.b16 %v2034
    %v2553 = vunpack.c.h.b16 %v2034
    %v2554 = vunpack.c.l.b16 %v2035
    %v2555 = vunpack.c.h.b16 %v2035
    %v2556 = vunpack.c.l.b16 %v2036
    %v2557 = vunpack.c.h.b16 %v2036
    %v2558 = vunpack.c.l.b16 %v2037
    %v2559 = vunpack.c.h.b16 %v2037
    %v2560 = vunpack.c.l.b16 %v2038
    %v2561 = vunpack.c.h.b16 %v2038
    %v2562 = vunpack.c.l.b16 %v2039
    %v2563 = vunpack.c.h.b16 %v2039
    %v2564 = vunpack.c.l.b16 %v2040
    %v2565 = vunpack.c.h.b16 %v2040
    %v2566 = vunpack.c.l.b16 %v2041
    %v2567 = vunpack.c.h.b16 %v2041
    %v2568 = vunpack.c.l.b16 %v2042
    %v2569 = vunpack.c.h.b16 %v2042
    %v2570 = vunpack.c.l.b16 %v2043
    %v2571 = vunpack.c.h.b16 %v2043
    %v2572 = vunpack.c.l.b16 %v2044
    %v2573 = vunpack.c.h.b16 %v2044
    %v2574 = vunpack.c.l.b16 %v2045
    %v2575 = vunpack.c.h.b16 %v2045
    %v2576 = vunpack.c.l.b16 %v2046
    %v2577 = vunpack.c.h.b16 %v2046
    %v2578 = vunpack.c.l.b16 %v2047
    %v2579 = vunpack.c.h.b16 %v2047
    %v2580 = vunpack.c.l.b16 %v2048
    %v2581 = vunpack.c.h.b16 %v2048
    %v2582 = vunpack.c.l.b16 %v2049
    %v2583 = vunpack.c.h.b16 %v2049
    %v2584 = vunpack.c.l.b16 %v2050
    %v2585 = vunpack.c.h.b16 %v2050
    %v2586 = vunpack.c.l.b16 %v2051
    %v2587 = vunpack.c.h.b16 %v2051
    %v2588 = vunpack.c.l.b16 %v2052
    %v2589 = vunpack.c.h.b16 %v2052
    %v2590 = vunpack.c.l.b16 %v2053
    %v2591 = vunpack.c.h.b16 %v2053
    %v2592 = vunpack.c.l.b16 %v2054
    %v2593 = vunpack.c.h.b16 %v2054
    %v2594 = vunpack.c.l.b16 %v2055
    %v2595 = vunpack.c.h.b16 %v2055
    %v2596 = vunpack.c.l.b16 %v2056
    %v2597 = vunpack.c.h.b16 %v2056
    %v2598 = vunpack.c.l.b16 %v2057
    %v2599 = vunpack.c.h.b16 %v2057
    %v2600 = vunpack.c.l.b16 %v2058
    %v2601 = vunpack.c.h.b16 %v2058
    %v2602 = vunpack.c.l.b16 %v2059
    %v2603 = vunpack.c.h.b16 %v2059
    %v2604 = vunpack.c.l.b16 %v2060
    %v2605 = vunpack.c.h.b16 %v2060
    %v2606 = vunpack.c.l.b16 %v2061
    %v2607 = vunpack.c.h.b16 %v2061
    %v2608 = vunpack.c.l.b16 %v2062
    %v2609 = vunpack.c.h.b16 %v2062
    %v2610 = vunpack.c.l.b16 %v2063
    %v2611 = vunpack.c.h.b16 %v2063
    %v2612 = vunpack.c.l.b16 %v2064
    %v2613 = vunpack.c.h.b16 %v2064
    %v2614 = vunpack.c.l.b16 %v2065
    %v2615 = vunpack.c.h.b16 %v2065
    %v2616 = vunpack.c.l.b16 %v2066
    %v2617 = vunpack.c.h.b16 %v2066
    %v2618 = vunpack.c.l.b16 %v2067
    %v2619 = vunpack.c.h.b16 %v2067
    %v2620 = vunpack.c.l.b16 %v2068
    %v2621 = vunpack.c.h.b16 %v2068
    %v2622 = vunpack.c.l.b16 %v2069
    %v2623 = vunpack.c.h.b16 %v2069
    %v2624 = vunpack.c.l.b16 %v2070
    %v2625 = vunpack.c.h.b16 %v2070
    %v2626 = vpack.c.b16 %v2536, %v2530
    %v2627 = vpack.c.b16 %v2537, %v2531
    %v2628 = vpack.c.b16 %v2538, %v2532
    %v2629 = vpack.c.b16 %v2539, %v2533
    %v2630 = vpack.c.b16 %v2540, %v2534
    %v2631 = vpack.c.b16 %v2541, %v2535
    %v2632 = vpack.c.b16 %v2548, %v2542
    %v2633 = vpack.c.b16 %v2549, %v2543
    %v2634 = vpack.c.b16 %v2550, %v2544
    %v2635 = vpack.c.b16 %v2551, %v2545
    %v2636 = vpack.c.b16 %v2552, %v2546
    %v2637 = vpack.c.b16 %v2553, %v2547
    %v2638 = vpack.c.b16 %v2560, %v2554
    %v2639 = vpack.c.b16 %v2561, %v2555
    %v2640 = vpack.c.b16 %v2562, %v2556
    %v2641 = vpack.c.b16 %v2563, %v2557
    %v2642 = vpack.c.b16 %v2564, %v2558
    %v2643 = vpack.c.b16 %v2565, %v2559
    %v2644 = vpack.c.b16 %v2572, %v2566
    %v2645 = vpack.c.b16 %v2573, %v2567
    %v2646 = vpack.c.b16 %v2574, %v2568
    %v2647 = vpack.c.b16 %v2575, %v2569
    %v2648 = vpack.c.b16 %v2576, %v2570
    %v2649 = vpack.c.b16 %v2577, %v2571
    %v2650 = vpack.c.b16 %v2584, %v2578
    %v2651 = vpack.c.b16 %v2585, %v2579
    %v2652 = vpack.c.b16 %v2586, %v2580
    %v2653 = vpack.c.b16 %v2587, %v2581
    %v2654 = vpack.c.b16 %v2588, %v2582
    %v2655 = vpack.c.b16 %v2589, %v2583
    %v2656 = vpack.c.b16 %v2596, %v2590
    %v2657 = vpack.c.b16 %v2597, %v2591
    %v2658 = vpack.c.b16 %v2598, %v2592
    %v2659 = vpack.c.b16 %v2599, %v2593
    %v2660 = vpack.c.b16 %v2600, %v2594
    %v2661 = vpack.c.b16 %v2601, %v2595
    %v2662 = vpack.c.b16 %v2608, %v2602
    %v2663 = vpack.c.b16 %v2609, %v2603
    %v2664 = vpack.c.b16 %v2610, %v2604
    %v2665 = vpack.c.b16 %v2611, %v2605
    %v2666 = vpack.c.b16 %v2612, %v2606
    %v2667 = vpack.c.b16 %v2613, %v2607
    %v2668 = vpack.c.b16 %v2620, %v2614
    %v2669 = vpack.c.b16 %v2621, %v2615
    %v2670 = vpack.c.b16 %v2622, %v2616
    %v2671 = vpack.c.b16 %v2623, %v2617
    %v2672 = vpack.c.b16 %v2624, %v2618
    %v2673 = vpack.c.b16 %v2625, %v2619
    %2722 = vmatprep.subr.bf16.mxu0 %v2669
    %2723 = vmatpush1.bf16.msra.mxu0 %v2668
    %2724 = vmatprep.subr.bf16.mxu0 %v2663
    %2725 = vmatpush1.bf16.msra.mxu0 %v2662
    %2726 = vmatprep.subr.bf16.mxu0 %v2657
    %2727 = vmatpush1.bf16.msra.mxu0 %v2656
    %2728 = vmatprep.subr.bf16.mxu0 %v2651
    %2729 = vmatpush1.bf16.msra.mxu0 %v2650
    %2730 = vmatprep.subr.bf16.mxu0 %v2645
    %2731 = vmatpush1.bf16.msra.mxu0 %v2644
    %2732 = vmatprep.subr.bf16.mxu0 %v2639
    %2733 = vmatpush1.bf16.msra.mxu0 %v2638
    %2734 = vmatprep.subr.bf16.mxu0 %v2633
    %2735 = vmatpush1.bf16.msra.mxu0 %v2632
    %2736 = vmatprep.subr.bf16.mxu0 %v2627
    %2737 = vmatpush1.bf16.msra.mxu0 %v2626
    %2738 = vmatprep.subr.bf16.mxu0 0
    %2739 = vmatpush2.bf16.msra.mxu0 0
    %2740 = vmatprep.subr.bf16.mxu0 0
    %2741 = vmatpush2.bf16.msra.mxu0 0
    %2742 = vmatprep.subr.bf16.mxu0 0
    %2743 = vmatpush2.bf16.msra.mxu0 0
    %2744 = vmatprep.subr.bf16.mxu0 0
    %2745 = vmatpush2.bf16.msra.mxu0 0
    %2746 = vmatprep.subr.bf16.mxu0 0
    %2747 = vmatpush2.bf16.msra.mxu0 0
    %2748 = vmatprep.subr.bf16.mxu0 0
    %2749 = vmatpush2.bf16.msra.mxu0 0
    %2750 = vmatprep.subr.bf16.mxu0 0
    %2751 = vmatpush2.bf16.msra.mxu0 0
    %2752 = vmatprep.subr.bf16.mxu0 0
    %2753 = vmatpush2.bf16.msra.mxu0 0
    %2754 = vmatprep.mubr.bf16.mxu0 0
    %2755 = vmatmul.mubr.bf16.gmra.mxu0 %v2020
    %v2756 = vpop.f32.mrf.mxu0
    %v2757 = vadd.f32 %v2394, %v2756
    %v2758 = vpop.f32.mrf.mxu0
    %v2759 = vadd.f32 %v2396, %v2758
    %v2760 = vpop.f32.mrf.mxu0
    %v2761 = vpop.f32.mrf.mxu0
    %2762 = vdwg.mxu0
    %2763 = vmatprep.subr.bf16.mxu0 %v2671
    %2764 = vmatpush1.bf16.msra.mxu0 %v2670
    %2765 = vmatprep.subr.bf16.mxu0 %v2665
    %2766 = vmatpush1.bf16.msra.mxu0 %v2664
    %2767 = vmatprep.subr.bf16.mxu0 %v2659
    %2768 = vmatpush1.bf16.msra.mxu0 %v2658
    %2769 = vmatprep.subr.bf16.mxu0 %v2653
    %2770 = vmatpush1.bf16.msra.mxu0 %v2652
    %2771 = vmatprep.subr.bf16.mxu0 %v2647
    %2772 = vmatpush1.bf16.msra.mxu0 %v2646
    %2773 = vmatprep.subr.bf16.mxu0 %v2641
    %2774 = vmatpush1.bf16.msra.mxu0 %v2640
    %2775 = vmatprep.subr.bf16.mxu0 %v2635
    %2776 = vmatpush1.bf16.msra.mxu0 %v2634
    %2777 = vmatprep.subr.bf16.mxu0 %v2629
    %2778 = vmatpush1.bf16.msra.mxu0 %v2628
    %2779 = vmatprep.subr.bf16.mxu0 0
    %2780 = vmatpush2.bf16.msra.mxu0 0
    %2781 = vmatprep.subr.bf16.mxu0 0
    %2782 = vmatpush2.bf16.msra.mxu0 0
    %2783 = vmatprep.subr.bf16.mxu0 0
    %2784 = vmatpush2.bf16.msra.mxu0 0
    %2785 = vmatprep.subr.bf16.mxu0 0
    %2786 = vmatpush2.bf16.msra.mxu0 0
    %2787 = vmatprep.subr.bf16.mxu0 0
    %2788 = vmatpush2.bf16.msra.mxu0 0
    %2789 = vmatprep.subr.bf16.mxu0 0
    %2790 = vmatpush2.bf16.msra.mxu0 0
    %2791 = vmatprep.subr.bf16.mxu0 0
    %2792 = vmatpush2.bf16.msra.mxu0 0
    %2793 = vmatprep.subr.bf16.mxu0 0
    %2794 = vmatpush2.bf16.msra.mxu0 0
    %2795 = vmatprep.mubr.bf16.mxu0 0
    %2796 = vmatmul.mubr.bf16.gmra.mxu0 %v2020
    %v2797 = vpop.f32.mrf.mxu0
    %v2798 = vadd.f32 %v2435, %v2797
    %v2799 = vpop.f32.mrf.mxu0
    %v2800 = vadd.f32 %v2437, %v2799
    %v2801 = vpop.f32.mrf.mxu0
    %v2802 = vpop.f32.mrf.mxu0
    %2803 = vdwg.mxu0
    %2804 = vmatprep.subr.bf16.mxu0 %v2673
    %2805 = vmatpush1.bf16.msra.mxu0 %v2672
    %2806 = vmatprep.subr.bf16.mxu0 %v2667
    %2807 = vmatpush1.bf16.msra.mxu0 %v2666
    %2808 = vmatprep.subr.bf16.mxu0 %v2661
    %2809 = vmatpush1.bf16.msra.mxu0 %v2660
    %2810 = vmatprep.subr.bf16.mxu0 %v2655
    %2811 = vmatpush1.bf16.msra.mxu0 %v2654
    %2812 = vmatprep.subr.bf16.mxu0 %v2649
    %2813 = vmatpush1.bf16.msra.mxu0 %v2648
    %2814 = vmatprep.subr.bf16.mxu0 %v2643
    %2815 = vmatpush1.bf16.msra.mxu0 %v2642
    %2816 = vmatprep.subr.bf16.mxu0 %v2637
    %2817 = vmatpush1.bf16.msra.mxu0 %v2636
    %2818 = vmatprep.subr.bf16.mxu0 %v2631
    %2819 = vmatpush1.bf16.msra.mxu0 %v2630
    %2820 = vmatprep.subr.bf16.mxu0 0
    %2821 = vmatpush2.bf16.msra.mxu0 0
    %2822 = vmatprep.subr.bf16.mxu0 0
    %2823 = vmatpush2.bf16.msra.mxu0 0
    %2824 = vmatprep.subr.bf16.mxu0 0
    %2825 = vmatpush2.bf16.msra.mxu0 0
    %2826 = vmatprep.subr.bf16.mxu0 0
    %2827 = vmatpush2.bf16.msra.mxu0 0
    %2828 = vmatprep.subr.bf16.mxu0 0
    %2829 = vmatpush2.bf16.msra.mxu0 0
    %2830 = vmatprep.subr.bf16.mxu0 0
    %2831 = vmatpush2.bf16.msra.mxu0 0
    %2832 = vmatprep.subr.bf16.mxu0 0
    %2833 = vmatpush2.bf16.msra.mxu0 0
    %2834 = vmatprep.subr.bf16.mxu0 0
    %2835 = vmatpush2.bf16.msra.mxu0 0
    %2836 = vmatprep.mubr.bf16.mxu0 0
    %2837 = vmatmul.mubr.bf16.gmra.mxu0 %v2020
    %v2838 = vpop.f32.mrf.mxu0
    %v2839 = vadd.f32 %v2476, %v2838
    %v2840 = vpop.f32.mrf.mxu0
    %v2841 = vadd.f32 %v2478, %v2840
    %v2842 = vpop.f32.mrf.mxu0
    %v2843 = vpop.f32.mrf.mxu0
    %2844 = vdwg.mxu0
    %v2845 = vld [vmem:[#allocation13 + $0x300] sm:$0xff]
    %v2846 = vld [vmem:[#allocation13 + $0x308] sm:$0xff]
    %v2847 = vld [vmem:[#allocation13 + $0x310] sm:$0xff]
    %v2848 = vld [vmem:[#allocation13 + $0x318] sm:$0xff]
    %v2849 = vld [vmem:[#allocation13 + $0x320] sm:$0xff]
    %v2850 = vld [vmem:[#allocation13 + $0x328] sm:$0xff]
    %v2851 = vld [vmem:[#allocation13 + $0x330] sm:$0xff]
    %v2852 = vld [vmem:[#allocation13 + $0x338] sm:$0xff]
    %v2853 = vld [vmem:[#allocation13 + $0x340] sm:$0xff]
    %v2854 = vld [vmem:[#allocation13 + $0x348] sm:$0xff]
    %v2855 = vld [vmem:[#allocation13 + $0x350] sm:$0xff]
    %v2856 = vld [vmem:[#allocation13 + $0x358] sm:$0xff]
    %v2857 = vld [vmem:[#allocation13 + $0x360] sm:$0xff]
    %v2858 = vld [vmem:[#allocation13 + $0x368] sm:$0xff]
    %v2859 = vld [vmem:[#allocation13 + $0x370] sm:$0xff]
    %v2860 = vld [vmem:[#allocation13 + $0x378] sm:$0xff]
    %v2861 = vld [vmem:[#allocation13 + $0x380] sm:$0xff]
    %v2862 = vld [vmem:[#allocation13 + $0x388] sm:$0xff]
    %v2863 = vld [vmem:[#allocation13 + $0x390] sm:$0xff]
    %v2864 = vld [vmem:[#allocation13 + $0x398] sm:$0xff]
    %v2865 = vld [vmem:[#allocation13 + $0x3a0] sm:$0xff]
    %v2866 = vld [vmem:[#allocation13 + $0x3a8] sm:$0xff]
    %v2867 = vld [vmem:[#allocation13 + $0x3b0] sm:$0xff]
    %v2868 = vld [vmem:[#allocation13 + $0x3b8] sm:$0xff]
    %v2869 = vld [vmem:[#allocation13 + $0x3c0] sm:$0xff]
    %v2870 = vld [vmem:[#allocation13 + $0x3c8] sm:$0xff]
    %v2871 = vld [vmem:[#allocation13 + $0x3d0] sm:$0xff]
    %v2872 = vld [vmem:[#allocation13 + $0x3d8] sm:$0xff]
    %v2873 = vld [vmem:[#allocation13 + $0x3e0] sm:$0xff]
    %v2874 = vld [vmem:[#allocation13 + $0x3e8] sm:$0xff]
    %v2875 = vld [vmem:[#allocation13 + $0x3f0] sm:$0xff]
    %v2876 = vld [vmem:[#allocation13 + $0x3f8] sm:$0xff]
    %v2877 = vld [vmem:[#allocation13 + $0x400] sm:$0xff]
    %v2878 = vld [vmem:[#allocation13 + $0x408] sm:$0xff]
    %v2879 = vld [vmem:[#allocation13 + $0x410] sm:$0xff]
    %v2880 = vld [vmem:[#allocation13 + $0x418] sm:$0xff]
    %v2881 = vld [vmem:[#allocation13 + $0x420] sm:$0xff]
    %v2882 = vld [vmem:[#allocation13 + $0x428] sm:$0xff]
    %v2883 = vld [vmem:[#allocation13 + $0x430] sm:$0xff]
    %v2884 = vld [vmem:[#allocation13 + $0x438] sm:$0xff]
    %v2885 = vld [vmem:[#allocation13 + $0x440] sm:$0xff]
    %v2886 = vld [vmem:[#allocation13 + $0x448] sm:$0xff]
    %v2887 = vld [vmem:[#allocation13 + $0x450] sm:$0xff]
    %v2888 = vld [vmem:[#allocation13 + $0x458] sm:$0xff]
    %v2889 = vld [vmem:[#allocation13 + $0x460] sm:$0xff]
    %v2890 = vld [vmem:[#allocation13 + $0x468] sm:$0xff]
    %v2891 = vld [vmem:[#allocation13 + $0x470] sm:$0xff]
    %v2892 = vld [vmem:[#allocation13 + $0x478] sm:$0xff]
    %v2941 = vunpack.c.l.b16 %v2845
    %v2942 = vunpack.c.h.b16 %v2845
    %v2943 = vunpack.c.l.b16 %v2846
    %v2944 = vunpack.c.h.b16 %v2846
    %v2945 = vunpack.c.l.b16 %v2847
    %v2946 = vunpack.c.h.b16 %v2847
    %v2947 = vunpack.c.l.b16 %v2848
    %v2948 = vunpack.c.h.b16 %v2848
    %v2949 = vunpack.c.l.b16 %v2849
    %v2950 = vunpack.c.h.b16 %v2849
    %v2951 = vunpack.c.l.b16 %v2850
    %v2952 = vunpack.c.h.b16 %v2850
    %v2953 = vunpack.c.l.b16 %v2851
    %v2954 = vunpack.c.h.b16 %v2851
    %v2955 = vunpack.c.l.b16 %v2852
    %v2956 = vunpack.c.h.b16 %v2852
    %v2957 = vunpack.c.l.b16 %v2853
    %v2958 = vunpack.c.h.b16 %v2853
    %v2959 = vunpack.c.l.b16 %v2854
    %v2960 = vunpack.c.h.b16 %v2854
    %v2961 = vunpack.c.l.b16 %v2855
    %v2962 = vunpack.c.h.b16 %v2855
    %v2963 = vunpack.c.l.b16 %v2856
    %v2964 = vunpack.c.h.b16 %v2856
    %v2965 = vunpack.c.l.b16 %v2857
    %v2966 = vunpack.c.h.b16 %v2857
    %v2967 = vunpack.c.l.b16 %v2858
    %v2968 = vunpack.c.h.b16 %v2858
    %v2969 = vunpack.c.l.b16 %v2859
    %v2970 = vunpack.c.h.b16 %v2859
    %v2971 = vunpack.c.l.b16 %v2860
    %v2972 = vunpack.c.h.b16 %v2860
    %v2973 = vunpack.c.l.b16 %v2861
    %v2974 = vunpack.c.h.b16 %v2861
    %v2975 = vunpack.c.l.b16 %v2862
    %v2976 = vunpack.c.h.b16 %v2862
    %v2977 = vunpack.c.l.b16 %v2863
    %v2978 = vunpack.c.h.b16 %v2863
    %v2979 = vunpack.c.l.b16 %v2864
    %v2980 = vunpack.c.h.b16 %v2864
    %v2981 = vunpack.c.l.b16 %v2865
    %v2982 = vunpack.c.h.b16 %v2865
    %v2983 = vunpack.c.l.b16 %v2866
    %v2984 = vunpack.c.h.b16 %v2866
    %v2985 = vunpack.c.l.b16 %v2867
    %v2986 = vunpack.c.h.b16 %v2867
    %v2987 = vunpack.c.l.b16 %v2868
    %v2988 = vunpack.c.h.b16 %v2868
    %v2989 = vunpack.c.l.b16 %v2869
    %v2990 = vunpack.c.h.b16 %v2869
    %v2991 = vunpack.c.l.b16 %v2870
    %v2992 = vunpack.c.h.b16 %v2870
    %v2993 = vunpack.c.l.b16 %v2871
    %v2994 = vunpack.c.h.b16 %v2871
    %v2995 = vunpack.c.l.b16 %v2872
    %v2996 = vunpack.c.h.b16 %v2872
    %v2997 = vunpack.c.l.b16 %v2873
    %v2998 = vunpack.c.h.b16 %v2873
    %v2999 = vunpack.c.l.b16 %v2874
    %v3000 = vunpack.c.h.b16 %v2874
    %v3001 = vunpack.c.l.b16 %v2875
    %v3002 = vunpack.c.h.b16 %v2875
    %v3003 = vunpack.c.l.b16 %v2876
    %v3004 = vunpack.c.h.b16 %v2876
    %v3005 = vunpack.c.l.b16 %v2877
    %v3006 = vunpack.c.h.b16 %v2877
    %v3007 = vunpack.c.l.b16 %v2878
    %v3008 = vunpack.c.h.b16 %v2878
    %v3009 = vunpack.c.l.b16 %v2879
    %v3010 = vunpack.c.h.b16 %v2879
    %v3011 = vunpack.c.l.b16 %v2880
    %v3012 = vunpack.c.h.b16 %v2880
    %v3013 = vunpack.c.l.b16 %v2881
    %v3014 = vunpack.c.h.b16 %v2881
    %v3015 = vunpack.c.l.b16 %v2882
    %v3016 = vunpack.c.h.b16 %v2882
    %v3017 = vunpack.c.l.b16 %v2883
    %v3018 = vunpack.c.h.b16 %v2883
    %v3019 = vunpack.c.l.b16 %v2884
    %v3020 = vunpack.c.h.b16 %v2884
    %v3021 = vunpack.c.l.b16 %v2885
    %v3022 = vunpack.c.h.b16 %v2885
    %v3023 = vunpack.c.l.b16 %v2886
    %v3024 = vunpack.c.h.b16 %v2886
    %v3025 = vunpack.c.l.b16 %v2887
    %v3026 = vunpack.c.h.b16 %v2887
    %v3027 = vunpack.c.l.b16 %v2888
    %v3028 = vunpack.c.h.b16 %v2888
    %v3029 = vunpack.c.l.b16 %v2889
    %v3030 = vunpack.c.h.b16 %v2889
    %v3031 = vunpack.c.l.b16 %v2890
    %v3032 = vunpack.c.h.b16 %v2890
    %v3033 = vunpack.c.l.b16 %v2891
    %v3034 = vunpack.c.h.b16 %v2891
    %v3035 = vunpack.c.l.b16 %v2892
    %v3036 = vunpack.c.h.b16 %v2892
    %v3037 = vpack.c.b16 %v2947, %v2941
    %v3038 = vpack.c.b16 %v2948, %v2942
    %v3039 = vpack.c.b16 %v2949, %v2943
    %v3040 = vpack.c.b16 %v2950, %v2944
    %v3041 = vpack.c.b16 %v2951, %v2945
    %v3042 = vpack.c.b16 %v2952, %v2946
    %v3043 = vpack.c.b16 %v2959, %v2953
    %v3044 = vpack.c.b16 %v2960, %v2954
    %v3045 = vpack.c.b16 %v2961, %v2955
    %v3046 = vpack.c.b16 %v2962, %v2956
    %v3047 = vpack.c.b16 %v2963, %v2957
    %v3048 = vpack.c.b16 %v2964, %v2958
    %v3049 = vpack.c.b16 %v2971, %v2965
    %v3050 = vpack.c.b16 %v2972, %v2966
    %v3051 = vpack.c.b16 %v2973, %v2967
    %v3052 = vpack.c.b16 %v2974, %v2968
    %v3053 = vpack.c.b16 %v2975, %v2969
    %v3054 = vpack.c.b16 %v2976, %v2970
    %v3055 = vpack.c.b16 %v2983, %v2977
    %v3056 = vpack.c.b16 %v2984, %v2978
    %v3057 = vpack.c.b16 %v2985, %v2979
    %v3058 = vpack.c.b16 %v2986, %v2980
    %v3059 = vpack.c.b16 %v2987, %v2981
    %v3060 = vpack.c.b16 %v2988, %v2982
    %v3061 = vpack.c.b16 %v2995, %v2989
    %v3062 = vpack.c.b16 %v2996, %v2990
    %v3063 = vpack.c.b16 %v2997, %v2991
    %v3064 = vpack.c.b16 %v2998, %v2992
    %v3065 = vpack.c.b16 %v2999, %v2993
    %v3066 = vpack.c.b16 %v3000, %v2994
    %v3067 = vpack.c.b16 %v3007, %v3001
    %v3068 = vpack.c.b16 %v3008, %v3002
    %v3069 = vpack.c.b16 %v3009, %v3003
    %v3070 = vpack.c.b16 %v3010, %v3004
    %v3071 = vpack.c.b16 %v3011, %v3005
    %v3072 = vpack.c.b16 %v3012, %v3006
    %v3073 = vpack.c.b16 %v3019, %v3013
    %v3074 = vpack.c.b16 %v3020, %v3014
    %v3075 = vpack.c.b16 %v3021, %v3015
    %v3076 = vpack.c.b16 %v3022, %v3016
    %v3077 = vpack.c.b16 %v3023, %v3017
    %v3078 = vpack.c.b16 %v3024, %v3018
    %v3079 = vpack.c.b16 %v3031, %v3025
    %v3080 = vpack.c.b16 %v3032, %v3026
    %v3081 = vpack.c.b16 %v3033, %v3027
    %v3082 = vpack.c.b16 %v3034, %v3028
    %v3083 = vpack.c.b16 %v3035, %v3029
    %v3084 = vpack.c.b16 %v3036, %v3030
    %3133 = vmatprep.subr.bf16.mxu0 %v3080
    %3134 = vmatpush1.bf16.msra.mxu0 %v3079
    %3135 = vmatprep.subr.bf16.mxu0 %v3074
    %3136 = vmatpush1.bf16.msra.mxu0 %v3073
    %3137 = vmatprep.subr.bf16.mxu0 %v3068
    %3138 = vmatpush1.bf16.msra.mxu0 %v3067
    %3139 = vmatprep.subr.bf16.mxu0 %v3062
    %3140 = vmatpush1.bf16.msra.mxu0 %v3061
    %3141 = vmatprep.subr.bf16.mxu0 %v3056
    %3142 = vmatpush1.bf16.msra.mxu0 %v3055
    %3143 = vmatprep.subr.bf16.mxu0 %v3050
    %3144 = vmatpush1.bf16.msra.mxu0 %v3049
    %3145 = vmatprep.subr.bf16.mxu0 %v3044
    %3146 = vmatpush1.bf16.msra.mxu0 %v3043
    %3147 = vmatprep.subr.bf16.mxu0 %v3038
    %3148 = vmatpush1.bf16.msra.mxu0 %v3037
    %3149 = vmatprep.subr.bf16.mxu0 0
    %3150 = vmatpush2.bf16.msra.mxu0 0
    %3151 = vmatprep.subr.bf16.mxu0 0
    %3152 = vmatpush2.bf16.msra.mxu0 0
    %3153 = vmatprep.subr.bf16.mxu0 0
    %3154 = vmatpush2.bf16.msra.mxu0 0
    %3155 = vmatprep.subr.bf16.mxu0 0
    %3156 = vmatpush2.bf16.msra.mxu0 0
    %3157 = vmatprep.subr.bf16.mxu0 0
    %3158 = vmatpush2.bf16.msra.mxu0 0
    %3159 = vmatprep.subr.bf16.mxu0 0
    %3160 = vmatpush2.bf16.msra.mxu0 0
    %3161 = vmatprep.subr.bf16.mxu0 0
    %3162 = vmatpush2.bf16.msra.mxu0 0
    %3163 = vmatprep.subr.bf16.mxu0 0
    %3164 = vmatpush2.bf16.msra.mxu0 0
    %3165 = vmatprep.mubr.bf16.mxu0 0
    %3166 = vmatmul.mubr.bf16.gmra.mxu0 %v2022
    %v3167 = vpop.f32.mrf.mxu0
    %v3168 = vadd.f32 0.0, %v3167
    %v3169 = vpop.f32.mrf.mxu0
    %v3170 = vadd.f32 0.0, %v3169
    %v3171 = vpop.f32.mrf.mxu0
    %v3172 = vpop.f32.mrf.mxu0
    %3173 = vdwg.mxu0
    %3174 = vmatprep.subr.bf16.mxu0 %v3082
    %3175 = vmatpush1.bf16.msra.mxu0 %v3081
    %3176 = vmatprep.subr.bf16.mxu0 %v3076
    %3177 = vmatpush1.bf16.msra.mxu0 %v3075
    %3178 = vmatprep.subr.bf16.mxu0 %v3070
    %3179 = vmatpush1.bf16.msra.mxu0 %v3069
    %3180 = vmatprep.subr.bf16.mxu0 %v3064
    %3181 = vmatpush1.bf16.msra.mxu0 %v3063
    %3182 = vmatprep.subr.bf16.mxu0 %v3058
    %3183 = vmatpush1.bf16.msra.mxu0 %v3057
    %3184 = vmatprep.subr.bf16.mxu0 %v3052
    %3185 = vmatpush1.bf16.msra.mxu0 %v3051
    %3186 = vmatprep.subr.bf16.mxu0 %v3046
    %3187 = vmatpush1.bf16.msra.mxu0 %v3045
    %3188 = vmatprep.subr.bf16.mxu0 %v3040
    %3189 = vmatpush1.bf16.msra.mxu0 %v3039
    %3190 = vmatprep.subr.bf16.mxu0 0
    %3191 = vmatpush2.bf16.msra.mxu0 0
    %3192 = vmatprep.subr.bf16.mxu0 0
    %3193 = vmatpush2.bf16.msra.mxu0 0
    %3194 = vmatprep.subr.bf16.mxu0 0
    %3195 = vmatpush2.bf16.msra.mxu0 0
    %3196 = vmatprep.subr.bf16.mxu0 0
    %3197 = vmatpush2.bf16.msra.mxu0 0
    %3198 = vmatprep.subr.bf16.mxu0 0
    %3199 = vmatpush2.bf16.msra.mxu0 0
    %3200 = vmatprep.subr.bf16.mxu0 0
    %3201 = vmatpush2.bf16.msra.mxu0 0
    %3202 = vmatprep.subr.bf16.mxu0 0
    %3203 = vmatpush2.bf16.msra.mxu0 0
    %3204 = vmatprep.subr.bf16.mxu0 0
    %3205 = vmatpush2.bf16.msra.mxu0 0
    %3206 = vmatprep.mubr.bf16.mxu0 0
    %3207 = vmatmul.mubr.bf16.gmra.mxu0 %v2022
    %v3208 = vpop.f32.mrf.mxu0
    %v3209 = vadd.f32 0.0, %v3208
    %v3210 = vpop.f32.mrf.mxu0
    %v3211 = vadd.f32 0.0, %v3210
    %v3212 = vpop.f32.mrf.mxu0
    %v3213 = vpop.f32.mrf.mxu0
    %3214 = vdwg.mxu0
    %3215 = vmatprep.subr.bf16.mxu0 %v3084
    %3216 = vmatpush1.bf16.msra.mxu0 %v3083
    %3217 = vmatprep.subr.bf16.mxu0 %v3078
    %3218 = vmatpush1.bf16.msra.mxu0 %v3077
    %3219 = vmatprep.subr.bf16.mxu0 %v3072
    %3220 = vmatpush1.bf16.msra.mxu0 %v3071
    %3221 = vmatprep.subr.bf16.mxu0 %v3066
    %3222 = vmatpush1.bf16.msra.mxu0 %v3065
    %3223 = vmatprep.subr.bf16.mxu0 %v3060
    %3224 = vmatpush1.bf16.msra.mxu0 %v3059
    %3225 = vmatprep.subr.bf16.mxu0 %v3054
    %3226 = vmatpush1.bf16.msra.mxu0 %v3053
    %3227 = vmatprep.subr.bf16.mxu0 %v3048
    %3228 = vmatpush1.bf16.msra.mxu0 %v3047
    %3229 = vmatprep.subr.bf16.mxu0 %v3042
    %3230 = vmatpush1.bf16.msra.mxu0 %v3041
    %3231 = vmatprep.subr.bf16.mxu0 0
    %3232 = vmatpush2.bf16.msra.mxu0 0
    %3233 = vmatprep.subr.bf16.mxu0 0
    %3234 = vmatpush2.bf16.msra.mxu0 0
    %3235 = vmatprep.subr.bf16.mxu0 0
    %3236 = vmatpush2.bf16.msra.mxu0 0
    %3237 = vmatprep.subr.bf16.mxu0 0
    %3238 = vmatpush2.bf16.msra.mxu0 0
    %3239 = vmatprep.subr.bf16.mxu0 0
    %3240 = vmatpush2.bf16.msra.mxu0 0
    %3241 = vmatprep.subr.bf16.mxu0 0
    %3242 = vmatpush2.bf16.msra.mxu0 0
    %3243 = vmatprep.subr.bf16.mxu0 0
    %3244 = vmatpush2.bf16.msra.mxu0 0
    %3245 = vmatprep.subr.bf16.mxu0 0
    %3246 = vmatpush2.bf16.msra.mxu0 0
    %3247 = vmatprep.mubr.bf16.mxu0 0
    %3248 = vmatmul.mubr.bf16.gmra.mxu0 %v2022
    %v3249 = vpop.f32.mrf.mxu0
    %v3250 = vadd.f32 0.0, %v3249
    %v3251 = vpop.f32.mrf.mxu0
    %v3252 = vadd.f32 0.0, %v3251
    %v3253 = vpop.f32.mrf.mxu0
    %v3254 = vpop.f32.mrf.mxu0
    %3255 = vdwg.mxu0
    %v3256 = vadd.f32 %v2757, %v3168
    %v3257 = vadd.f32 %v2759, %v3170
    %v3258 = vadd.f32 %v2798, %v3209
    %v3259 = vadd.f32 %v2800, %v3211
    %v3260 = vadd.f32 %v2839, %v3250
    %v3261 = vadd.f32 %v2841, %v3252
    %v3262 = vld [vmem:[%s10] sm:$0x3f]
    %v3264 = vlaneseq
    %v3265 = vshrl.u32 %v3264, 7
    %v3266 = vsub.s32 0, %v3265
    %v3267 = vrot.slane %v3262, %v3266
    %v3268 = vlaneseq
    %v3269 = vshrl.u32 %v3268, 7
    %v3270 = vsub.s32 1, %v3269
    %v3271 = vrot.slane %v3262, %v3270
    %v3272 = vlaneseq
    %v3273 = vshrl.u32 %v3272, 7
    %v3274 = vsub.s32 2, %v3273
    %v3275 = vrot.slane %v3262, %v3274
    %v3276 = vlaneseq
    %v3277 = vshrl.u32 %v3276, 7
    %v3278 = vsub.s32 3, %v3277
    %v3279 = vrot.slane %v3262, %v3278
    %v3280 = vlaneseq
    %v3281 = vshrl.u32 %v3280, 7
    %v3282 = vsub.s32 4, %v3281
    %v3283 = vrot.slane %v3262, %v3282
    %v3284 = vlaneseq
    %v3285 = vshrl.u32 %v3284, 7
    %v3286 = vsub.s32 5, %v3285
    %v3287 = vrot.slane %v3262, %v3286
    %v3294 = vadd.f32 %v3256, %v3267
    %v3295 = vadd.f32 %v3257, %v3271
    %v3296 = vadd.f32 %v3258, %v3275
    %v3297 = vadd.f32 %v3259, %v3279
    %v3298 = vadd.f32 %v3260, %v3283
    %v3299 = vadd.f32 %v3261, %v3287
    %v3300 = vmax.f32 %v3294, 0.0
    %v3301 = vmax.f32 %v3295, 0.0
    %v3302 = vmax.f32 %v3296, 0.0
    %v3303 = vmax.f32 %v3297, 0.0
    %v3304 = vmax.f32 %v3298, 0.0
    %v3305 = vmax.f32 %v3299, 0.0
    %v3306 = vpack.c.bf16 %v3300, %v3300
    %v3307 = vpack.c.bf16 %v3301, %v3301
    %v3308 = vpack.c.bf16 %v3302, %v3302
    %v3309 = vpack.c.bf16 %v3303, %v3303
    %v3310 = vpack.c.bf16 %v3304, %v3304
    %v3311 = vpack.c.bf16 %v3305, %v3305
    %v3312 = vld [vmem:[#allocation14] sm:$0xff]
    %v3313 = vld [vmem:[#allocation14 + $0x8] sm:$0xff]
    %v3314 = vld [vmem:[#allocation14 + $0x10] sm:$0xff]
    %v3315 = vld [vmem:[#allocation14 + $0x18] sm:$0xff]
    %v3316 = vld [vmem:[#allocation14 + $0x20] sm:$0xff]
    %v3317 = vld [vmem:[#allocation14 + $0x28] sm:$0xff]
    %v3318 = vld [vmem:[#allocation14 + $0x30] sm:$0xff]
    %v3319 = vld [vmem:[#allocation14 + $0x38] sm:$0xff]
    %v3320 = vld [vmem:[#allocation14 + $0x40] sm:$0xff]
    %v3321 = vld [vmem:[#allocation14 + $0x48] sm:$0xff]
    %v3322 = vld [vmem:[#allocation14 + $0x50] sm:$0xff]
    %v3323 = vld [vmem:[#allocation14 + $0x58] sm:$0xff]
    %v3324 = vld [vmem:[#allocation14 + $0x60] sm:$0xff]
    %v3325 = vld [vmem:[#allocation14 + $0x68] sm:$0xff]
    %v3326 = vld [vmem:[#allocation14 + $0x70] sm:$0xff]
    %v3327 = vld [vmem:[#allocation14 + $0x78] sm:$0xff]
    %v3328 = vld [vmem:[#allocation14 + $0x80] sm:$0xff]
    %v3329 = vld [vmem:[#allocation14 + $0x88] sm:$0xff]
    %v3330 = vld [vmem:[#allocation14 + $0x90] sm:$0xff]
    %v3331 = vld [vmem:[#allocation14 + $0x98] sm:$0xff]
    %v3332 = vld [vmem:[#allocation14 + $0xa0] sm:$0xff]
    %v3333 = vld [vmem:[#allocation14 + $0xa8] sm:$0xff]
    %v3334 = vld [vmem:[#allocation14 + $0xb0] sm:$0xff]
    %v3335 = vld [vmem:[#allocation14 + $0xb8] sm:$0xff]
    %v3336 = vld [vmem:[#allocation14 + $0xc0] sm:$0xff]
    %v3337 = vld [vmem:[#allocation14 + $0xc8] sm:$0xff]
    %v3338 = vld [vmem:[#allocation14 + $0xd0] sm:$0xff]
    %v3339 = vld [vmem:[#allocation14 + $0xd8] sm:$0xff]
    %v3340 = vld [vmem:[#allocation14 + $0xe0] sm:$0xff]
    %v3341 = vld [vmem:[#allocation14 + $0xe8] sm:$0xff]
    %v3342 = vld [vmem:[#allocation14 + $0xf0] sm:$0xff]
    %v3343 = vld [vmem:[#allocation14 + $0xf8] sm:$0xff]
    %v3344 = vld [vmem:[#allocation14 + $0x100] sm:$0xff]
    %v3345 = vld [vmem:[#allocation14 + $0x108] sm:$0xff]
    %v3346 = vld [vmem:[#allocation14 + $0x110] sm:$0xff]
    %v3347 = vld [vmem:[#allocation14 + $0x118] sm:$0xff]
    %v3348 = vld [vmem:[#allocation14 + $0x120] sm:$0xff]
    %v3349 = vld [vmem:[#allocation14 + $0x128] sm:$0xff]
    %v3350 = vld [vmem:[#allocation14 + $0x130] sm:$0xff]
    %v3351 = vld [vmem:[#allocation14 + $0x138] sm:$0xff]
    %v3352 = vld [vmem:[#allocation14 + $0x140] sm:$0xff]
    %v3353 = vld [vmem:[#allocation14 + $0x148] sm:$0xff]
    %v3354 = vld [vmem:[#allocation14 + $0x150] sm:$0xff]
    %v3355 = vld [vmem:[#allocation14 + $0x158] sm:$0xff]
    %v3356 = vld [vmem:[#allocation14 + $0x160] sm:$0xff]
    %v3357 = vld [vmem:[#allocation14 + $0x168] sm:$0xff]
    %v3358 = vld [vmem:[#allocation14 + $0x170] sm:$0xff]
    %v3359 = vld [vmem:[#allocation14 + $0x178] sm:$0xff]
    %v3360 = vld [vmem:[#allocation14 + $0x180] sm:$0xff]
    %v3361 = vld [vmem:[#allocation14 + $0x188] sm:$0xff]
    %v3362 = vld [vmem:[#allocation14 + $0x190] sm:$0xff]
    %v3363 = vld [vmem:[#allocation14 + $0x198] sm:$0xff]
    %v3364 = vld [vmem:[#allocation14 + $0x1a0] sm:$0xff]
    %v3365 = vld [vmem:[#allocation14 + $0x1a8] sm:$0xff]
    %v3366 = vld [vmem:[#allocation14 + $0x1b0] sm:$0xff]
    %v3367 = vld [vmem:[#allocation14 + $0x1b8] sm:$0xff]
    %v3368 = vld [vmem:[#allocation14 + $0x1c0] sm:$0xff]
    %v3369 = vld [vmem:[#allocation14 + $0x1c8] sm:$0xff]
    %v3370 = vld [vmem:[#allocation14 + $0x1d0] sm:$0xff]
    %v3371 = vld [vmem:[#allocation14 + $0x1d8] sm:$0xff]
    %v3372 = vld [vmem:[#allocation14 + $0x1e0] sm:$0xff]
    %v3373 = vld [vmem:[#allocation14 + $0x1e8] sm:$0xff]
    %v3374 = vld [vmem:[#allocation14 + $0x1f0] sm:$0xff]
    %v3375 = vld [vmem:[#allocation14 + $0x1f8] sm:$0xff]
    %v3376 = vld [vmem:[#allocation14 + $0x200] sm:$0xff]
    %v3377 = vld [vmem:[#allocation14 + $0x208] sm:$0xff]
    %v3378 = vld [vmem:[#allocation14 + $0x210] sm:$0xff]
    %v3379 = vld [vmem:[#allocation14 + $0x218] sm:$0xff]
    %v3380 = vld [vmem:[#allocation14 + $0x220] sm:$0xff]
    %v3381 = vld [vmem:[#allocation14 + $0x228] sm:$0xff]
    %v3382 = vld [vmem:[#allocation14 + $0x230] sm:$0xff]
    %v3383 = vld [vmem:[#allocation14 + $0x238] sm:$0xff]
    %v3384 = vld [vmem:[#allocation14 + $0x240] sm:$0xff]
    %v3385 = vld [vmem:[#allocation14 + $0x248] sm:$0xff]
    %v3386 = vld [vmem:[#allocation14 + $0x250] sm:$0xff]
    %v3387 = vld [vmem:[#allocation14 + $0x258] sm:$0xff]
    %v3388 = vld [vmem:[#allocation14 + $0x260] sm:$0xff]
    %v3389 = vld [vmem:[#allocation14 + $0x268] sm:$0xff]
    %v3390 = vld [vmem:[#allocation14 + $0x270] sm:$0xff]
    %v3391 = vld [vmem:[#allocation14 + $0x278] sm:$0xff]
    %v3392 = vld [vmem:[#allocation14 + $0x280] sm:$0xff]
    %v3393 = vld [vmem:[#allocation14 + $0x288] sm:$0xff]
    %v3394 = vld [vmem:[#allocation14 + $0x290] sm:$0xff]
    %v3395 = vld [vmem:[#allocation14 + $0x298] sm:$0xff]
    %v3396 = vld [vmem:[#allocation14 + $0x2a0] sm:$0xff]
    %v3397 = vld [vmem:[#allocation14 + $0x2a8] sm:$0xff]
    %v3398 = vld [vmem:[#allocation14 + $0x2b0] sm:$0xff]
    %v3399 = vld [vmem:[#allocation14 + $0x2b8] sm:$0xff]
    %v3400 = vld [vmem:[#allocation14 + $0x2c0] sm:$0xff]
    %v3401 = vld [vmem:[#allocation14 + $0x2c8] sm:$0xff]
    %v3402 = vld [vmem:[#allocation14 + $0x2d0] sm:$0xff]
    %v3403 = vld [vmem:[#allocation14 + $0x2d8] sm:$0xff]
    %v3404 = vld [vmem:[#allocation14 + $0x2e0] sm:$0xff]
    %v3405 = vld [vmem:[#allocation14 + $0x2e8] sm:$0xff]
    %v3406 = vld [vmem:[#allocation14 + $0x2f0] sm:$0xff]
    %v3407 = vld [vmem:[#allocation14 + $0x2f8] sm:$0xff]
    %v3408 = vld [vmem:[#allocation14 + $0x300] sm:$0xff]
    %v3409 = vld [vmem:[#allocation14 + $0x308] sm:$0xff]
    %v3410 = vld [vmem:[#allocation14 + $0x310] sm:$0xff]
    %v3411 = vld [vmem:[#allocation14 + $0x318] sm:$0xff]
    %v3412 = vld [vmem:[#allocation14 + $0x320] sm:$0xff]
    %v3413 = vld [vmem:[#allocation14 + $0x328] sm:$0xff]
    %v3414 = vld [vmem:[#allocation14 + $0x330] sm:$0xff]
    %v3415 = vld [vmem:[#allocation14 + $0x338] sm:$0xff]
    %v3416 = vld [vmem:[#allocation14 + $0x340] sm:$0xff]
    %v3417 = vld [vmem:[#allocation14 + $0x348] sm:$0xff]
    %v3418 = vld [vmem:[#allocation14 + $0x350] sm:$0xff]
    %v3419 = vld [vmem:[#allocation14 + $0x358] sm:$0xff]
    %v3420 = vld [vmem:[#allocation14 + $0x360] sm:$0xff]
    %v3421 = vld [vmem:[#allocation14 + $0x368] sm:$0xff]
    %v3422 = vld [vmem:[#allocation14 + $0x370] sm:$0xff]
    %v3423 = vld [vmem:[#allocation14 + $0x378] sm:$0xff]
    %v3424 = vld [vmem:[#allocation14 + $0x380] sm:$0xff]
    %v3425 = vld [vmem:[#allocation14 + $0x388] sm:$0xff]
    %v3426 = vld [vmem:[#allocation14 + $0x390] sm:$0xff]
    %v3427 = vld [vmem:[#allocation14 + $0x398] sm:$0xff]
    %v3428 = vld [vmem:[#allocation14 + $0x3a0] sm:$0xff]
    %v3429 = vld [vmem:[#allocation14 + $0x3a8] sm:$0xff]
    %v3430 = vld [vmem:[#allocation14 + $0x3b0] sm:$0xff]
    %v3431 = vld [vmem:[#allocation14 + $0x3b8] sm:$0xff]
    %v3432 = vld [vmem:[#allocation14 + $0x3c0] sm:$0xff]
    %v3433 = vld [vmem:[#allocation14 + $0x3c8] sm:$0xff]
    %v3434 = vld [vmem:[#allocation14 + $0x3d0] sm:$0xff]
    %v3435 = vld [vmem:[#allocation14 + $0x3d8] sm:$0xff]
    %v3436 = vld [vmem:[#allocation14 + $0x3e0] sm:$0xff]
    %v3437 = vld [vmem:[#allocation14 + $0x3e8] sm:$0xff]
    %v3438 = vld [vmem:[#allocation14 + $0x3f0] sm:$0xff]
    %v3439 = vld [vmem:[#allocation14 + $0x3f8] sm:$0xff]
    %v3440 = vld [vmem:[#allocation14 + $0x400] sm:$0xff]
    %v3441 = vld [vmem:[#allocation14 + $0x408] sm:$0xff]
    %v3442 = vld [vmem:[#allocation14 + $0x410] sm:$0xff]
    %v3443 = vld [vmem:[#allocation14 + $0x418] sm:$0xff]
    %v3444 = vld [vmem:[#allocation14 + $0x420] sm:$0xff]
    %v3445 = vld [vmem:[#allocation14 + $0x428] sm:$0xff]
    %v3446 = vld [vmem:[#allocation14 + $0x430] sm:$0xff]
    %v3447 = vld [vmem:[#allocation14 + $0x438] sm:$0xff]
    %v3448 = vld [vmem:[#allocation14 + $0x440] sm:$0xff]
    %v3449 = vld [vmem:[#allocation14 + $0x448] sm:$0xff]
    %v3450 = vld [vmem:[#allocation14 + $0x450] sm:$0xff]
    %v3451 = vld [vmem:[#allocation14 + $0x458] sm:$0xff]
    %v3452 = vld [vmem:[#allocation14 + $0x460] sm:$0xff]
    %v3453 = vld [vmem:[#allocation14 + $0x468] sm:$0xff]
    %v3454 = vld [vmem:[#allocation14 + $0x470] sm:$0xff]
    %v3455 = vld [vmem:[#allocation14 + $0x478] sm:$0xff]
    %v3456 = vld [vmem:[#allocation14 + $0x480] sm:$0xff]
    %v3457 = vld [vmem:[#allocation14 + $0x488] sm:$0xff]
    %v3458 = vld [vmem:[#allocation14 + $0x490] sm:$0xff]
    %v3459 = vld [vmem:[#allocation14 + $0x498] sm:$0xff]
    %v3460 = vld [vmem:[#allocation14 + $0x4a0] sm:$0xff]
    %v3461 = vld [vmem:[#allocation14 + $0x4a8] sm:$0xff]
    %v3462 = vld [vmem:[#allocation14 + $0x4b0] sm:$0xff]
    %v3463 = vld [vmem:[#allocation14 + $0x4b8] sm:$0xff]
    %v3464 = vld [vmem:[#allocation14 + $0x4c0] sm:$0xff]
    %v3465 = vld [vmem:[#allocation14 + $0x4c8] sm:$0xff]
    %v3466 = vld [vmem:[#allocation14 + $0x4d0] sm:$0xff]
    %v3467 = vld [vmem:[#allocation14 + $0x4d8] sm:$0xff]
    %v3468 = vld [vmem:[#allocation14 + $0x4e0] sm:$0xff]
    %v3469 = vld [vmem:[#allocation14 + $0x4e8] sm:$0xff]
    %v3470 = vld [vmem:[#allocation14 + $0x4f0] sm:$0xff]
    %v3471 = vld [vmem:[#allocation14 + $0x4f8] sm:$0xff]
    %v3472 = vld [vmem:[#allocation14 + $0x500] sm:$0xff]
    %v3473 = vld [vmem:[#allocation14 + $0x508] sm:$0xff]
    %v3474 = vld [vmem:[#allocation14 + $0x510] sm:$0xff]
    %v3475 = vld [vmem:[#allocation14 + $0x518] sm:$0xff]
    %v3476 = vld [vmem:[#allocation14 + $0x520] sm:$0xff]
    %v3477 = vld [vmem:[#allocation14 + $0x528] sm:$0xff]
    %v3478 = vld [vmem:[#allocation14 + $0x530] sm:$0xff]
    %v3479 = vld [vmem:[#allocation14 + $0x538] sm:$0xff]
    %v3480 = vld [vmem:[#allocation14 + $0x540] sm:$0xff]
    %v3481 = vld [vmem:[#allocation14 + $0x548] sm:$0xff]
    %v3482 = vld [vmem:[#allocation14 + $0x550] sm:$0xff]
    %v3483 = vld [vmem:[#allocation14 + $0x558] sm:$0xff]
    %v3484 = vld [vmem:[#allocation14 + $0x560] sm:$0xff]
    %v3485 = vld [vmem:[#allocation14 + $0x568] sm:$0xff]
    %v3486 = vld [vmem:[#allocation14 + $0x570] sm:$0xff]
    %v3487 = vld [vmem:[#allocation14 + $0x578] sm:$0xff]
    %v3488 = vld [vmem:[#allocation14 + $0x580] sm:$0xff]
    %v3489 = vld [vmem:[#allocation14 + $0x588] sm:$0xff]
    %v3490 = vld [vmem:[#allocation14 + $0x590] sm:$0xff]
    %v3491 = vld [vmem:[#allocation14 + $0x598] sm:$0xff]
    %v3492 = vld [vmem:[#allocation14 + $0x5a0] sm:$0xff]
    %v3493 = vld [vmem:[#allocation14 + $0x5a8] sm:$0xff]
    %v3494 = vld [vmem:[#allocation14 + $0x5b0] sm:$0xff]
    %v3495 = vld [vmem:[#allocation14 + $0x5b8] sm:$0xff]
    %v3496 = vld [vmem:[#allocation14 + $0x5c0] sm:$0xff]
    %v3497 = vld [vmem:[#allocation14 + $0x5c8] sm:$0xff]
    %v3498 = vld [vmem:[#allocation14 + $0x5d0] sm:$0xff]
    %v3499 = vld [vmem:[#allocation14 + $0x5d8] sm:$0xff]
    %v3500 = vld [vmem:[#allocation14 + $0x5e0] sm:$0xff]
    %v3501 = vld [vmem:[#allocation14 + $0x5e8] sm:$0xff]
    %v3502 = vld [vmem:[#allocation14 + $0x5f0] sm:$0xff]
    %v3503 = vld [vmem:[#allocation14 + $0x5f8] sm:$0xff]
    %v3504 = vld [vmem:[%s12] sm:$0xf]
    %v3506 = vlaneseq
    %v3507 = vshrl.u32 %v3506, 7
    %v3508 = vsub.s32 0, %v3507
    %v3509 = vrot.slane %v3504, %v3508
    %v3510 = vlaneseq
    %v3511 = vshrl.u32 %v3510, 7
    %v3512 = vsub.s32 1, %v3511
    %v3513 = vrot.slane %v3504, %v3512
    %v3514 = vlaneseq
    %v3515 = vshrl.u32 %v3514, 7
    %v3516 = vsub.s32 2, %v3515
    %v3517 = vrot.slane %v3504, %v3516
    %v3518 = vlaneseq
    %v3519 = vshrl.u32 %v3518, 7
    %v3520 = vsub.s32 3, %v3519
    %v3521 = vrot.slane %v3504, %v3520
    %v3718 = vunpack.c.l.b16 %v3312
    %v3719 = vunpack.c.h.b16 %v3312
    %v3720 = vunpack.c.l.b16 %v3313
    %v3721 = vunpack.c.h.b16 %v3313
    %v3722 = vunpack.c.l.b16 %v3314
    %v3723 = vunpack.c.h.b16 %v3314
    %v3724 = vunpack.c.l.b16 %v3315
    %v3725 = vunpack.c.h.b16 %v3315
    %v3726 = vunpack.c.l.b16 %v3316
    %v3727 = vunpack.c.h.b16 %v3316
    %v3728 = vunpack.c.l.b16 %v3317
    %v3729 = vunpack.c.h.b16 %v3317
    %v3730 = vunpack.c.l.b16 %v3318
    %v3731 = vunpack.c.h.b16 %v3318
    %v3732 = vunpack.c.l.b16 %v3319
    %v3733 = vunpack.c.h.b16 %v3319
    %v3734 = vunpack.c.l.b16 %v3320
    %v3735 = vunpack.c.h.b16 %v3320
    %v3736 = vunpack.c.l.b16 %v3321
    %v3737 = vunpack.c.h.b16 %v3321
    %v3738 = vunpack.c.l.b16 %v3322
    %v3739 = vunpack.c.h.b16 %v3322
    %v3740 = vunpack.c.l.b16 %v3323
    %v3741 = vunpack.c.h.b16 %v3323
    %v3742 = vunpack.c.l.b16 %v3324
    %v3743 = vunpack.c.h.b16 %v3324
    %v3744 = vunpack.c.l.b16 %v3325
    %v3745 = vunpack.c.h.b16 %v3325
    %v3746 = vunpack.c.l.b16 %v3326
    %v3747 = vunpack.c.h.b16 %v3326
    %v3748 = vunpack.c.l.b16 %v3327
    %v3749 = vunpack.c.h.b16 %v3327
    %v3750 = vunpack.c.l.b16 %v3328
    %v3751 = vunpack.c.h.b16 %v3328
    %v3752 = vunpack.c.l.b16 %v3329
    %v3753 = vunpack.c.h.b16 %v3329
    %v3754 = vunpack.c.l.b16 %v3330
    %v3755 = vunpack.c.h.b16 %v3330
    %v3756 = vunpack.c.l.b16 %v3331
    %v3757 = vunpack.c.h.b16 %v3331
    %v3758 = vunpack.c.l.b16 %v3332
    %v3759 = vunpack.c.h.b16 %v3332
    %v3760 = vunpack.c.l.b16 %v3333
    %v3761 = vunpack.c.h.b16 %v3333
    %v3762 = vunpack.c.l.b16 %v3334
    %v3763 = vunpack.c.h.b16 %v3334
    %v3764 = vunpack.c.l.b16 %v3335
    %v3765 = vunpack.c.h.b16 %v3335
    %v3766 = vunpack.c.l.b16 %v3336
    %v3767 = vunpack.c.h.b16 %v3336
    %v3768 = vunpack.c.l.b16 %v3337
    %v3769 = vunpack.c.h.b16 %v3337
    %v3770 = vunpack.c.l.b16 %v3338
    %v3771 = vunpack.c.h.b16 %v3338
    %v3772 = vunpack.c.l.b16 %v3339
    %v3773 = vunpack.c.h.b16 %v3339
    %v3774 = vunpack.c.l.b16 %v3340
    %v3775 = vunpack.c.h.b16 %v3340
    %v3776 = vunpack.c.l.b16 %v3341
    %v3777 = vunpack.c.h.b16 %v3341
    %v3778 = vunpack.c.l.b16 %v3342
    %v3779 = vunpack.c.h.b16 %v3342
    %v3780 = vunpack.c.l.b16 %v3343
    %v3781 = vunpack.c.h.b16 %v3343
    %v3782 = vunpack.c.l.b16 %v3344
    %v3783 = vunpack.c.h.b16 %v3344
    %v3784 = vunpack.c.l.b16 %v3345
    %v3785 = vunpack.c.h.b16 %v3345
    %v3786 = vunpack.c.l.b16 %v3346
    %v3787 = vunpack.c.h.b16 %v3346
    %v3788 = vunpack.c.l.b16 %v3347
    %v3789 = vunpack.c.h.b16 %v3347
    %v3790 = vunpack.c.l.b16 %v3348
    %v3791 = vunpack.c.h.b16 %v3348
    %v3792 = vunpack.c.l.b16 %v3349
    %v3793 = vunpack.c.h.b16 %v3349
    %v3794 = vunpack.c.l.b16 %v3350
    %v3795 = vunpack.c.h.b16 %v3350
    %v3796 = vunpack.c.l.b16 %v3351
    %v3797 = vunpack.c.h.b16 %v3351
    %v3798 = vunpack.c.l.b16 %v3352
    %v3799 = vunpack.c.h.b16 %v3352
    %v3800 = vunpack.c.l.b16 %v3353
    %v3801 = vunpack.c.h.b16 %v3353
    %v3802 = vunpack.c.l.b16 %v3354
    %v3803 = vunpack.c.h.b16 %v3354
    %v3804 = vunpack.c.l.b16 %v3355
    %v3805 = vunpack.c.h.b16 %v3355
    %v3806 = vunpack.c.l.b16 %v3356
    %v3807 = vunpack.c.h.b16 %v3356
    %v3808 = vunpack.c.l.b16 %v3357
    %v3809 = vunpack.c.h.b16 %v3357
    %v3810 = vunpack.c.l.b16 %v3358
    %v3811 = vunpack.c.h.b16 %v3358
    %v3812 = vunpack.c.l.b16 %v3359
    %v3813 = vunpack.c.h.b16 %v3359
    %v3814 = vunpack.c.l.b16 %v3360
    %v3815 = vunpack.c.h.b16 %v3360
    %v3816 = vunpack.c.l.b16 %v3361
    %v3817 = vunpack.c.h.b16 %v3361
    %v3818 = vunpack.c.l.b16 %v3362
    %v3819 = vunpack.c.h.b16 %v3362
    %v3820 = vunpack.c.l.b16 %v3363
    %v3821 = vunpack.c.h.b16 %v3363
    %v3822 = vunpack.c.l.b16 %v3364
    %v3823 = vunpack.c.h.b16 %v3364
    %v3824 = vunpack.c.l.b16 %v3365
    %v3825 = vunpack.c.h.b16 %v3365
    %v3826 = vunpack.c.l.b16 %v3366
    %v3827 = vunpack.c.h.b16 %v3366
    %v3828 = vunpack.c.l.b16 %v3367
    %v3829 = vunpack.c.h.b16 %v3367
    %v3830 = vunpack.c.l.b16 %v3368
    %v3831 = vunpack.c.h.b16 %v3368
    %v3832 = vunpack.c.l.b16 %v3369
    %v3833 = vunpack.c.h.b16 %v3369
    %v3834 = vunpack.c.l.b16 %v3370
    %v3835 = vunpack.c.h.b16 %v3370
    %v3836 = vunpack.c.l.b16 %v3371
    %v3837 = vunpack.c.h.b16 %v3371
    %v3838 = vunpack.c.l.b16 %v3372
    %v3839 = vunpack.c.h.b16 %v3372
    %v3840 = vunpack.c.l.b16 %v3373
    %v3841 = vunpack.c.h.b16 %v3373
    %v3842 = vunpack.c.l.b16 %v3374
    %v3843 = vunpack.c.h.b16 %v3374
    %v3844 = vunpack.c.l.b16 %v3375
    %v3845 = vunpack.c.h.b16 %v3375
    %v3846 = vunpack.c.l.b16 %v3376
    %v3847 = vunpack.c.h.b16 %v3376
    %v3848 = vunpack.c.l.b16 %v3377
    %v3849 = vunpack.c.h.b16 %v3377
    %v3850 = vunpack.c.l.b16 %v3378
    %v3851 = vunpack.c.h.b16 %v3378
    %v3852 = vunpack.c.l.b16 %v3379
    %v3853 = vunpack.c.h.b16 %v3379
    %v3854 = vunpack.c.l.b16 %v3380
    %v3855 = vunpack.c.h.b16 %v3380
    %v3856 = vunpack.c.l.b16 %v3381
    %v3857 = vunpack.c.h.b16 %v3381
    %v3858 = vunpack.c.l.b16 %v3382
    %v3859 = vunpack.c.h.b16 %v3382
    %v3860 = vunpack.c.l.b16 %v3383
    %v3861 = vunpack.c.h.b16 %v3383
    %v3862 = vunpack.c.l.b16 %v3384
    %v3863 = vunpack.c.h.b16 %v3384
    %v3864 = vunpack.c.l.b16 %v3385
    %v3865 = vunpack.c.h.b16 %v3385
    %v3866 = vunpack.c.l.b16 %v3386
    %v3867 = vunpack.c.h.b16 %v3386
    %v3868 = vunpack.c.l.b16 %v3387
    %v3869 = vunpack.c.h.b16 %v3387
    %v3870 = vunpack.c.l.b16 %v3388
    %v3871 = vunpack.c.h.b16 %v3388
    %v3872 = vunpack.c.l.b16 %v3389
    %v3873 = vunpack.c.h.b16 %v3389
    %v3874 = vunpack.c.l.b16 %v3390
    %v3875 = vunpack.c.h.b16 %v3390
    %v3876 = vunpack.c.l.b16 %v3391
    %v3877 = vunpack.c.h.b16 %v3391
    %v3878 = vunpack.c.l.b16 %v3392
    %v3879 = vunpack.c.h.b16 %v3392
    %v3880 = vunpack.c.l.b16 %v3393
    %v3881 = vunpack.c.h.b16 %v3393
    %v3882 = vunpack.c.l.b16 %v3394
    %v3883 = vunpack.c.h.b16 %v3394
    %v3884 = vunpack.c.l.b16 %v3395
    %v3885 = vunpack.c.h.b16 %v3395
    %v3886 = vunpack.c.l.b16 %v3396
    %v3887 = vunpack.c.h.b16 %v3396
    %v3888 = vunpack.c.l.b16 %v3397
    %v3889 = vunpack.c.h.b16 %v3397
    %v3890 = vunpack.c.l.b16 %v3398
    %v3891 = vunpack.c.h.b16 %v3398
    %v3892 = vunpack.c.l.b16 %v3399
    %v3893 = vunpack.c.h.b16 %v3399
    %v3894 = vunpack.c.l.b16 %v3400
    %v3895 = vunpack.c.h.b16 %v3400
    %v3896 = vunpack.c.l.b16 %v3401
    %v3897 = vunpack.c.h.b16 %v3401
    %v3898 = vunpack.c.l.b16 %v3402
    %v3899 = vunpack.c.h.b16 %v3402
    %v3900 = vunpack.c.l.b16 %v3403
    %v3901 = vunpack.c.h.b16 %v3403
    %v3902 = vunpack.c.l.b16 %v3404
    %v3903 = vunpack.c.h.b16 %v3404
    %v3904 = vunpack.c.l.b16 %v3405
    %v3905 = vunpack.c.h.b16 %v3405
    %v3906 = vunpack.c.l.b16 %v3406
    %v3907 = vunpack.c.h.b16 %v3406
    %v3908 = vunpack.c.l.b16 %v3407
    %v3909 = vunpack.c.h.b16 %v3407
    %v3910 = vunpack.c.l.b16 %v3408
    %v3911 = vunpack.c.h.b16 %v3408
    %v3912 = vunpack.c.l.b16 %v3409
    %v3913 = vunpack.c.h.b16 %v3409
    %v3914 = vunpack.c.l.b16 %v3410
    %v3915 = vunpack.c.h.b16 %v3410
    %v3916 = vunpack.c.l.b16 %v3411
    %v3917 = vunpack.c.h.b16 %v3411
    %v3918 = vunpack.c.l.b16 %v3412
    %v3919 = vunpack.c.h.b16 %v3412
    %v3920 = vunpack.c.l.b16 %v3413
    %v3921 = vunpack.c.h.b16 %v3413
    %v3922 = vunpack.c.l.b16 %v3414
    %v3923 = vunpack.c.h.b16 %v3414
    %v3924 = vunpack.c.l.b16 %v3415
    %v3925 = vunpack.c.h.b16 %v3415
    %v3926 = vunpack.c.l.b16 %v3416
    %v3927 = vunpack.c.h.b16 %v3416
    %v3928 = vunpack.c.l.b16 %v3417
    %v3929 = vunpack.c.h.b16 %v3417
    %v3930 = vunpack.c.l.b16 %v3418
    %v3931 = vunpack.c.h.b16 %v3418
    %v3932 = vunpack.c.l.b16 %v3419
    %v3933 = vunpack.c.h.b16 %v3419
    %v3934 = vunpack.c.l.b16 %v3420
    %v3935 = vunpack.c.h.b16 %v3420
    %v3936 = vunpack.c.l.b16 %v3421
    %v3937 = vunpack.c.h.b16 %v3421
    %v3938 = vunpack.c.l.b16 %v3422
    %v3939 = vunpack.c.h.b16 %v3422
    %v3940 = vunpack.c.l.b16 %v3423
    %v3941 = vunpack.c.h.b16 %v3423
    %v3942 = vunpack.c.l.b16 %v3424
    %v3943 = vunpack.c.h.b16 %v3424
    %v3944 = vunpack.c.l.b16 %v3425
    %v3945 = vunpack.c.h.b16 %v3425
    %v3946 = vunpack.c.l.b16 %v3426
    %v3947 = vunpack.c.h.b16 %v3426
    %v3948 = vunpack.c.l.b16 %v3427
    %v3949 = vunpack.c.h.b16 %v3427
    %v3950 = vunpack.c.l.b16 %v3428
    %v3951 = vunpack.c.h.b16 %v3428
    %v3952 = vunpack.c.l.b16 %v3429
    %v3953 = vunpack.c.h.b16 %v3429
    %v3954 = vunpack.c.l.b16 %v3430
    %v3955 = vunpack.c.h.b16 %v3430
    %v3956 = vunpack.c.l.b16 %v3431
    %v3957 = vunpack.c.h.b16 %v3431
    %v3958 = vunpack.c.l.b16 %v3432
    %v3959 = vunpack.c.h.b16 %v3432
    %v3960 = vunpack.c.l.b16 %v3433
    %v3961 = vunpack.c.h.b16 %v3433
    %v3962 = vunpack.c.l.b16 %v3434
    %v3963 = vunpack.c.h.b16 %v3434
    %v3964 = vunpack.c.l.b16 %v3435
    %v3965 = vunpack.c.h.b16 %v3435
    %v3966 = vunpack.c.l.b16 %v3436
    %v3967 = vunpack.c.h.b16 %v3436
    %v3968 = vunpack.c.l.b16 %v3437
    %v3969 = vunpack.c.h.b16 %v3437
    %v3970 = vunpack.c.l.b16 %v3438
    %v3971 = vunpack.c.h.b16 %v3438
    %v3972 = vunpack.c.l.b16 %v3439
    %v3973 = vunpack.c.h.b16 %v3439
    %v3974 = vunpack.c.l.b16 %v3440
    %v3975 = vunpack.c.h.b16 %v3440
    %v3976 = vunpack.c.l.b16 %v3441
    %v3977 = vunpack.c.h.b16 %v3441
    %v3978 = vunpack.c.l.b16 %v3442
    %v3979 = vunpack.c.h.b16 %v3442
    %v3980 = vunpack.c.l.b16 %v3443
    %v3981 = vunpack.c.h.b16 %v3443
    %v3982 = vunpack.c.l.b16 %v3444
    %v3983 = vunpack.c.h.b16 %v3444
    %v3984 = vunpack.c.l.b16 %v3445
    %v3985 = vunpack.c.h.b16 %v3445
    %v3986 = vunpack.c.l.b16 %v3446
    %v3987 = vunpack.c.h.b16 %v3446
    %v3988 = vunpack.c.l.b16 %v3447
    %v3989 = vunpack.c.h.b16 %v3447
    %v3990 = vunpack.c.l.b16 %v3448
    %v3991 = vunpack.c.h.b16 %v3448
    %v3992 = vunpack.c.l.b16 %v3449
    %v3993 = vunpack.c.h.b16 %v3449
    %v3994 = vunpack.c.l.b16 %v3450
    %v3995 = vunpack.c.h.b16 %v3450
    %v3996 = vunpack.c.l.b16 %v3451
    %v3997 = vunpack.c.h.b16 %v3451
    %v3998 = vunpack.c.l.b16 %v3452
    %v3999 = vunpack.c.h.b16 %v3452
    %v4000 = vunpack.c.l.b16 %v3453
    %v4001 = vunpack.c.h.b16 %v3453
    %v4002 = vunpack.c.l.b16 %v3454
    %v4003 = vunpack.c.h.b16 %v3454
    %v4004 = vunpack.c.l.b16 %v3455
    %v4005 = vunpack.c.h.b16 %v3455
    %v4006 = vunpack.c.l.b16 %v3456
    %v4007 = vunpack.c.h.b16 %v3456
    %v4008 = vunpack.c.l.b16 %v3457
    %v4009 = vunpack.c.h.b16 %v3457
    %v4010 = vunpack.c.l.b16 %v3458
    %v4011 = vunpack.c.h.b16 %v3458
    %v4012 = vunpack.c.l.b16 %v3459
    %v4013 = vunpack.c.h.b16 %v3459
    %v4014 = vunpack.c.l.b16 %v3460
    %v4015 = vunpack.c.h.b16 %v3460
    %v4016 = vunpack.c.l.b16 %v3461
    %v4017 = vunpack.c.h.b16 %v3461
    %v4018 = vunpack.c.l.b16 %v3462
    %v4019 = vunpack.c.h.b16 %v3462
    %v4020 = vunpack.c.l.b16 %v3463
    %v4021 = vunpack.c.h.b16 %v3463
    %v4022 = vunpack.c.l.b16 %v3464
    %v4023 = vunpack.c.h.b16 %v3464
    %v4024 = vunpack.c.l.b16 %v3465
    %v4025 = vunpack.c.h.b16 %v3465
    %v4026 = vunpack.c.l.b16 %v3466
    %v4027 = vunpack.c.h.b16 %v3466
    %v4028 = vunpack.c.l.b16 %v3467
    %v4029 = vunpack.c.h.b16 %v3467
    %v4030 = vunpack.c.l.b16 %v3468
    %v4031 = vunpack.c.h.b16 %v3468
    %v4032 = vunpack.c.l.b16 %v3469
    %v4033 = vunpack.c.h.b16 %v3469
    %v4034 = vunpack.c.l.b16 %v3470
    %v4035 = vunpack.c.h.b16 %v3470
    %v4036 = vunpack.c.l.b16 %v3471
    %v4037 = vunpack.c.h.b16 %v3471
    %v4038 = vunpack.c.l.b16 %v3472
    %v4039 = vunpack.c.h.b16 %v3472
    %v4040 = vunpack.c.l.b16 %v3473
    %v4041 = vunpack.c.h.b16 %v3473
    %v4042 = vunpack.c.l.b16 %v3474
    %v4043 = vunpack.c.h.b16 %v3474
    %v4044 = vunpack.c.l.b16 %v3475
    %v4045 = vunpack.c.h.b16 %v3475
    %v4046 = vunpack.c.l.b16 %v3476
    %v4047 = vunpack.c.h.b16 %v3476
    %v4048 = vunpack.c.l.b16 %v3477
    %v4049 = vunpack.c.h.b16 %v3477
    %v4050 = vunpack.c.l.b16 %v3478
    %v4051 = vunpack.c.h.b16 %v3478
    %v4052 = vunpack.c.l.b16 %v3479
    %v4053 = vunpack.c.h.b16 %v3479
    %v4054 = vunpack.c.l.b16 %v3480
    %v4055 = vunpack.c.h.b16 %v3480
    %v4056 = vunpack.c.l.b16 %v3481
    %v4057 = vunpack.c.h.b16 %v3481
    %v4058 = vunpack.c.l.b16 %v3482
    %v4059 = vunpack.c.h.b16 %v3482
    %v4060 = vunpack.c.l.b16 %v3483
    %v4061 = vunpack.c.h.b16 %v3483
    %v4062 = vunpack.c.l.b16 %v3484
    %v4063 = vunpack.c.h.b16 %v3484
    %v4064 = vunpack.c.l.b16 %v3485
    %v4065 = vunpack.c.h.b16 %v3485
    %v4066 = vunpack.c.l.b16 %v3486
    %v4067 = vunpack.c.h.b16 %v3486
    %v4068 = vunpack.c.l.b16 %v3487
    %v4069 = vunpack.c.h.b16 %v3487
    %v4070 = vunpack.c.l.b16 %v3488
    %v4071 = vunpack.c.h.b16 %v3488
    %v4072 = vunpack.c.l.b16 %v3489
    %v4073 = vunpack.c.h.b16 %v3489
    %v4074 = vunpack.c.l.b16 %v3490
    %v4075 = vunpack.c.h.b16 %v3490
    %v4076 = vunpack.c.l.b16 %v3491
    %v4077 = vunpack.c.h.b16 %v3491
    %v4078 = vunpack.c.l.b16 %v3492
    %v4079 = vunpack.c.h.b16 %v3492
    %v4080 = vunpack.c.l.b16 %v3493
    %v4081 = vunpack.c.h.b16 %v3493
    %v4082 = vunpack.c.l.b16 %v3494
    %v4083 = vunpack.c.h.b16 %v3494
    %v4084 = vunpack.c.l.b16 %v3495
    %v4085 = vunpack.c.h.b16 %v3495
    %v4086 = vunpack.c.l.b16 %v3496
    %v4087 = vunpack.c.h.b16 %v3496
    %v4088 = vunpack.c.l.b16 %v3497
    %v4089 = vunpack.c.h.b16 %v3497
    %v4090 = vunpack.c.l.b16 %v3498
    %v4091 = vunpack.c.h.b16 %v3498
    %v4092 = vunpack.c.l.b16 %v3499
    %v4093 = vunpack.c.h.b16 %v3499
    %v4094 = vunpack.c.l.b16 %v3500
    %v4095 = vunpack.c.h.b16 %v3500
    %v4096 = vunpack.c.l.b16 %v3501
    %v4097 = vunpack.c.h.b16 %v3501
    %v4098 = vunpack.c.l.b16 %v3502
    %v4099 = vunpack.c.h.b16 %v3502
    %v4100 = vunpack.c.l.b16 %v3503
    %v4101 = vunpack.c.h.b16 %v3503
    %v4102 = vpack.c.b16 %v3722, %v3718
    %v4103 = vpack.c.b16 %v3723, %v3719
    %v4104 = vpack.c.b16 %v3724, %v3720
    %v4105 = vpack.c.b16 %v3725, %v3721
    %v4106 = vpack.c.b16 %v3730, %v3726
    %v4107 = vpack.c.b16 %v3731, %v3727
    %v4108 = vpack.c.b16 %v3732, %v3728
    %v4109 = vpack.c.b16 %v3733, %v3729
    %v4110 = vpack.c.b16 %v3738, %v3734
    %v4111 = vpack.c.b16 %v3739, %v3735
    %v4112 = vpack.c.b16 %v3740, %v3736
    %v4113 = vpack.c.b16 %v3741, %v3737
    %v4114 = vpack.c.b16 %v3746, %v3742
    %v4115 = vpack.c.b16 %v3747, %v3743
    %v4116 = vpack.c.b16 %v3748, %v3744
    %v4117 = vpack.c.b16 %v3749, %v3745
    %v4118 = vpack.c.b16 %v3754, %v3750
    %v4119 = vpack.c.b16 %v3755, %v3751
    %v4120 = vpack.c.b16 %v3756, %v3752
    %v4121 = vpack.c.b16 %v3757, %v3753
    %v4122 = vpack.c.b16 %v3762, %v3758
    %v4123 = vpack.c.b16 %v3763, %v3759
    %v4124 = vpack.c.b16 %v3764, %v3760
    %v4125 = vpack.c.b16 %v3765, %v3761
    %v4126 = vpack.c.b16 %v3770, %v3766
    %v4127 = vpack.c.b16 %v3771, %v3767
    %v4128 = vpack.c.b16 %v3772, %v3768
    %v4129 = vpack.c.b16 %v3773, %v3769
    %v4130 = vpack.c.b16 %v3778, %v3774
    %v4131 = vpack.c.b16 %v3779, %v3775
    %v4132 = vpack.c.b16 %v3780, %v3776
    %v4133 = vpack.c.b16 %v3781, %v3777
    %v4134 = vpack.c.b16 %v3786, %v3782
    %v4135 = vpack.c.b16 %v3787, %v3783
    %v4136 = vpack.c.b16 %v3788, %v3784
    %v4137 = vpack.c.b16 %v3789, %v3785
    %v4138 = vpack.c.b16 %v3794, %v3790
    %v4139 = vpack.c.b16 %v3795, %v3791
    %v4140 = vpack.c.b16 %v3796, %v3792
    %v4141 = vpack.c.b16 %v3797, %v3793
    %v4142 = vpack.c.b16 %v3802, %v3798
    %v4143 = vpack.c.b16 %v3803, %v3799
    %v4144 = vpack.c.b16 %v3804, %v3800
    %v4145 = vpack.c.b16 %v3805, %v3801
    %v4146 = vpack.c.b16 %v3810, %v3806
    %v4147 = vpack.c.b16 %v3811, %v3807
    %v4148 = vpack.c.b16 %v3812, %v3808
    %v4149 = vpack.c.b16 %v3813, %v3809
    %v4150 = vpack.c.b16 %v3818, %v3814
    %v4151 = vpack.c.b16 %v3819, %v3815
    %v4152 = vpack.c.b16 %v3820, %v3816
    %v4153 = vpack.c.b16 %v3821, %v3817
    %v4154 = vpack.c.b16 %v3826, %v3822
    %v4155 = vpack.c.b16 %v3827, %v3823
    %v4156 = vpack.c.b16 %v3828, %v3824
    %v4157 = vpack.c.b16 %v3829, %v3825
    %v4158 = vpack.c.b16 %v3834, %v3830
    %v4159 = vpack.c.b16 %v3835, %v3831
    %v4160 = vpack.c.b16 %v3836, %v3832
    %v4161 = vpack.c.b16 %v3837, %v3833
    %v4162 = vpack.c.b16 %v3842, %v3838
    %v4163 = vpack.c.b16 %v3843, %v3839
    %v4164 = vpack.c.b16 %v3844, %v3840
    %v4165 = vpack.c.b16 %v3845, %v3841
    %v4166 = vpack.c.b16 %v3850, %v3846
    %v4167 = vpack.c.b16 %v3851, %v3847
    %v4168 = vpack.c.b16 %v3852, %v3848
    %v4169 = vpack.c.b16 %v3853, %v3849
    %v4170 = vpack.c.b16 %v3858, %v3854
    %v4171 = vpack.c.b16 %v3859, %v3855
    %v4172 = vpack.c.b16 %v3860, %v3856
    %v4173 = vpack.c.b16 %v3861, %v3857
    %v4174 = vpack.c.b16 %v3866, %v3862
    %v4175 = vpack.c.b16 %v3867, %v3863
    %v4176 = vpack.c.b16 %v3868, %v3864
    %v4177 = vpack.c.b16 %v3869, %v3865
    %v4178 = vpack.c.b16 %v3874, %v3870
    %v4179 = vpack.c.b16 %v3875, %v3871
    %v4180 = vpack.c.b16 %v3876, %v3872
    %v4181 = vpack.c.b16 %v3877, %v3873
    %v4182 = vpack.c.b16 %v3882, %v3878
    %v4183 = vpack.c.b16 %v3883, %v3879
    %v4184 = vpack.c.b16 %v3884, %v3880
    %v4185 = vpack.c.b16 %v3885, %v3881
    %v4186 = vpack.c.b16 %v3890, %v3886
    %v4187 = vpack.c.b16 %v3891, %v3887
    %v4188 = vpack.c.b16 %v3892, %v3888
    %v4189 = vpack.c.b16 %v3893, %v3889
    %v4190 = vpack.c.b16 %v3898, %v3894
    %v4191 = vpack.c.b16 %v3899, %v3895
    %v4192 = vpack.c.b16 %v3900, %v3896
    %v4193 = vpack.c.b16 %v3901, %v3897
    %v4194 = vpack.c.b16 %v3906, %v3902
    %v4195 = vpack.c.b16 %v3907, %v3903
    %v4196 = vpack.c.b16 %v3908, %v3904
    %v4197 = vpack.c.b16 %v3909, %v3905
    %v4198 = vpack.c.b16 %v3914, %v3910
    %v4199 = vpack.c.b16 %v3915, %v3911
    %v4200 = vpack.c.b16 %v3916, %v3912
    %v4201 = vpack.c.b16 %v3917, %v3913
    %v4202 = vpack.c.b16 %v3922, %v3918
    %v4203 = vpack.c.b16 %v3923, %v3919
    %v4204 = vpack.c.b16 %v3924, %v3920
    %v4205 = vpack.c.b16 %v3925, %v3921
    %v4206 = vpack.c.b16 %v3930, %v3926
    %v4207 = vpack.c.b16 %v3931, %v3927
    %v4208 = vpack.c.b16 %v3932, %v3928
    %v4209 = vpack.c.b16 %v3933, %v3929
    %v4210 = vpack.c.b16 %v3938, %v3934
    %v4211 = vpack.c.b16 %v3939, %v3935
    %v4212 = vpack.c.b16 %v3940, %v3936
    %v4213 = vpack.c.b16 %v3941, %v3937
    %v4214 = vpack.c.b16 %v3946, %v3942
    %v4215 = vpack.c.b16 %v3947, %v3943
    %v4216 = vpack.c.b16 %v3948, %v3944
    %v4217 = vpack.c.b16 %v3949, %v3945
    %v4218 = vpack.c.b16 %v3954, %v3950
    %v4219 = vpack.c.b16 %v3955, %v3951
    %v4220 = vpack.c.b16 %v3956, %v3952
    %v4221 = vpack.c.b16 %v3957, %v3953
    %v4222 = vpack.c.b16 %v3962, %v3958
    %v4223 = vpack.c.b16 %v3963, %v3959
    %v4224 = vpack.c.b16 %v3964, %v3960
    %v4225 = vpack.c.b16 %v3965, %v3961
    %v4226 = vpack.c.b16 %v3970, %v3966
    %v4227 = vpack.c.b16 %v3971, %v3967
    %v4228 = vpack.c.b16 %v3972, %v3968
    %v4229 = vpack.c.b16 %v3973, %v3969
    %v4230 = vpack.c.b16 %v3978, %v3974
    %v4231 = vpack.c.b16 %v3979, %v3975
    %v4232 = vpack.c.b16 %v3980, %v3976
    %v4233 = vpack.c.b16 %v3981, %v3977
    %v4234 = vpack.c.b16 %v3986, %v3982
    %v4235 = vpack.c.b16 %v3987, %v3983
    %v4236 = vpack.c.b16 %v3988, %v3984
    %v4237 = vpack.c.b16 %v3989, %v3985
    %v4238 = vpack.c.b16 %v3994, %v3990
    %v4239 = vpack.c.b16 %v3995, %v3991
    %v4240 = vpack.c.b16 %v3996, %v3992
    %v4241 = vpack.c.b16 %v3997, %v3993
    %v4242 = vpack.c.b16 %v4002, %v3998
    %v4243 = vpack.c.b16 %v4003, %v3999
    %v4244 = vpack.c.b16 %v4004, %v4000
    %v4245 = vpack.c.b16 %v4005, %v4001
    %v4246 = vpack.c.b16 %v4010, %v4006
    %v4247 = vpack.c.b16 %v4011, %v4007
    %v4248 = vpack.c.b16 %v4012, %v4008
    %v4249 = vpack.c.b16 %v4013, %v4009
    %v4250 = vpack.c.b16 %v4018, %v4014
    %v4251 = vpack.c.b16 %v4019, %v4015
    %v4252 = vpack.c.b16 %v4020, %v4016
    %v4253 = vpack.c.b16 %v4021, %v4017
    %v4254 = vpack.c.b16 %v4026, %v4022
    %v4255 = vpack.c.b16 %v4027, %v4023
    %v4256 = vpack.c.b16 %v4028, %v4024
    %v4257 = vpack.c.b16 %v4029, %v4025
    %v4258 = vpack.c.b16 %v4034, %v4030
    %v4259 = vpack.c.b16 %v4035, %v4031
    %v4260 = vpack.c.b16 %v4036, %v4032
    %v4261 = vpack.c.b16 %v4037, %v4033
    %v4262 = vpack.c.b16 %v4042, %v4038
    %v4263 = vpack.c.b16 %v4043, %v4039
    %v4264 = vpack.c.b16 %v4044, %v4040
    %v4265 = vpack.c.b16 %v4045, %v4041
    %v4266 = vpack.c.b16 %v4050, %v4046
    %v4267 = vpack.c.b16 %v4051, %v4047
    %v4268 = vpack.c.b16 %v4052, %v4048
    %v4269 = vpack.c.b16 %v4053, %v4049
    %v4270 = vpack.c.b16 %v4058, %v4054
    %v4271 = vpack.c.b16 %v4059, %v4055
    %v4272 = vpack.c.b16 %v4060, %v4056
    %v4273 = vpack.c.b16 %v4061, %v4057
    %v4274 = vpack.c.b16 %v4066, %v4062
    %v4275 = vpack.c.b16 %v4067, %v4063
    %v4276 = vpack.c.b16 %v4068, %v4064
    %v4277 = vpack.c.b16 %v4069, %v4065
    %v4278 = vpack.c.b16 %v4074, %v4070
    %v4279 = vpack.c.b16 %v4075, %v4071
    %v4280 = vpack.c.b16 %v4076, %v4072
    %v4281 = vpack.c.b16 %v4077, %v4073
    %v4282 = vpack.c.b16 %v4082, %v4078
    %v4283 = vpack.c.b16 %v4083, %v4079
    %v4284 = vpack.c.b16 %v4084, %v4080
    %v4285 = vpack.c.b16 %v4085, %v4081
    %v4286 = vpack.c.b16 %v4090, %v4086
    %v4287 = vpack.c.b16 %v4091, %v4087
    %v4288 = vpack.c.b16 %v4092, %v4088
    %v4289 = vpack.c.b16 %v4093, %v4089
    %v4290 = vpack.c.b16 %v4098, %v4094
    %v4291 = vpack.c.b16 %v4099, %v4095
    %v4292 = vpack.c.b16 %v4100, %v4096
    %v4293 = vpack.c.b16 %v4101, %v4097
    %4486 = vmatprep.subr.bf16.mxu0 %v4131
    %4487 = vmatpush1.bf16.msra.mxu0 %v4130
    %4488 = vmatprep.subr.bf16.mxu0 %v4127
    %4489 = vmatpush1.bf16.msra.mxu0 %v4126
    %4490 = vmatprep.subr.bf16.mxu0 %v4123
    %4491 = vmatpush1.bf16.msra.mxu0 %v4122
    %4492 = vmatprep.subr.bf16.mxu0 %v4119
    %4493 = vmatpush1.bf16.msra.mxu0 %v4118
    %4494 = vmatprep.subr.bf16.mxu0 %v4115
    %4495 = vmatpush1.bf16.msra.mxu0 %v4114
    %4496 = vmatprep.subr.bf16.mxu0 %v4111
    %4497 = vmatpush1.bf16.msra.mxu0 %v4110
    %4498 = vmatprep.subr.bf16.mxu0 %v4107
    %4499 = vmatpush1.bf16.msra.mxu0 %v4106
    %4500 = vmatprep.subr.bf16.mxu0 %v4103
    %4501 = vmatpush1.bf16.msra.mxu0 %v4102
    %4502 = vmatprep.subr.bf16.mxu0 %v4163
    %4503 = vmatpush2.bf16.msra.mxu0 %v4162
    %4504 = vmatprep.subr.bf16.mxu0 %v4159
    %4505 = vmatpush2.bf16.msra.mxu0 %v4158
    %4506 = vmatprep.subr.bf16.mxu0 %v4155
    %4507 = vmatpush2.bf16.msra.mxu0 %v4154
    %4508 = vmatprep.subr.bf16.mxu0 %v4151
    %4509 = vmatpush2.bf16.msra.mxu0 %v4150
    %4510 = vmatprep.subr.bf16.mxu0 %v4147
    %4511 = vmatpush2.bf16.msra.mxu0 %v4146
    %4512 = vmatprep.subr.bf16.mxu0 %v4143
    %4513 = vmatpush2.bf16.msra.mxu0 %v4142
    %4514 = vmatprep.subr.bf16.mxu0 %v4139
    %4515 = vmatpush2.bf16.msra.mxu0 %v4138
    %4516 = vmatprep.subr.bf16.mxu0 %v4135
    %4517 = vmatpush2.bf16.msra.mxu0 %v4134
    %4518 = vmatprep.mubr.bf16.mxu0 %v3307
    %4519 = vmatmul.mubr.bf16.gmra.mxu0 %v3306
    %v4520 = vpop.f32.mrf.mxu0
    %v4521 = vadd.f32 %v3509, %v4520
    %v4522 = vpop.f32.mrf.mxu0
    %v4523 = vadd.f32 %v3513, %v4522
    %v4524 = vpop.f32.mrf.mxu0
    %v4525 = vpop.f32.mrf.mxu0
    %4526 = vdwg.mxu0
    %4527 = vmatprep.subr.bf16.mxu0 %v4195
    %4528 = vmatpush1.bf16.msra.mxu0 %v4194
    %4529 = vmatprep.subr.bf16.mxu0 %v4191
    %4530 = vmatpush1.bf16.msra.mxu0 %v4190
    %4531 = vmatprep.subr.bf16.mxu0 %v4187
    %4532 = vmatpush1.bf16.msra.mxu0 %v4186
    %4533 = vmatprep.subr.bf16.mxu0 %v4183
    %4534 = vmatpush1.bf16.msra.mxu0 %v4182
    %4535 = vmatprep.subr.bf16.mxu0 %v4179
    %4536 = vmatpush1.bf16.msra.mxu0 %v4178
    %4537 = vmatprep.subr.bf16.mxu0 %v4175
    %4538 = vmatpush1.bf16.msra.mxu0 %v4174
    %4539 = vmatprep.subr.bf16.mxu0 %v4171
    %4540 = vmatpush1.bf16.msra.mxu0 %v4170
    %4541 = vmatprep.subr.bf16.mxu0 %v4167
    %4542 = vmatpush1.bf16.msra.mxu0 %v4166
    %4543 = vmatprep.subr.bf16.mxu0 %v4227
    %4544 = vmatpush2.bf16.msra.mxu0 %v4226
    %4545 = vmatprep.subr.bf16.mxu0 %v4223
    %4546 = vmatpush2.bf16.msra.mxu0 %v4222
    %4547 = vmatprep.subr.bf16.mxu0 %v4219
    %4548 = vmatpush2.bf16.msra.mxu0 %v4218
    %4549 = vmatprep.subr.bf16.mxu0 %v4215
    %4550 = vmatpush2.bf16.msra.mxu0 %v4214
    %4551 = vmatprep.subr.bf16.mxu0 %v4211
    %4552 = vmatpush2.bf16.msra.mxu0 %v4210
    %4553 = vmatprep.subr.bf16.mxu0 %v4207
    %4554 = vmatpush2.bf16.msra.mxu0 %v4206
    %4555 = vmatprep.subr.bf16.mxu0 %v4203
    %4556 = vmatpush2.bf16.msra.mxu0 %v4202
    %4557 = vmatprep.subr.bf16.mxu0 %v4199
    %4558 = vmatpush2.bf16.msra.mxu0 %v4198
    %4559 = vmatprep.mubr.bf16.mxu0 %v3309
    %4560 = vmatmul.mubr.bf16.gmra.mxu0 %v3308
    %v4561 = vpop.f32.mrf.mxu0
    %v4562 = vadd.f32 %v4521, %v4561
    %v4563 = vpop.f32.mrf.mxu0
    %v4564 = vadd.f32 %v4523, %v4563
    %v4565 = vpop.f32.mrf.mxu0
    %v4566 = vpop.f32.mrf.mxu0
    %4567 = vdwg.mxu0
    %4568 = vmatprep.subr.bf16.mxu0 %v4259
    %4569 = vmatpush1.bf16.msra.mxu0 %v4258
    %4570 = vmatprep.subr.bf16.mxu0 %v4255
    %4571 = vmatpush1.bf16.msra.mxu0 %v4254
    %4572 = vmatprep.subr.bf16.mxu0 %v4251
    %4573 = vmatpush1.bf16.msra.mxu0 %v4250
    %4574 = vmatprep.subr.bf16.mxu0 %v4247
    %4575 = vmatpush1.bf16.msra.mxu0 %v4246
    %4576 = vmatprep.subr.bf16.mxu0 %v4243
    %4577 = vmatpush1.bf16.msra.mxu0 %v4242
    %4578 = vmatprep.subr.bf16.mxu0 %v4239
    %4579 = vmatpush1.bf16.msra.mxu0 %v4238
    %4580 = vmatprep.subr.bf16.mxu0 %v4235
    %4581 = vmatpush1.bf16.msra.mxu0 %v4234
    %4582 = vmatprep.subr.bf16.mxu0 %v4231
    %4583 = vmatpush1.bf16.msra.mxu0 %v4230
    %4584 = vmatprep.subr.bf16.mxu0 %v4291
    %4585 = vmatpush2.bf16.msra.mxu0 %v4290
    %4586 = vmatprep.subr.bf16.mxu0 %v4287
    %4587 = vmatpush2.bf16.msra.mxu0 %v4286
    %4588 = vmatprep.subr.bf16.mxu0 %v4283
    %4589 = vmatpush2.bf16.msra.mxu0 %v4282
    %4590 = vmatprep.subr.bf16.mxu0 %v4279
    %4591 = vmatpush2.bf16.msra.mxu0 %v4278
    %4592 = vmatprep.subr.bf16.mxu0 %v4275
    %4593 = vmatpush2.bf16.msra.mxu0 %v4274
    %4594 = vmatprep.subr.bf16.mxu0 %v4271
    %4595 = vmatpush2.bf16.msra.mxu0 %v4270
    %4596 = vmatprep.subr.bf16.mxu0 %v4267
    %4597 = vmatpush2.bf16.msra.mxu0 %v4266
    %4598 = vmatprep.subr.bf16.mxu0 %v4263
    %4599 = vmatpush2.bf16.msra.mxu0 %v4262
    %4600 = vmatprep.mubr.bf16.mxu0 %v3311
    %4601 = vmatmul.mubr.bf16.gmra.mxu0 %v3310
    %v4602 = vpop.f32.mrf.mxu0
    %v4603 = vadd.f32 %v4562, %v4602
    %v4604 = vpop.f32.mrf.mxu0
    %v4605 = vadd.f32 %v4564, %v4604
    %v4606 = vpop.f32.mrf.mxu0
    %v4607 = vpop.f32.mrf.mxu0
    %4608 = vdwg.mxu0
    %4609 = vmatprep.subr.bf16.mxu0 %v4133
    %4610 = vmatpush1.bf16.msra.mxu0 %v4132
    %4611 = vmatprep.subr.bf16.mxu0 %v4129
    %4612 = vmatpush1.bf16.msra.mxu0 %v4128
    %4613 = vmatprep.subr.bf16.mxu0 %v4125
    %4614 = vmatpush1.bf16.msra.mxu0 %v4124
    %4615 = vmatprep.subr.bf16.mxu0 %v4121
    %4616 = vmatpush1.bf16.msra.mxu0 %v4120
    %4617 = vmatprep.subr.bf16.mxu0 %v4117
    %4618 = vmatpush1.bf16.msra.mxu0 %v4116
    %4619 = vmatprep.subr.bf16.mxu0 %v4113
    %4620 = vmatpush1.bf16.msra.mxu0 %v4112
    %4621 = vmatprep.subr.bf16.mxu0 %v4109
    %4622 = vmatpush1.bf16.msra.mxu0 %v4108
    %4623 = vmatprep.subr.bf16.mxu0 %v4105
    %4624 = vmatpush1.bf16.msra.mxu0 %v4104
    %4625 = vmatprep.subr.bf16.mxu0 %v4165
    %4626 = vmatpush2.bf16.msra.mxu0 %v4164
    %4627 = vmatprep.subr.bf16.mxu0 %v4161
    %4628 = vmatpush2.bf16.msra.mxu0 %v4160
    %4629 = vmatprep.subr.bf16.mxu0 %v4157
    %4630 = vmatpush2.bf16.msra.mxu0 %v4156
    %4631 = vmatprep.subr.bf16.mxu0 %v4153
    %4632 = vmatpush2.bf16.msra.mxu0 %v4152
    %4633 = vmatprep.subr.bf16.mxu0 %v4149
    %4634 = vmatpush2.bf16.msra.mxu0 %v4148
    %4635 = vmatprep.subr.bf16.mxu0 %v4145
    %4636 = vmatpush2.bf16.msra.mxu0 %v4144
    %4637 = vmatprep.subr.bf16.mxu0 %v4141
    %4638 = vmatpush2.bf16.msra.mxu0 %v4140
    %4639 = vmatprep.subr.bf16.mxu0 %v4137
    %4640 = vmatpush2.bf16.msra.mxu0 %v4136
    %4641 = vmatprep.mubr.bf16.mxu0 %v3307
    %4642 = vmatmul.mubr.bf16.gmra.mxu0 %v3306
    %v4643 = vpop.f32.mrf.mxu0
    %v4644 = vadd.f32 %v3517, %v4643
    %v4645 = vpop.f32.mrf.mxu0
    %v4646 = vadd.f32 %v3521, %v4645
    %v4647 = vpop.f32.mrf.mxu0
    %v4648 = vpop.f32.mrf.mxu0
    %4649 = vdwg.mxu0
    %4650 = vmatprep.subr.bf16.mxu0 %v4197
    %4651 = vmatpush1.bf16.msra.mxu0 %v4196
    %4652 = vmatprep.subr.bf16.mxu0 %v4193
    %4653 = vmatpush1.bf16.msra.mxu0 %v4192
    %4654 = vmatprep.subr.bf16.mxu0 %v4189
    %4655 = vmatpush1.bf16.msra.mxu0 %v4188
    %4656 = vmatprep.subr.bf16.mxu0 %v4185
    %4657 = vmatpush1.bf16.msra.mxu0 %v4184
    %4658 = vmatprep.subr.bf16.mxu0 %v4181
    %4659 = vmatpush1.bf16.msra.mxu0 %v4180
    %4660 = vmatprep.subr.bf16.mxu0 %v4177
    %4661 = vmatpush1.bf16.msra.mxu0 %v4176
    %4662 = vmatprep.subr.bf16.mxu0 %v4173
    %4663 = vmatpush1.bf16.msra.mxu0 %v4172
    %4664 = vmatprep.subr.bf16.mxu0 %v4169
    %4665 = vmatpush1.bf16.msra.mxu0 %v4168
    %4666 = vmatprep.subr.bf16.mxu0 %v4229
    %4667 = vmatpush2.bf16.msra.mxu0 %v4228
    %4668 = vmatprep.subr.bf16.mxu0 %v4225
    %4669 = vmatpush2.bf16.msra.mxu0 %v4224
    %4670 = vmatprep.subr.bf16.mxu0 %v4221
    %4671 = vmatpush2.bf16.msra.mxu0 %v4220
    %4672 = vmatprep.subr.bf16.mxu0 %v4217
    %4673 = vmatpush2.bf16.msra.mxu0 %v4216
    %4674 = vmatprep.subr.bf16.mxu0 %v4213
    %4675 = vmatpush2.bf16.msra.mxu0 %v4212
    %4676 = vmatprep.subr.bf16.mxu0 %v4209
    %4677 = vmatpush2.bf16.msra.mxu0 %v4208
    %4678 = vmatprep.subr.bf16.mxu0 %v4205
    %4679 = vmatpush2.bf16.msra.mxu0 %v4204
    %4680 = vmatprep.subr.bf16.mxu0 %v4201
    %4681 = vmatpush2.bf16.msra.mxu0 %v4200
    %4682 = vmatprep.mubr.bf16.mxu0 %v3309
    %4683 = vmatmul.mubr.bf16.gmra.mxu0 %v3308
    %v4684 = vpop.f32.mrf.mxu0
    %v4685 = vadd.f32 %v4644, %v4684
    %v4686 = vpop.f32.mrf.mxu0
    %v4687 = vadd.f32 %v4646, %v4686
    %v4688 = vpop.f32.mrf.mxu0
    %v4689 = vpop.f32.mrf.mxu0
    %4690 = vdwg.mxu0
    %4691 = vmatprep.subr.bf16.mxu0 %v4261
    %4692 = vmatpush1.bf16.msra.mxu0 %v4260
    %4693 = vmatprep.subr.bf16.mxu0 %v4257
    %4694 = vmatpush1.bf16.msra.mxu0 %v4256
    %4695 = vmatprep.subr.bf16.mxu0 %v4253
    %4696 = vmatpush1.bf16.msra.mxu0 %v4252
    %4697 = vmatprep.subr.bf16.mxu0 %v4249
    %4698 = vmatpush1.bf16.msra.mxu0 %v4248
    %4699 = vmatprep.subr.bf16.mxu0 %v4245
    %4700 = vmatpush1.bf16.msra.mxu0 %v4244
    %4701 = vmatprep.subr.bf16.mxu0 %v4241
    %4702 = vmatpush1.bf16.msra.mxu0 %v4240
    %4703 = vmatprep.subr.bf16.mxu0 %v4237
    %4704 = vmatpush1.bf16.msra.mxu0 %v4236
    %4705 = vmatprep.subr.bf16.mxu0 %v4233
    %4706 = vmatpush1.bf16.msra.mxu0 %v4232
    %4707 = vmatprep.subr.bf16.mxu0 %v4293
    %4708 = vmatpush2.bf16.msra.mxu0 %v4292
    %4709 = vmatprep.subr.bf16.mxu0 %v4289
    %4710 = vmatpush2.bf16.msra.mxu0 %v4288
    %4711 = vmatprep.subr.bf16.mxu0 %v4285
    %4712 = vmatpush2.bf16.msra.mxu0 %v4284
    %4713 = vmatprep.subr.bf16.mxu0 %v4281
    %4714 = vmatpush2.bf16.msra.mxu0 %v4280
    %4715 = vmatprep.subr.bf16.mxu0 %v4277
    %4716 = vmatpush2.bf16.msra.mxu0 %v4276
    %4717 = vmatprep.subr.bf16.mxu0 %v4273
    %4718 = vmatpush2.bf16.msra.mxu0 %v4272
    %4719 = vmatprep.subr.bf16.mxu0 %v4269
    %4720 = vmatpush2.bf16.msra.mxu0 %v4268
    %4721 = vmatprep.subr.bf16.mxu0 %v4265
    %4722 = vmatpush2.bf16.msra.mxu0 %v4264
    %4723 = vmatprep.mubr.bf16.mxu0 %v3311
    %4724 = vmatmul.mubr.bf16.gmra.mxu0 %v3310
    %v4725 = vpop.f32.mrf.mxu0
    %v4726 = vadd.f32 %v4685, %v4725
    %v4727 = vpop.f32.mrf.mxu0
    %v4728 = vadd.f32 %v4687, %v4727
    %v4729 = vpop.f32.mrf.mxu0
    %v4730 = vpop.f32.mrf.mxu0
    %4731 = vdwg.mxu0
    %v4732 = vmax.f32 %v4603, 0.0
    %v4733 = vmax.f32 %v4605, 0.0
    %v4734 = vmax.f32 %v4726, 0.0
    %v4735 = vmax.f32 %v4728, 0.0
    %v4736 = vpack.c.bf16 %v4732, %v4732
    %v4737 = vpack.c.bf16 %v4733, %v4733
    %v4738 = vpack.c.bf16 %v4734, %v4734
    %v4739 = vpack.c.bf16 %v4735, %v4735
    %v4740 = vld [vmem:[#allocation16] sm:$0xf]
    %v4741 = vld [vmem:[#allocation16 + $0x4] sm:$0xf]
    %v4742 = vld [vmem:[#allocation16 + $0x8] sm:$0xf]
    %v4743 = vld [vmem:[#allocation16 + $0xc] sm:$0xf]
    %v4744 = vld [vmem:[#allocation16 + $0x10] sm:$0xf]
    %v4745 = vld [vmem:[#allocation16 + $0x14] sm:$0xf]
    %v4746 = vld [vmem:[#allocation16 + $0x18] sm:$0xf]
    %v4747 = vld [vmem:[#allocation16 + $0x1c] sm:$0xf]
    %v4748 = vld [vmem:[#allocation16 + $0x20] sm:$0xf]
    %v4749 = vld [vmem:[#allocation16 + $0x24] sm:$0xf]
    %v4750 = vld [vmem:[#allocation16 + $0x28] sm:$0xf]
    %v4751 = vld [vmem:[#allocation16 + $0x2c] sm:$0xf]
    %v4752 = vld [vmem:[#allocation16 + $0x30] sm:$0xf]
    %v4753 = vld [vmem:[#allocation16 + $0x34] sm:$0xf]
    %v4754 = vld [vmem:[#allocation16 + $0x38] sm:$0xf]
    %v4755 = vld [vmem:[#allocation16 + $0x3c] sm:$0xf]
    %v4756 = vld [vmem:[#allocation16 + $0x40] sm:$0xf]
    %v4757 = vld [vmem:[#allocation16 + $0x44] sm:$0xf]
    %v4758 = vld [vmem:[#allocation16 + $0x48] sm:$0xf]
    %v4759 = vld [vmem:[#allocation16 + $0x4c] sm:$0xf]
    %v4760 = vld [vmem:[#allocation16 + $0x50] sm:$0xf]
    %v4761 = vld [vmem:[#allocation16 + $0x54] sm:$0xf]
    %v4762 = vld [vmem:[#allocation16 + $0x58] sm:$0xf]
    %v4763 = vld [vmem:[#allocation16 + $0x5c] sm:$0xf]
    %v4764 = vld [vmem:[#allocation16 + $0x60] sm:$0xf]
    %v4765 = vld [vmem:[#allocation16 + $0x64] sm:$0xf]
    %v4766 = vld [vmem:[#allocation16 + $0x68] sm:$0xf]
    %v4767 = vld [vmem:[#allocation16 + $0x6c] sm:$0xf]
    %v4768 = vld [vmem:[#allocation16 + $0x70] sm:$0xf]
    %v4769 = vld [vmem:[#allocation16 + $0x74] sm:$0xf]
    %v4770 = vld [vmem:[#allocation16 + $0x78] sm:$0xf]
    %v4771 = vld [vmem:[#allocation16 + $0x7c] sm:$0xf]
    %v4772 = vld [vmem:[#allocation16 + $0x80] sm:$0xf]
    %v4773 = vld [vmem:[#allocation16 + $0x84] sm:$0xf]
    %v4774 = vld [vmem:[#allocation16 + $0x88] sm:$0xf]
    %v4775 = vld [vmem:[#allocation16 + $0x8c] sm:$0xf]
    %v4776 = vld [vmem:[#allocation16 + $0x90] sm:$0xf]
    %v4777 = vld [vmem:[#allocation16 + $0x94] sm:$0xf]
    %v4778 = vld [vmem:[#allocation16 + $0x98] sm:$0xf]
    %v4779 = vld [vmem:[#allocation16 + $0x9c] sm:$0xf]
    %v4780 = vld [vmem:[#allocation16 + $0xa0] sm:$0xf]
    %v4781 = vld [vmem:[#allocation16 + $0xa4] sm:$0xf]
    %v4782 = vld [vmem:[#allocation16 + $0xa8] sm:$0xf]
    %v4783 = vld [vmem:[#allocation16 + $0xac] sm:$0xf]
    %v4784 = vld [vmem:[#allocation16 + $0xb0] sm:$0xf]
    %v4785 = vld [vmem:[#allocation16 + $0xb4] sm:$0xf]
    %v4786 = vld [vmem:[#allocation16 + $0xb8] sm:$0xf]
    %v4787 = vld [vmem:[#allocation16 + $0xbc] sm:$0xf]
    %v4788 = vld [vmem:[#allocation16 + $0xc0] sm:$0xf]
    %v4789 = vld [vmem:[#allocation16 + $0xc4] sm:$0xf]
    %v4790 = vld [vmem:[#allocation16 + $0xc8] sm:$0xf]
    %v4791 = vld [vmem:[#allocation16 + $0xcc] sm:$0xf]
    %v4792 = vld [vmem:[#allocation16 + $0xd0] sm:$0xf]
    %v4793 = vld [vmem:[#allocation16 + $0xd4] sm:$0xf]
    %v4794 = vld [vmem:[#allocation16 + $0xd8] sm:$0xf]
    %v4795 = vld [vmem:[#allocation16 + $0xdc] sm:$0xf]
    %v4796 = vld [vmem:[#allocation16 + $0xe0] sm:$0xf]
    %v4797 = vld [vmem:[#allocation16 + $0xe4] sm:$0xf]
    %v4798 = vld [vmem:[#allocation16 + $0xe8] sm:$0xf]
    %v4799 = vld [vmem:[#allocation16 + $0xec] sm:$0xf]
    %v4800 = vld [vmem:[#allocation16 + $0xf0] sm:$0xf]
    %v4801 = vld [vmem:[#allocation16 + $0xf4] sm:$0xf]
    %v4802 = vld [vmem:[#allocation16 + $0xf8] sm:$0xf]
    %v4803 = vld [vmem:[#allocation16 + $0xfc] sm:$0xf]
    %v4804 = vld [vmem:[%s14] sm:$0x1]
    %v4806 = vlaneseq
    %v4807 = vshrl.u32 %v4806, 7
    %v4808 = vsub.s32 0, %v4807
    %v4809 = vrot.slane %v4804, %v4808
    %v4875 = vunpack.c.l.b16 %v4740
    %v4876 = vunpack.c.l.b16 %v4741
    %v4877 = vunpack.c.l.b16 %v4742
    %v4878 = vunpack.c.l.b16 %v4743
    %v4879 = vunpack.c.l.b16 %v4744
    %v4880 = vunpack.c.l.b16 %v4745
    %v4881 = vunpack.c.l.b16 %v4746
    %v4882 = vunpack.c.l.b16 %v4747
    %v4883 = vunpack.c.l.b16 %v4748
    %v4884 = vunpack.c.l.b16 %v4749
    %v4885 = vunpack.c.l.b16 %v4750
    %v4886 = vunpack.c.l.b16 %v4751
    %v4887 = vunpack.c.l.b16 %v4752
    %v4888 = vunpack.c.l.b16 %v4753
    %v4889 = vunpack.c.l.b16 %v4754
    %v4890 = vunpack.c.l.b16 %v4755
    %v4891 = vunpack.c.l.b16 %v4756
    %v4892 = vunpack.c.l.b16 %v4757
    %v4893 = vunpack.c.l.b16 %v4758
    %v4894 = vunpack.c.l.b16 %v4759
    %v4895 = vunpack.c.l.b16 %v4760
    %v4896 = vunpack.c.l.b16 %v4761
    %v4897 = vunpack.c.l.b16 %v4762
    %v4898 = vunpack.c.l.b16 %v4763
    %v4899 = vunpack.c.l.b16 %v4764
    %v4900 = vunpack.c.l.b16 %v4765
    %v4901 = vunpack.c.l.b16 %v4766
    %v4902 = vunpack.c.l.b16 %v4767
    %v4903 = vunpack.c.l.b16 %v4768
    %v4904 = vunpack.c.l.b16 %v4769
    %v4905 = vunpack.c.l.b16 %v4770
    %v4906 = vunpack.c.l.b16 %v4771
    %v4907 = vunpack.c.l.b16 %v4772
    %v4908 = vunpack.c.l.b16 %v4773
    %v4909 = vunpack.c.l.b16 %v4774
    %v4910 = vunpack.c.l.b16 %v4775
    %v4911 = vunpack.c.l.b16 %v4776
    %v4912 = vunpack.c.l.b16 %v4777
    %v4913 = vunpack.c.l.b16 %v4778
    %v4914 = vunpack.c.l.b16 %v4779
    %v4915 = vunpack.c.l.b16 %v4780
    %v4916 = vunpack.c.l.b16 %v4781
    %v4917 = vunpack.c.l.b16 %v4782
    %v4918 = vunpack.c.l.b16 %v4783
    %v4919 = vunpack.c.l.b16 %v4784
    %v4920 = vunpack.c.l.b16 %v4785
    %v4921 = vunpack.c.l.b16 %v4786
    %v4922 = vunpack.c.l.b16 %v4787
    %v4923 = vunpack.c.l.b16 %v4788
    %v4924 = vunpack.c.l.b16 %v4789
    %v4925 = vunpack.c.l.b16 %v4790
    %v4926 = vunpack.c.l.b16 %v4791
    %v4927 = vunpack.c.l.b16 %v4792
    %v4928 = vunpack.c.l.b16 %v4793
    %v4929 = vunpack.c.l.b16 %v4794
    %v4930 = vunpack.c.l.b16 %v4795
    %v4931 = vunpack.c.l.b16 %v4796
    %v4932 = vunpack.c.l.b16 %v4797
    %v4933 = vunpack.c.l.b16 %v4798
    %v4934 = vunpack.c.l.b16 %v4799
    %v4935 = vunpack.c.l.b16 %v4800
    %v4936 = vunpack.c.l.b16 %v4801
    %v4937 = vunpack.c.l.b16 %v4802
    %v4938 = vunpack.c.l.b16 %v4803
    %v4939 = vpack.c.b16 %v4876, %v4875
    %v4940 = vpack.c.b16 %v4878, %v4877
    %v4941 = vpack.c.b16 %v4880, %v4879
    %v4942 = vpack.c.b16 %v4882, %v4881
    %v4943 = vpack.c.b16 %v4884, %v4883
    %v4944 = vpack.c.b16 %v4886, %v4885
    %v4945 = vpack.c.b16 %v4888, %v4887
    %v4946 = vpack.c.b16 %v4890, %v4889
    %v4947 = vpack.c.b16 %v4892, %v4891
    %v4948 = vpack.c.b16 %v4894, %v4893
    %v4949 = vpack.c.b16 %v4896, %v4895
    %v4950 = vpack.c.b16 %v4898, %v4897
    %v4951 = vpack.c.b16 %v4900, %v4899
    %v4952 = vpack.c.b16 %v4902, %v4901
    %v4953 = vpack.c.b16 %v4904, %v4903
    %v4954 = vpack.c.b16 %v4906, %v4905
    %v4955 = vpack.c.b16 %v4908, %v4907
    %v4956 = vpack.c.b16 %v4910, %v4909
    %v4957 = vpack.c.b16 %v4912, %v4911
    %v4958 = vpack.c.b16 %v4914, %v4913
    %v4959 = vpack.c.b16 %v4916, %v4915
    %v4960 = vpack.c.b16 %v4918, %v4917
    %v4961 = vpack.c.b16 %v4920, %v4919
    %v4962 = vpack.c.b16 %v4922, %v4921
    %v4963 = vpack.c.b16 %v4924, %v4923
    %v4964 = vpack.c.b16 %v4926, %v4925
    %v4965 = vpack.c.b16 %v4928, %v4927
    %v4966 = vpack.c.b16 %v4930, %v4929
    %v4967 = vpack.c.b16 %v4932, %v4931
    %v4968 = vpack.c.b16 %v4934, %v4933
    %v4969 = vpack.c.b16 %v4936, %v4935
    %v4970 = vpack.c.b16 %v4938, %v4937
    %5003 = vmatprep.subr.bf16.mxu0 0
    %5004 = vmatpush1.bf16.msra.mxu0 %v4946
    %5005 = vmatprep.subr.bf16.mxu0 0
    %5006 = vmatpush1.bf16.msra.mxu0 %v4945
    %5007 = vmatprep.subr.bf16.mxu0 0
    %5008 = vmatpush1.bf16.msra.mxu0 %v4944
    %5009 = vmatprep.subr.bf16.mxu0 0
    %5010 = vmatpush1.bf16.msra.mxu0 %v4943
    %5011 = vmatprep.subr.bf16.mxu0 0
    %5012 = vmatpush1.bf16.msra.mxu0 %v4942
    %5013 = vmatprep.subr.bf16.mxu0 0
    %5014 = vmatpush1.bf16.msra.mxu0 %v4941
    %5015 = vmatprep.subr.bf16.mxu0 0
    %5016 = vmatpush1.bf16.msra.mxu0 %v4940
    %5017 = vmatprep.subr.bf16.mxu0 0
    %5018 = vmatpush1.bf16.msra.mxu0 %v4939
    %5019 = vmatprep.subr.bf16.mxu0 0
    %5020 = vmatpush2.bf16.msra.mxu0 %v4954
    %5021 = vmatprep.subr.bf16.mxu0 0
    %5022 = vmatpush2.bf16.msra.mxu0 %v4953
    %5023 = vmatprep.subr.bf16.mxu0 0
    %5024 = vmatpush2.bf16.msra.mxu0 %v4952
    %5025 = vmatprep.subr.bf16.mxu0 0
    %5026 = vmatpush2.bf16.msra.mxu0 %v4951
    %5027 = vmatprep.subr.bf16.mxu0 0
    %5028 = vmatpush2.bf16.msra.mxu0 %v4950
    %5029 = vmatprep.subr.bf16.mxu0 0
    %5030 = vmatpush2.bf16.msra.mxu0 %v4949
    %5031 = vmatprep.subr.bf16.mxu0 0
    %5032 = vmatpush2.bf16.msra.mxu0 %v4948
    %5033 = vmatprep.subr.bf16.mxu0 0
    %5034 = vmatpush2.bf16.msra.mxu0 %v4947
    %5035 = vmatprep.mubr.bf16.mxu0 %v4737
    %5036 = vmatmul.mubr.bf16.gmra.mxu0 %v4736
    %v5037 = vpop.f32.mrf.mxu0
    %v5038 = vadd.f32 %v4809, %v5037
    %v5039 = vpop.f32.mrf.mxu0
    %v5040 = vpop.f32.mrf.mxu0
    %v5041 = vpop.f32.mrf.mxu0
    %5042 = vdwg.mxu0
    %5043 = vmatprep.subr.bf16.mxu0 0
    %5044 = vmatpush1.bf16.msra.mxu0 %v4962
    %5045 = vmatprep.subr.bf16.mxu0 0
    %5046 = vmatpush1.bf16.msra.mxu0 %v4961
    %5047 = vmatprep.subr.bf16.mxu0 0
    %5048 = vmatpush1.bf16.msra.mxu0 %v4960
    %5049 = vmatprep.subr.bf16.mxu0 0
    %5050 = vmatpush1.bf16.msra.mxu0 %v4959
    %5051 = vmatprep.subr.bf16.mxu0 0
    %5052 = vmatpush1.bf16.msra.mxu0 %v4958
    %5053 = vmatprep.subr.bf16.mxu0 0
    %5054 = vmatpush1.bf16.msra.mxu0 %v4957
    %5055 = vmatprep.subr.bf16.mxu0 0
    %5056 = vmatpush1.bf16.msra.mxu0 %v4956
    %5057 = vmatprep.subr.bf16.mxu0 0
    %5058 = vmatpush1.bf16.msra.mxu0 %v4955
    %5059 = vmatprep.subr.bf16.mxu0 0
    %5060 = vmatpush2.bf16.msra.mxu0 %v4970
    %5061 = vmatprep.subr.bf16.mxu0 0
    %5062 = vmatpush2.bf16.msra.mxu0 %v4969
    %5063 = vmatprep.subr.bf16.mxu0 0
    %5064 = vmatpush2.bf16.msra.mxu0 %v4968
    %5065 = vmatprep.subr.bf16.mxu0 0
    %5066 = vmatpush2.bf16.msra.mxu0 %v4967
    %5067 = vmatprep.subr.bf16.mxu0 0
    %5068 = vmatpush2.bf16.msra.mxu0 %v4966
    %5069 = vmatprep.subr.bf16.mxu0 0
    %5070 = vmatpush2.bf16.msra.mxu0 %v4965
    %5071 = vmatprep.subr.bf16.mxu0 0
    %5072 = vmatpush2.bf16.msra.mxu0 %v4964
    %5073 = vmatprep.subr.bf16.mxu0 0
    %5074 = vmatpush2.bf16.msra.mxu0 %v4963
    %5075 = vmatprep.mubr.bf16.mxu0 %v4739
    %5076 = vmatmul.mubr.bf16.gmra.mxu0 %v4738
    %v5077 = vpop.f32.mrf.mxu0
    %v5078 = vadd.f32 %v5038, %v5077
    %v5079 = vpop.f32.mrf.mxu0
    %v5080 = vpop.f32.mrf.mxu0
    %v5081 = vpop.f32.mrf.mxu0
    %5082 = vdwg.mxu0
    %5083 = vst [vmem:[#allocation17] sm:$0xff] %v5078
    // Predicated region
    $region98: #{tpu_custom_call.1} parent=1 // pred_check
      _
    $region99: #{tpu_custom_call.1} parent=1 // pred_check_branch
      %5085 = sbr.rel (0) target = $region101
    $region100: #{tpu_custom_call.1} parent=1 // pred_region
      %s5087 = ssub.s32 128, 128
      %5088 = vsyncadd [#allocation4], %s5087
      %s5090 = sshll.u32 [#allocation17], 4
      %s5091 = int_to_ptr.vmem [resolvable:$true] %s5090
      %5093 = dma.vmem_to_hbm [thread:$0]  %s5091, 128, %s15, [#allocation4]
    $region101: #{tpu_custom_call.1} parent=1 // pred_fallthru
      _
    // Predicated region
    $region102: #{tpu_custom_call.1} parent=1 // pred_check
      _
    $region103: #{tpu_custom_call.1} parent=1 // pred_check_branch
      %5095 = sbr.rel (0) target = $region105
    $region104: #{tpu_custom_call.1} parent=1 // pred_region
      %5096 = dma.done [#allocation4], 128
    $region105: #{tpu_custom_call.1} parent=1 // pred_fallthru
      _
    %5097 = vsyncpa [#allocation3], 1
    %5098 = vsyncpa [#allocation6], 1
    %5099 = vsyncpa [#allocation9], 1
    %5100 = vsyncpa [#allocation12], 1
    %5101 = vsyncpa [#allocation15], 1
    %5102 = vsyncpa [#allocation4], 1

</llo_original>
